<compile_context>
chip_gen: v6e
topology: v6e:2x2x1
jax: 0.10.0
libtpu: 0.0.40
codegen_flags: <defaults>
</compile_context>

<pallas_src>
import functools
import math

import jax
import jax.numpy as jnp
import numpy as np
from jax.experimental import pallas as pl
from jax.experimental.pallas import tpu as pltpu

NEG_HUGE = float(-(2 ** 63))  # torch: -sys.maxsize - 1
HIGHEST = jax.lax.Precision.HIGHEST  # used only by the pure-JAX reference


# ----------------------------- kernel helpers ------------------------------

def _layer_norm(x, gamma, beta, eps=1e-5):
    mean = jnp.mean(x, axis=-1, keepdims=True)
    var = jnp.mean((x - mean) ** 2, axis=-1, keepdims=True)
    return (x - mean) * jax.lax.rsqrt(var + eps) * gamma + beta


def _gelu_exact(x):
    # torch.nn.functional.gelu default = exact (erf) form
    return 0.5 * x * (1.0 + jax.lax.erf(x * (1.0 / math.sqrt(2.0))))


def _attention_core(q, k, v, mask_add, inv_scale, wo, bo,
                    nb, Lq, Lk, H, d_k, attn_ref):
    """Multi-head attention core for a block of `nb` batch elements.

    q: (nb*Lq, M) f32 projected queries (bias added)
    k/v: (nb*Lk, M) f32 projected keys / values
    mask_add: f32, broadcastable to (nb, H, Lq, Lk), ALREADY pre-scaled by
              inv_scale (0 where attending, ~NEG_HUGE*inv_scale where masked).
    Writes all-head probabilities with a single store into attn_ref
    (block (nb, H, Lq, Lk)) and returns the wo-projected output (nb*Lq, E) f32.
    """
    M = H * d_k
    # head split: (nb*L, M) -> (nb*H, L, d_k); 1/sqrt(key_len) folded into q.
    qh = (q * inv_scale).reshape(nb, Lq, H, d_k).transpose(0, 2, 1, 3) \
                        .reshape(nb * H, Lq, d_k).astype(jnp.bfloat16)
    kh = k.reshape(nb, Lk, H, d_k).transpose(0, 2, 1, 3) \
          .reshape(nb * H, Lk, d_k).astype(jnp.bfloat16)
    vh = v.reshape(nb, Lk, H, d_k).transpose(0, 2, 1, 3) \
          .reshape(nb * H, Lk, d_k).astype(jnp.bfloat16)

    # Batched scores (single batch dim nb*H); contraction over d_k.
    s = jnp.einsum("zqd,zkd->zqk", qh, kh,
                   preferred_element_type=jnp.float32)          # (nb*H, Lq, Lk)
    s = s.reshape(nb, H, Lq, Lk) + mask_add                     # f32 mask add
    s = s - jnp.max(s, axis=-1, keepdims=True)
    p = jnp.exp(s)
    attn = p * pl.reciprocal(jnp.sum(p, axis=-1, keepdims=True), approx=True)
    attn_ref[...] = attn.astype(attn_ref.dtype)                 # one store, all heads

    blended = jnp.einsum("zqk,zkd->zqd",
                         attn.reshape(nb * H, Lq, Lk).astype(jnp.bfloat16), vh,
                         preferred_element_type=jnp.float32)    # (nb*H, Lq, d_k)
    blended = blended.reshape(nb, H, Lq, d_k).transpose(0, 2, 1, 3) \
                     .reshape(nb * Lq, M)
    return jnp.dot(blended.astype(jnp.bfloat16), wo,
                   preferred_element_type=jnp.float32) + bo


def _decoder_layer_kernel(num_heads, d_k,
                          x_ref, la_ref, enc_ref, em_ref,
                          w_sqkv, b_sqkv, w_so, b_so,
                          w_cq, b_cq, w_ckv, b_ckv, w_co, b_co,
                          w1, b1, w2, b2,
                          g1, be1, g2, be2, g3, be3,
                          out_ref, sattn_ref, cattn_ref):
    Bb, Lq, E = x_ref.shape
    Lk = enc_ref.shape[1]
    H = num_heads
    M = H * d_k

    x = x_ref[...].reshape(Bb * Lq, E)        # (Bb*Lq, E) f32
    enc = enc_ref[...].reshape(Bb * Lk, E)    # (Bb*Lk, E) f32
    la = la_ref[...]                          # (Bb, 1, Lq, Lq) f32
    em = em_ref[...]                          # (Bb, 1, Lk)     f32

    # Read every parameter ref exactly once.
    w_sqkv_v, b_sqkv_v = w_sqkv[...], b_sqkv[...]
    w_so_v, b_so_v = w_so[...], b_so[...]
    w_cq_v, b_cq_v = w_cq[...], b_cq[...]
    w_ckv_v, b_ckv_v = w_ckv[...], b_ckv[...]
    w_co_v, b_co_v = w_co[...], b_co[...]
    w1_v, b1_v, w2_v, b2_v = w1[...], b1[...], w2[...], b2[...]
    g1_v, be1_v = g1[...], be1[...]
    g2_v, be2_v = g2[...], be2[...]
    g3_v, be3_v = g3[...], be3[...]

    # NOTE: reference divides by sqrt(reactivity.shape[-1]) == sqrt(key_len),
    # not sqrt(d_k).  Reproduced exactly; the scale is folded into q and into
    # the additive mask so the full (H,Lq,Lk) tensor is never rescaled.
    self_inv = 1.0 / math.sqrt(float(Lq))
    cross_inv = 1.0 / math.sqrt(float(Lk))

    # masks -> additive masks, exactly like the torch masked_fill path (f32),
    # pre-scaled by the softmax scale.
    la_am = 1.0 - la
    la_add = jnp.where(la_am == 1.0, NEG_HUGE, la_am) * self_inv   # (Bb,1,Lq,Lq)
    em_am = 1.0 - em
    em_add = (jnp.where(em_am == 1.0, NEG_HUGE, em_am)
              * cross_inv)[:, None]                                # (Bb,1,1,Lk)

    # --- self attention (fused QKV projection) + residual + norm1 ---
    residual = x
    x_bf = x.astype(jnp.bfloat16)
    qkv = jnp.dot(x_bf, w_sqkv_v, preferred_element_type=jnp.float32) + b_sqkv_v
    sa = _attention_core(qkv[:, 0 * M:1 * M], qkv[:, 1 * M:2 * M],
                         qkv[:, 2 * M:3 * M], la_add, self_inv,
                         w_so_v, b_so_v, Bb, Lq, Lq, H, d_k, sattn_ref)
    x = _layer_norm(sa + residual, g1_v, be1_v)

    # --- cross attention (fused KV projection over encoder) + residual + norm2 ---
    residual = x
    x_bf = x.astype(jnp.bfloat16)
    enc_bf = enc.astype(jnp.bfloat16)
    q = jnp.dot(x_bf, w_cq_v, preferred_element_type=jnp.float32) + b_cq_v
    kv = jnp.dot(enc_bf, w_ckv_v, preferred_element_type=jnp.float32) + b_ckv_v
    ca = _attention_core(q, kv[:, :M], kv[:, M:], em_add, cross_inv,
                         w_co_v, b_co_v, Bb, Lq, Lk, H, d_k, cattn_ref)
    x = _layer_norm(ca + residual, g2_v, be2_v)

    # --- feed-forward + residual + norm3 ---
    residual = x
    h = jnp.dot(x.astype(jnp.bfloat16), w1_v,
                preferred_element_type=jnp.float32) + b1_v
    h = _gelu_exact(h)                                   # exact GELU in f32
    y = jnp.dot(h.astype(jnp.bfloat16), w2_v,
                preferred_element_type=jnp.float32) + b2_v
    x = _layer_norm(y + residual, g3_v, be3_v)

    out_ref[...] = x.reshape(Bb, Lq, E)


# ------------------------------- wrapper ------------------------------------

def _pick_batch_block(B, Lq, Lk, H, M, E, I, attn_itemsize,
                      rows_target=256, act_budget_bytes=24 << 20):
    """Batch elements per grid step: fill the MXU (rows >= rows_target) while
    keeping the per-step activation footprint within a VMEM budget."""
    per_elem = 4 * (Lq * E + Lq * Lq + Lk * E + Lk)                     # input blocks (f32)
    per_elem += 4 * Lq * E + attn_itemsize * H * Lq * (Lq + Lk)         # output blocks
    per_elem *= 2                                                        # double buffering
    per_elem += 4 * (Lq * (3 * M + M + I + 4 * E) + Lk * 2 * M           # projections / FFN
                     + 2 * H * Lq * (Lq + Lk))                           # scores + probs (f32)
    bb = max(1, min(B,
                    -(-rows_target // Lq),
                    act_budget_bytes // max(per_elem, 1)))
    while B % bb:
        bb -= 1
    # Prefer >= 2 grid steps (v7x has 2 TensorCores) if the MXU stays fed.
    if bb == B and B > 1:
        for cand in range(bb // 2, 0, -1):
            if B % cand == 0 and cand * Lq >= 128:
                bb = cand
                break
    return bb


def _derive_vmem_limit(weight_bytes, block_bytes, single_buffer_weights):
    need = weight_bytes * (1 if single_buffer_weights else 2) + block_bytes
    need = int(need * 1.5) + (8 << 20)          # slack for compiler scratch
    try:
        cap = int(pltpu.get_tpu_info().vmem_capacity_bytes) * 3 // 4
    except Exception:
        cap = 48 << 20                          # conservative (v7x: 64 MiB physical)
    return int(max(32 << 20, min(need, cap)))


def transformer_decoder_layer(x, look_ahead_mask, enc_out, enc_mask, params,
                              num_heads, attn_scores_dtype=jnp.float32):
    B, Lq, E = x.shape
    Lk = enc_out.shape[1]
    M = params["self_wq"].shape[1]
    I = params["fc1_w"].shape[1]
    d_k = M // num_heads
    H = num_heads
    f32, bf16 = jnp.float32, jnp.bfloat16
    attn_isz = jnp.dtype(attn_scores_dtype).itemsize

    enc_mask3 = enc_mask.reshape(B, 1, Lk).astype(f32)

    # Fused / bf16 matmul weights (native MXU dtype, half the weight DMA);
    # biases & LayerNorm params stay f32 (f32 VPU math only).
    w_sqkv = jnp.concatenate(
        [params["self_wq"], params["self_wk"], params["self_wv"]], axis=1).astype(bf16)
    b_sqkv = jnp.concatenate(
        [params["self_bq"], params["self_bk"], params["self_bv"]], axis=1).astype(f32)
    w_ckv = jnp.concatenate(
        [params["cross_wk"], params["cross_wv"]], axis=1).astype(bf16)
    b_ckv = jnp.concatenate(
        [params["cross_bk"], params["cross_bv"]], axis=1).astype(f32)
    weights = [
        w_sqkv, b_sqkv,
        params["self_wo"].astype(bf16), params["self_bo"].astype(f32),
        params["cross_wq"].astype(bf16), params["cross_bq"].astype(f32),
        w_ckv, b_ckv,
        params["cross_wo"].astype(bf16), params["cross_bo"].astype(f32),
        params["fc1_w"].astype(bf16), params["fc1_b"].astype(f32),
        params["fc2_w"].astype(bf16), params["fc2_b"].astype(f32),
        params["ln1_g"].astype(f32), params["ln1_b"].astype(f32),
        params["ln2_g"].astype(f32), params["ln2_b"].astype(f32),
        params["ln3_g"].astype(f32), params["ln3_b"].astype(f32),
    ]

    Bb = _pick_batch_block(B, Lq, Lk, H, M, E, I, attn_isz)
    nb_steps = B // Bb

    # Weights never change block index; single-buffer them when they are big
    # enough for the double buffer to matter (realistic E/I on v7x's 64 MiB).
    weight_bytes = sum(int(w.size) * w.dtype.itemsize for w in weights)
    single_buffer = weight_bytes > (8 << 20)

    def _wspec(w):
        if single_buffer:
            return pl.BlockSpec(w.shape, lambda b: (0, 0),
                                pipeline_mode=pl.Buffered(1))
        return pl.BlockSpec(w.shape, lambda b: (0, 0))

    in_specs = [
        pl.BlockSpec((Bb, Lq, E), lambda b: (b, 0, 0)),
        pl.BlockSpec((Bb, 1, Lq, Lq), lambda b: (b, 0, 0, 0)),
        pl.BlockSpec((Bb, Lk, E), lambda b: (b, 0, 0)),
        pl.BlockSpec((Bb, 1, Lk), lambda b: (b, 0, 0)),
    ] + [_wspec(w) for w in weights]

    out_shape = (
        jax.ShapeDtypeStruct((B, Lq, E), jnp.float32),
        jax.ShapeDtypeStruct((B, H, Lq, Lq), attn_scores_dtype),
        jax.ShapeDtypeStruct((B, H, Lq, Lk), attn_scores_dtype),
    )
    out_specs = (
        pl.BlockSpec((Bb, Lq, E), lambda b: (b, 0, 0)),
        pl.BlockSpec((Bb, H, Lq, Lq), lambda b: (b, 0, 0, 0)),
        pl.BlockSpec((Bb, H, Lq, Lk), lambda b: (b, 0, 0, 0)),
    )

    # Per-grid-step activation footprint (inputs + outputs double-buffered,
    # plus live f32 intermediates) for the VMEM limit.
    io_block = 4 * Bb * (Lq * E + Lq * Lq + Lk * E + Lk)
    io_block += Bb * (4 * Lq * E + attn_isz * H * Lq * (Lq + Lk))
    interm = 4 * Bb * (Lq * (3 * M + M + I + 4 * E) + Lk * 2 * M
                       + 2 * H * Lq * (Lq + Lk))
    vmem_limit = _derive_vmem_limit(weight_bytes, 2 * io_block + interm,
                                    single_buffer)

    kernel = functools.partial(_decoder_layer_kernel, num_heads, d_k)
    return pl.pallas_call(
        kernel,
        out_shape=out_shape,
        grid=(nb_steps,),
        in_specs=in_specs,
        out_specs=out_specs,
        compiler_params=pltpu.CompilerParams(
            dimension_semantics=("parallel",),      # shards batch blocks across v7x TCs
            vmem_limit_bytes=vmem_limit),
    )(x, look_ahead_mask, enc_out, enc_mask3, *weights)


# ------------------------- pure-JAX reference (check) -----------------------

def _ref_mha(q_in, k_in, v_in, mask, p, prefix, num_heads):
    B, Lq, _ = q_in.shape
    Lk = k_in.shape[1]
    M = p[prefix + "_wq"].shape[1]
    d_k = M // num_heads

    def lin(x, w, b):
        return jnp.dot(x, w, precision=HIGHEST) + b

    def split(x, L):
        return x.reshape(B, L, num_heads, d_k).transpose(0, 2, 1, 3)

    Q = split(lin(q_in, p[prefix + "_wq"], p[prefix + "_bq"]), Lq)
    K = split(lin(k_in, p[prefix + "_wk"], p[prefix + "_bk"]), Lk)
    V = split(lin(v_in, p[prefix + "_wv"], p[prefix + "_bv"]), Lk)
    react = jnp.einsum("bhqd,bhkd->bhqk", Q, K, precision=HIGHEST)
    am = 1.0 - mask
    am = jnp.where(am == 1.0, NEG_HUGE, am)
    react = react + am
    react = react / math.sqrt(react.shape[-1])
    attn = jax.nn.softmax(react, axis=-1)
    blended = jnp.einsum("bhqk,bhkd->bhqd", attn, V, precision=HIGHEST)
    blended = blended.transpose(0, 2, 1, 3).reshape(B, Lq, M)
    out = lin(blended, p[prefix + "_wo"], p[prefix + "_bo"])
    return out, attn


def _ref_decoder_layer(x, look_ahead_mask, enc_out, enc_mask, p, num_heads):
    def ln(x, g, b):
        mean = jnp.mean(x, axis=-1, keepdims=True)
        var = jnp.mean((x - mean) ** 2, axis=-1, keepdims=True)
        return (x - mean) * jax.lax.rsqrt(var + 1e-5) * g + b

    residual = x
    x, sattn = _ref_mha(x, x, x, look_ahead_mask, p, "self", num_heads)
    x = ln(x + residual, p["ln1_g"], p["ln1_b"])
    residual = x
    x, cattn = _ref_mha(x, enc_out, enc_out, enc_mask[:, None, None, :], p,
                        "cross", num_heads)
    x = ln(x + residual, p["ln2_g"], p["ln2_b"])
    residual = x
    h = jax.nn.gelu(jnp.dot(x, p["fc1_w"], precision=HIGHEST) + p["fc1_b"],
                    approximate=False)
    y = jnp.dot(h, p["fc2_w"], precision=HIGHEST) + p["fc2_b"]
    x = ln(y + residual, p["ln3_g"], p["ln3_b"])
    return x, sattn, cattn


# --------------------------------- main --------------------------------------

def _init_params(key, E, M, I):
    keys = jax.random.split(key, 32)
    p = {}
    i = 0

    def w(shape, fan_in):
        nonlocal i
        arr = jax.random.normal(keys[i], shape, jnp.float32) / math.sqrt(fan_in)
        i += 1
        return arr

    def b(dim):
        nonlocal i
        arr = 0.02 * jax.random.normal(keys[i], (1, dim), jnp.float32)
        i += 1
        return arr

    for prefix in ("self", "cross"):
        p[f"{prefix}_wq"] = w((E, M), E); p[f"{prefix}_bq"] = b(M)
        p[f"{prefix}_wk"] = w((E, M), E); p[f"{prefix}_bk"] = b(M)
        p[f"{prefix}_wv"] = w((E, M), E); p[f"{prefix}_bv"] = b(M)
        p[f"{prefix}_wo"] = w((M, E), M); p[f"{prefix}_bo"] = b(E)
    p["fc1_w"] = w((E, I), E); p["fc1_b"] = b(I)
    p["fc2_w"] = w((I, E), I); p["fc2_b"] = b(E)
    for n in ("ln1", "ln2", "ln3"):
        p[f"{n}_g"] = 1.0 + 0.05 * jax.random.normal(keys[i], (1, E), jnp.float32); i += 1
        p[f"{n}_b"] = 0.02 * jax.random.normal(keys[i], (1, E), jnp.float32); i += 1
    return p


if __name__ == "__main__":
    B, Lq, Lk = 2, 8, 8
    d_embed, d_model, num_heads, d_intermediate = 32, 32, 4, 64

    root = jax.random.PRNGKey(0)
    k_p, k_x, k_enc = jax.random.split(root, 3)
    params = _init_params(k_p, d_embed, d_model, d_intermediate)

    x = jax.random.normal(k_x, (B, Lq, d_embed), jnp.float32)
    enc_out = jax.random.normal(k_enc, (B, Lk, d_embed), jnp.float32)

    # causal look-ahead mask (1 = attend, 0 = masked), shape (B, 1, Lq, Lq)
    tri = jnp.tril(jnp.ones((Lq, Lq), jnp.float32))
    look_ahead_mask = jnp.broadcast_to(tri[None, None], (B, 1, Lq, Lq)).astype(jnp.float32)
    look_ahead_mask = jnp.array(look_ahead_mask)

    # encoder padding mask (B, Lk): batch 0 full, batch 1 last 3 positions padded
    lens = jnp.array([Lk, Lk - 3], jnp.int32)
    enc_mask = (jnp.arange(Lk)[None, :] < lens[:, None]).astype(jnp.float32)

    out, sattn, cattn = transformer_decoder_layer(
        x, look_ahead_mask, enc_out, enc_mask, params, num_heads)
    out = jax.block_until_ready(out)
    sattn = jax.block_until_ready(sattn)
    cattn = jax.block_until_ready(cattn)

    # reference check (f32, HIGHEST precision ground truth)
    r_out, r_sattn, r_cattn = _ref_decoder_layer(
        x, look_ahead_mask, enc_out, enc_mask, params, num_heads)
    np.testing.assert_allclose(np.asarray(out), np.asarray(r_out), rtol=2e-2, atol=2e-2)
    np.testing.assert_allclose(np.asarray(sattn), np.asarray(r_sattn), rtol=2e-2, atol=2e-2)
    np.testing.assert_allclose(np.asarray(cattn), np.asarray(r_cattn), rtol=2e-2, atol=2e-2)

    print("KERNEL_OK")
</pallas_src>

<mosaic_0001>
module attributes {stable_mosaic.version = 11 : i64} {
  func.func @_decoder_layer_kernel(%arg0: i32, %arg1: memref<2x8x32xf32, #tpu.memory_space<vmem>>, %arg2: memref<2x1x8x8xf32, #tpu.memory_space<vmem>>, %arg3: memref<2x8x32xf32, #tpu.memory_space<vmem>>, %arg4: memref<2x1x8xf32, #tpu.memory_space<vmem>>, %arg5: memref<32x96xbf16, #tpu.memory_space<vmem>>, %arg6: memref<1x96xf32, #tpu.memory_space<vmem>>, %arg7: memref<32x32xbf16, #tpu.memory_space<vmem>>, %arg8: memref<1x32xf32, #tpu.memory_space<vmem>>, %arg9: memref<32x32xbf16, #tpu.memory_space<vmem>>, %arg10: memref<1x32xf32, #tpu.memory_space<vmem>>, %arg11: memref<32x64xbf16, #tpu.memory_space<vmem>>, %arg12: memref<1x64xf32, #tpu.memory_space<vmem>>, %arg13: memref<32x32xbf16, #tpu.memory_space<vmem>>, %arg14: memref<1x32xf32, #tpu.memory_space<vmem>>, %arg15: memref<32x64xbf16, #tpu.memory_space<vmem>>, %arg16: memref<1x64xf32, #tpu.memory_space<vmem>>, %arg17: memref<64x32xbf16, #tpu.memory_space<vmem>>, %arg18: memref<1x32xf32, #tpu.memory_space<vmem>>, %arg19: memref<1x32xf32, #tpu.memory_space<vmem>>, %arg20: memref<1x32xf32, #tpu.memory_space<vmem>>, %arg21: memref<1x32xf32, #tpu.memory_space<vmem>>, %arg22: memref<1x32xf32, #tpu.memory_space<vmem>>, %arg23: memref<1x32xf32, #tpu.memory_space<vmem>>, %arg24: memref<1x32xf32, #tpu.memory_space<vmem>>, %arg25: memref<2x8x32xf32, #tpu.memory_space<vmem>>, %arg26: memref<2x4x8x8xf32, #tpu.memory_space<vmem>>, %arg27: memref<2x4x8x8xf32, #tpu.memory_space<vmem>>) attributes {dimension_semantics = [#tpu.dimension_semantics<parallel>], iteration_bounds = array<i64: 1>, scalar_prefetch = 0 : i64, scratch_operands = 0 : i64, tpu.core_type = #tpu.core_type<tc>, window_params = [{transform_indices = @transform_0, window_bounds = array<i64: 2, 8, 32>}, {transform_indices = @transform_1, window_bounds = array<i64: 2, 1, 8, 8>}, {transform_indices = @transform_2, window_bounds = array<i64: 2, 8, 32>}, {transform_indices = @transform_3, window_bounds = array<i64: 2, 1, 8>}, {pipeline_mode = #tpu.pipeline_mode<synchronous>, transform_indices = @transform_4, window_bounds = array<i64: 32, 96>}, {pipeline_mode = #tpu.pipeline_mode<synchronous>, transform_indices = @transform_5, window_bounds = array<i64: 1, 96>}, {pipeline_mode = #tpu.pipeline_mode<synchronous>, transform_indices = @transform_6, window_bounds = array<i64: 32, 32>}, {pipeline_mode = #tpu.pipeline_mode<synchronous>, transform_indices = @transform_7, window_bounds = array<i64: 1, 32>}, {pipeline_mode = #tpu.pipeline_mode<synchronous>, transform_indices = @transform_8, window_bounds = array<i64: 32, 32>}, {pipeline_mode = #tpu.pipeline_mode<synchronous>, transform_indices = @transform_9, window_bounds = array<i64: 1, 32>}, {pipeline_mode = #tpu.pipeline_mode<synchronous>, transform_indices = @transform_10, window_bounds = array<i64: 32, 64>}, {pipeline_mode = #tpu.pipeline_mode<synchronous>, transform_indices = @transform_11, window_bounds = array<i64: 1, 64>}, {pipeline_mode = #tpu.pipeline_mode<synchronous>, transform_indices = @transform_12, window_bounds = array<i64: 32, 32>}, {pipeline_mode = #tpu.pipeline_mode<synchronous>, transform_indices = @transform_13, window_bounds = array<i64: 1, 32>}, {pipeline_mode = #tpu.pipeline_mode<synchronous>, transform_indices = @transform_14, window_bounds = array<i64: 32, 64>}, {pipeline_mode = #tpu.pipeline_mode<synchronous>, transform_indices = @transform_15, window_bounds = array<i64: 1, 64>}, {pipeline_mode = #tpu.pipeline_mode<synchronous>, transform_indices = @transform_16, window_bounds = array<i64: 64, 32>}, {pipeline_mode = #tpu.pipeline_mode<synchronous>, transform_indices = @transform_17, window_bounds = array<i64: 1, 32>}, {pipeline_mode = #tpu.pipeline_mode<synchronous>, transform_indices = @transform_18, window_bounds = array<i64: 1, 32>}, {pipeline_mode = #tpu.pipeline_mode<synchronous>, transform_indices = @transform_19, window_bounds = array<i64: 1, 32>}, {pipeline_mode = #tpu.pipeline_mode<synchronous>, transform_indices = @transform_20, window_bounds = array<i64: 1, 32>}, {pipeline_mode = #tpu.pipeline_mode<synchronous>, transform_indices = @transform_21, window_bounds = array<i64: 1, 32>}, {pipeline_mode = #tpu.pipeline_mode<synchronous>, transform_indices = @transform_22, window_bounds = array<i64: 1, 32>}, {pipeline_mode = #tpu.pipeline_mode<synchronous>, transform_indices = @transform_23, window_bounds = array<i64: 1, 32>}, {transform_indices = @transform_24, window_bounds = array<i64: 2, 8, 32>}, {transform_indices = @transform_25, window_bounds = array<i64: 2, 4, 8, 8>}, {transform_indices = @transform_26, window_bounds = array<i64: 2, 4, 8, 8>}]} {
    %c0 = arith.constant 0 : index
    %c0_0 = arith.constant 0 : index
    %c0_1 = arith.constant 0 : index
    %0 = vector.load %arg1[%c0, %c0_0, %c0_1] : memref<2x8x32xf32, #tpu.memory_space<vmem>>, vector<2x8x32xf32>
    %1 = vector.shape_cast %0 : vector<2x8x32xf32> to vector<16x32xf32>
    %c0_2 = arith.constant 0 : index
    %c0_3 = arith.constant 0 : index
    %c0_4 = arith.constant 0 : index
    %2 = vector.load %arg3[%c0_2, %c0_3, %c0_4] : memref<2x8x32xf32, #tpu.memory_space<vmem>>, vector<2x8x32xf32>
    %3 = vector.shape_cast %2 : vector<2x8x32xf32> to vector<16x32xf32>
    %c0_5 = arith.constant 0 : index
    %c0_6 = arith.constant 0 : index
    %c0_7 = arith.constant 0 : index
    %c0_8 = arith.constant 0 : index
    %4 = vector.load %arg2[%c0_5, %c0_6, %c0_7, %c0_8] : memref<2x1x8x8xf32, #tpu.memory_space<vmem>>, vector<2x1x8x8xf32>
    %c0_9 = arith.constant 0 : index
    %c0_10 = arith.constant 0 : index
    %c0_11 = arith.constant 0 : index
    %5 = vector.load %arg4[%c0_9, %c0_10, %c0_11] : memref<2x1x8xf32, #tpu.memory_space<vmem>>, vector<2x1x8xf32>
    %c0_12 = arith.constant 0 : index
    %c0_13 = arith.constant 0 : index
    %6 = vector.load %arg5[%c0_12, %c0_13] : memref<32x96xbf16, #tpu.memory_space<vmem>>, vector<32x96xbf16>
    %c0_14 = arith.constant 0 : index
    %c0_15 = arith.constant 0 : index
    %7 = vector.load %arg6[%c0_14, %c0_15] : memref<1x96xf32, #tpu.memory_space<vmem>>, vector<1x96xf32>
    %c0_16 = arith.constant 0 : index
    %c0_17 = arith.constant 0 : index
    %8 = vector.load %arg7[%c0_16, %c0_17] : memref<32x32xbf16, #tpu.memory_space<vmem>>, vector<32x32xbf16>
    %c0_18 = arith.constant 0 : index
    %c0_19 = arith.constant 0 : index
    %9 = vector.load %arg8[%c0_18, %c0_19] : memref<1x32xf32, #tpu.memory_space<vmem>>, vector<1x32xf32>
    %c0_20 = arith.constant 0 : index
    %c0_21 = arith.constant 0 : index
    %10 = vector.load %arg9[%c0_20, %c0_21] : memref<32x32xbf16, #tpu.memory_space<vmem>>, vector<32x32xbf16>
    %c0_22 = arith.constant 0 : index
    %c0_23 = arith.constant 0 : index
    %11 = vector.load %arg10[%c0_22, %c0_23] : memref<1x32xf32, #tpu.memory_space<vmem>>, vector<1x32xf32>
    %c0_24 = arith.constant 0 : index
    %c0_25 = arith.constant 0 : index
    %12 = vector.load %arg11[%c0_24, %c0_25] : memref<32x64xbf16, #tpu.memory_space<vmem>>, vector<32x64xbf16>
    %c0_26 = arith.constant 0 : index
    %c0_27 = arith.constant 0 : index
    %13 = vector.load %arg12[%c0_26, %c0_27] : memref<1x64xf32, #tpu.memory_space<vmem>>, vector<1x64xf32>
    %c0_28 = arith.constant 0 : index
    %c0_29 = arith.constant 0 : index
    %14 = vector.load %arg13[%c0_28, %c0_29] : memref<32x32xbf16, #tpu.memory_space<vmem>>, vector<32x32xbf16>
    %c0_30 = arith.constant 0 : index
    %c0_31 = arith.constant 0 : index
    %15 = vector.load %arg14[%c0_30, %c0_31] : memref<1x32xf32, #tpu.memory_space<vmem>>, vector<1x32xf32>
    %c0_32 = arith.constant 0 : index
    %c0_33 = arith.constant 0 : index
    %16 = vector.load %arg15[%c0_32, %c0_33] : memref<32x64xbf16, #tpu.memory_space<vmem>>, vector<32x64xbf16>
    %c0_34 = arith.constant 0 : index
    %c0_35 = arith.constant 0 : index
    %17 = vector.load %arg16[%c0_34, %c0_35] : memref<1x64xf32, #tpu.memory_space<vmem>>, vector<1x64xf32>
    %c0_36 = arith.constant 0 : index
    %c0_37 = arith.constant 0 : index
    %18 = vector.load %arg17[%c0_36, %c0_37] : memref<64x32xbf16, #tpu.memory_space<vmem>>, vector<64x32xbf16>
    %c0_38 = arith.constant 0 : index
    %c0_39 = arith.constant 0 : index
    %19 = vector.load %arg18[%c0_38, %c0_39] : memref<1x32xf32, #tpu.memory_space<vmem>>, vector<1x32xf32>
    %c0_40 = arith.constant 0 : index
    %c0_41 = arith.constant 0 : index
    %20 = vector.load %arg19[%c0_40, %c0_41] : memref<1x32xf32, #tpu.memory_space<vmem>>, vector<1x32xf32>
    %c0_42 = arith.constant 0 : index
    %c0_43 = arith.constant 0 : index
    %21 = vector.load %arg20[%c0_42, %c0_43] : memref<1x32xf32, #tpu.memory_space<vmem>>, vector<1x32xf32>
    %c0_44 = arith.constant 0 : index
    %c0_45 = arith.constant 0 : index
    %22 = vector.load %arg21[%c0_44, %c0_45] : memref<1x32xf32, #tpu.memory_space<vmem>>, vector<1x32xf32>
    %c0_46 = arith.constant 0 : index
    %c0_47 = arith.constant 0 : index
    %23 = vector.load %arg22[%c0_46, %c0_47] : memref<1x32xf32, #tpu.memory_space<vmem>>, vector<1x32xf32>
    %c0_48 = arith.constant 0 : index
    %c0_49 = arith.constant 0 : index
    %24 = vector.load %arg23[%c0_48, %c0_49] : memref<1x32xf32, #tpu.memory_space<vmem>>, vector<1x32xf32>
    %c0_50 = arith.constant 0 : index
    %c0_51 = arith.constant 0 : index
    %25 = vector.load %arg24[%c0_50, %c0_51] : memref<1x32xf32, #tpu.memory_space<vmem>>, vector<1x32xf32>
    %cst = arith.constant 1.000000e+00 : f32
    %26 = vector.broadcast %cst : f32 to vector<2x1x8x8xf32>
    %27 = arith.subf %26, %4 : vector<2x1x8x8xf32>
    %cst_52 = arith.constant 1.000000e+00 : f32
    %28 = vector.broadcast %cst_52 : f32 to vector<2x1x8x8xf32>
    %29 = arith.cmpf oeq, %27, %28 : vector<2x1x8x8xf32>
    %cst_53 = arith.constant -9.22337203E+18 : f32
    %30 = vector.broadcast %cst_53 : f32 to vector<2x1x8x8xf32>
    %31 = arith.select %29, %30, %27 : vector<2x1x8x8xi1>, vector<2x1x8x8xf32>
    %cst_54 = arith.constant 0.353553385 : f32
    %32 = vector.broadcast %cst_54 : f32 to vector<2x1x8x8xf32>
    %33 = arith.mulf %31, %32 : vector<2x1x8x8xf32>
    %cst_55 = arith.constant 1.000000e+00 : f32
    %34 = vector.broadcast %cst_55 : f32 to vector<2x1x8xf32>
    %35 = arith.subf %34, %5 : vector<2x1x8xf32>
    %cst_56 = arith.constant 1.000000e+00 : f32
    %36 = vector.broadcast %cst_56 : f32 to vector<2x1x8xf32>
    %37 = arith.cmpf oeq, %35, %36 : vector<2x1x8xf32>
    %cst_57 = arith.constant -9.22337203E+18 : f32
    %38 = vector.broadcast %cst_57 : f32 to vector<2x1x8xf32>
    %39 = arith.select %37, %38, %35 : vector<2x1x8xi1>, vector<2x1x8xf32>
    %cst_58 = arith.constant 0.353553385 : f32
    %40 = vector.broadcast %cst_58 : f32 to vector<2x1x8xf32>
    %41 = arith.mulf %39, %40 : vector<2x1x8xf32>
    %42 = vector.shape_cast %41 : vector<2x1x8xf32> to vector<2x1x1x8xf32>
    %43 = arith.truncf %1 : vector<16x32xf32> to vector<16x32xbf16>
    %cst_59 = arith.constant dense<0.000000e+00> : vector<16x96xf32>
    %44 = tpu.matmul %43, %6, %cst_59 {dimension_numbers = #tpu.dot_dimension_numbers<[1], [0], [0], [1], [0, 0, 1, 1], [], []>} : vector<16x32xbf16>, vector<32x96xbf16>, vector<16x96xf32> -> vector<16x96xf32>
    %45 = vector.broadcast %7 : vector<1x96xf32> to vector<16x96xf32>
    %46 = arith.addf %44, %45 : vector<16x96xf32>
    %47 = vector.extract_strided_slice %46 {offsets = [0, 0], sizes = [16, 32], strides = [1, 1]} : vector<16x96xf32> to vector<16x32xf32>
    %48 = vector.extract_strided_slice %46 {offsets = [0, 32], sizes = [16, 32], strides = [1, 1]} : vector<16x96xf32> to vector<16x32xf32>
    %49 = vector.extract_strided_slice %46 {offsets = [0, 64], sizes = [16, 32], strides = [1, 1]} : vector<16x96xf32> to vector<16x32xf32>
    %cst_60 = arith.constant 0.353553385 : f32
    %50 = vector.broadcast %cst_60 : f32 to vector<16x32xf32>
    %51 = arith.mulf %47, %50 : vector<16x32xf32>
    %52 = vector.shape_cast %51 : vector<16x32xf32> to vector<2x8x4x8xf32>
    %53 = tpu.transpose %52, [0, 2, 1, 3] : vector<2x8x4x8xf32> -> vector<2x4x8x8xf32>
    %54 = vector.shape_cast %53 : vector<2x4x8x8xf32> to vector<8x8x8xf32>
    %55 = arith.truncf %54 : vector<8x8x8xf32> to vector<8x8x8xbf16>
    %56 = vector.shape_cast %48 : vector<16x32xf32> to vector<2x8x4x8xf32>
    %57 = tpu.transpose %56, [0, 2, 1, 3] : vector<2x8x4x8xf32> -> vector<2x4x8x8xf32>
    %58 = vector.shape_cast %57 : vector<2x4x8x8xf32> to vector<8x8x8xf32>
    %59 = arith.truncf %58 : vector<8x8x8xf32> to vector<8x8x8xbf16>
    %60 = vector.shape_cast %49 : vector<16x32xf32> to vector<2x8x4x8xf32>
    %61 = tpu.transpose %60, [0, 2, 1, 3] : vector<2x8x4x8xf32> -> vector<2x4x8x8xf32>
    %62 = vector.shape_cast %61 : vector<2x4x8x8xf32> to vector<8x8x8xf32>
    %63 = arith.truncf %62 : vector<8x8x8xf32> to vector<8x8x8xbf16>
    "tpu.trace_start"() <{level = 10 : i32, message = "zqd,zkd->zqk"}> : () -> ()
    %cst_61 = arith.constant dense<0.000000e+00> : vector<8x8x8xf32>
    %64 = tpu.matmul %55, %59, %cst_61 {dimension_numbers = #tpu.dot_dimension_numbers<[2], [2], [1], [1], [0, 0, 0, 1, 1, 1], [0], [0]>} : vector<8x8x8xbf16>, vector<8x8x8xbf16>, vector<8x8x8xf32> -> vector<8x8x8xf32>
    "tpu.trace_stop"() : () -> ()
    %65 = vector.shape_cast %64 : vector<8x8x8xf32> to vector<2x4x8x8xf32>
    %66 = vector.broadcast %33 : vector<2x1x8x8xf32> to vector<2x4x8x8xf32>
    %67 = arith.addf %65, %66 : vector<2x4x8x8xf32>
    %cst_62 = arith.constant dense<0xFF800000> : vector<2x4x8xf32>
    %68 = vector.multi_reduction <maximumf>, %67, %cst_62 [3] : vector<2x4x8x8xf32> to vector<2x4x8xf32>
    %69 = vector.shape_cast %68 : vector<2x4x8xf32> to vector<2x4x8x1xf32>
    %70 = vector.broadcast %69 : vector<2x4x8x1xf32> to vector<2x4x8x8xf32>
    %71 = arith.subf %67, %70 : vector<2x4x8x8xf32>
    %72 = math.exp %71 : vector<2x4x8x8xf32>
    %cst_63 = arith.constant dense<0.000000e+00> : vector<2x4x8xf32>
    %73 = vector.multi_reduction <add>, %72, %cst_63 [3] : vector<2x4x8x8xf32> to vector<2x4x8xf32>
    %74 = vector.shape_cast %73 : vector<2x4x8xf32> to vector<2x4x8x1xf32>
    %75 = tpu.reciprocal %74 {approx = true} : vector<2x4x8x1xf32> -> vector<2x4x8x1xf32>
    %76 = vector.broadcast %75 : vector<2x4x8x1xf32> to vector<2x4x8x8xf32>
    %77 = arith.mulf %72, %76 : vector<2x4x8x8xf32>
    %c0_64 = arith.constant 0 : index
    %c0_65 = arith.constant 0 : index
    %c0_66 = arith.constant 0 : index
    %c0_67 = arith.constant 0 : index
    %78 = vector.load %arg26[%c0_64, %c0_65, %c0_66, %c0_67] : memref<2x4x8x8xf32, #tpu.memory_space<vmem>>, vector<2x4x8x8xf32>
    tpu.vector_store %arg26[%c0_64, %c0_65, %c0_66, %c0_67], %77 {strides = array<i32>} : memref<2x4x8x8xf32, #tpu.memory_space<vmem>>, vector<2x4x8x8xf32>,
    %79 = vector.shape_cast %77 : vector<2x4x8x8xf32> to vector<8x8x8xf32>
    %80 = arith.truncf %79 : vector<8x8x8xf32> to vector<8x8x8xbf16>
    "tpu.trace_start"() <{level = 10 : i32, message = "zqk,zkd->zqd"}> : () -> ()
    %cst_68 = arith.constant dense<0.000000e+00> : vector<8x8x8xf32>
    %81 = tpu.matmul %80, %63, %cst_68 {dimension_numbers = #tpu.dot_dimension_numbers<[2], [1], [1], [2], [0, 0, 0, 1, 1, 2], [0], [0]>} : vector<8x8x8xbf16>, vector<8x8x8xbf16>, vector<8x8x8xf32> -> vector<8x8x8xf32>
    "tpu.trace_stop"() : () -> ()
    %82 = vector.shape_cast %81 : vector<8x8x8xf32> to vector<2x4x8x8xf32>
    %83 = tpu.transpose %82, [0, 2, 1, 3] : vector<2x4x8x8xf32> -> vector<2x8x4x8xf32>
    %84 = vector.shape_cast %83 : vector<2x8x4x8xf32> to vector<16x32xf32>
    %85 = arith.truncf %84 : vector<16x32xf32> to vector<16x32xbf16>
    %cst_69 = arith.constant dense<0.000000e+00> : vector<16x32xf32>
    %86 = tpu.matmul %85, %8, %cst_69 {dimension_numbers = #tpu.dot_dimension_numbers<[1], [0], [0], [1], [0, 0, 1, 1], [], []>} : vector<16x32xbf16>, vector<32x32xbf16>, vector<16x32xf32> -> vector<16x32xf32>
    %87 = vector.broadcast %9 : vector<1x32xf32> to vector<16x32xf32>
    %88 = arith.addf %86, %87 : vector<16x32xf32>
    %89 = arith.addf %88, %1 : vector<16x32xf32>
    %cst_70 = arith.constant dense<0.000000e+00> : vector<16xf32>
    %90 = vector.multi_reduction <add>, %89, %cst_70 [1] : vector<16x32xf32> to vector<16xf32>
    %91 = vector.shape_cast %90 : vector<16xf32> to vector<16x1xf32>
    %cst_71 = arith.constant 3.200000e+01 : f32
    %92 = vector.broadcast %cst_71 : f32 to vector<16x1xf32>
    %93 = arith.divf %91, %92 : vector<16x1xf32>
    %94 = vector.broadcast %93 : vector<16x1xf32> to vector<16x32xf32>
    %95 = arith.subf %89, %94 : vector<16x32xf32>
    %96 = arith.mulf %95, %95 : vector<16x32xf32>
    %cst_72 = arith.constant dense<0.000000e+00> : vector<16xf32>
    %97 = vector.multi_reduction <add>, %96, %cst_72 [1] : vector<16x32xf32> to vector<16xf32>
    %98 = vector.shape_cast %97 : vector<16xf32> to vector<16x1xf32>
    %cst_73 = arith.constant 3.200000e+01 : f32
    %99 = vector.broadcast %cst_73 : f32 to vector<16x1xf32>
    %100 = arith.divf %98, %99 : vector<16x1xf32>
    %101 = vector.broadcast %93 : vector<16x1xf32> to vector<16x32xf32>
    %102 = arith.subf %89, %101 : vector<16x32xf32>
    %cst_74 = arith.constant 9.99999974E-6 : f32
    %103 = vector.broadcast %cst_74 : f32 to vector<16x1xf32>
    %104 = arith.addf %100, %103 : vector<16x1xf32>
    %105 = math.rsqrt %104 : vector<16x1xf32>
    %106 = vector.broadcast %105 : vector<16x1xf32> to vector<16x32xf32>
    %107 = arith.mulf %102, %106 : vector<16x32xf32>
    %108 = vector.broadcast %20 : vector<1x32xf32> to vector<16x32xf32>
    %109 = arith.mulf %107, %108 : vector<16x32xf32>
    %110 = vector.broadcast %21 : vector<1x32xf32> to vector<16x32xf32>
    %111 = arith.addf %109, %110 : vector<16x32xf32>
    %112 = arith.truncf %111 : vector<16x32xf32> to vector<16x32xbf16>
    %113 = arith.truncf %3 : vector<16x32xf32> to vector<16x32xbf16>
    %cst_75 = arith.constant dense<0.000000e+00> : vector<16x32xf32>
    %114 = tpu.matmul %112, %10, %cst_75 {dimension_numbers = #tpu.dot_dimension_numbers<[1], [0], [0], [1], [0, 0, 1, 1], [], []>} : vector<16x32xbf16>, vector<32x32xbf16>, vector<16x32xf32> -> vector<16x32xf32>
    %115 = vector.broadcast %11 : vector<1x32xf32> to vector<16x32xf32>
    %116 = arith.addf %114, %115 : vector<16x32xf32>
    %cst_76 = arith.constant dense<0.000000e+00> : vector<16x64xf32>
    %117 = tpu.matmul %113, %12, %cst_76 {dimension_numbers = #tpu.dot_dimension_numbers<[1], [0], [0], [1], [0, 0, 1, 1], [], []>} : vector<16x32xbf16>, vector<32x64xbf16>, vector<16x64xf32> -> vector<16x64xf32>
    %118 = vector.broadcast %13 : vector<1x64xf32> to vector<16x64xf32>
    %119 = arith.addf %117, %118 : vector<16x64xf32>
    %120 = vector.extract_strided_slice %119 {offsets = [0, 0], sizes = [16, 32], strides = [1, 1]} : vector<16x64xf32> to vector<16x32xf32>
    %121 = vector.extract_strided_slice %119 {offsets = [0, 32], sizes = [16, 32], strides = [1, 1]} : vector<16x64xf32> to vector<16x32xf32>
    %cst_77 = arith.constant 0.353553385 : f32
    %122 = vector.broadcast %cst_77 : f32 to vector<16x32xf32>
    %123 = arith.mulf %116, %122 : vector<16x32xf32>
    %124 = vector.shape_cast %123 : vector<16x32xf32> to vector<2x8x4x8xf32>
    %125 = tpu.transpose %124, [0, 2, 1, 3] : vector<2x8x4x8xf32> -> vector<2x4x8x8xf32>
    %126 = vector.shape_cast %125 : vector<2x4x8x8xf32> to vector<8x8x8xf32>
    %127 = arith.truncf %126 : vector<8x8x8xf32> to vector<8x8x8xbf16>
    %128 = vector.shape_cast %120 : vector<16x32xf32> to vector<2x8x4x8xf32>
    %129 = tpu.transpose %128, [0, 2, 1, 3] : vector<2x8x4x8xf32> -> vector<2x4x8x8xf32>
    %130 = vector.shape_cast %129 : vector<2x4x8x8xf32> to vector<8x8x8xf32>
    %131 = arith.truncf %130 : vector<8x8x8xf32> to vector<8x8x8xbf16>
    %132 = vector.shape_cast %121 : vector<16x32xf32> to vector<2x8x4x8xf32>
    %133 = tpu.transpose %132, [0, 2, 1, 3] : vector<2x8x4x8xf32> -> vector<2x4x8x8xf32>
    %134 = vector.shape_cast %133 : vector<2x4x8x8xf32> to vector<8x8x8xf32>
    %135 = arith.truncf %134 : vector<8x8x8xf32> to vector<8x8x8xbf16>
    "tpu.trace_start"() <{level = 10 : i32, message = "zqd,zkd->zqk"}> : () -> ()
    %cst_78 = arith.constant dense<0.000000e+00> : vector<8x8x8xf32>
    %136 = tpu.matmul %127, %131, %cst_78 {dimension_numbers = #tpu.dot_dimension_numbers<[2], [2], [1], [1], [0, 0, 0, 1, 1, 1], [0], [0]>} : vector<8x8x8xbf16>, vector<8x8x8xbf16>, vector<8x8x8xf32> -> vector<8x8x8xf32>
    "tpu.trace_stop"() : () -> ()
    %137 = vector.shape_cast %136 : vector<8x8x8xf32> to vector<2x4x8x8xf32>
    %138 = vector.broadcast %42 : vector<2x1x1x8xf32> to vector<2x4x8x8xf32>
    %139 = arith.addf %137, %138 : vector<2x4x8x8xf32>
    %cst_79 = arith.constant dense<0xFF800000> : vector<2x4x8xf32>
    %140 = vector.multi_reduction <maximumf>, %139, %cst_79 [3] : vector<2x4x8x8xf32> to vector<2x4x8xf32>
    %141 = vector.shape_cast %140 : vector<2x4x8xf32> to vector<2x4x8x1xf32>
    %142 = vector.broadcast %141 : vector<2x4x8x1xf32> to vector<2x4x8x8xf32>
    %143 = arith.subf %139, %142 : vector<2x4x8x8xf32>
    %144 = math.exp %143 : vector<2x4x8x8xf32>
    %cst_80 = arith.constant dense<0.000000e+00> : vector<2x4x8xf32>
    %145 = vector.multi_reduction <add>, %144, %cst_80 [3] : vector<2x4x8x8xf32> to vector<2x4x8xf32>
    %146 = vector.shape_cast %145 : vector<2x4x8xf32> to vector<2x4x8x1xf32>
    %147 = tpu.reciprocal %146 {approx = true} : vector<2x4x8x1xf32> -> vector<2x4x8x1xf32>
    %148 = vector.broadcast %147 : vector<2x4x8x1xf32> to vector<2x4x8x8xf32>
    %149 = arith.mulf %144, %148 : vector<2x4x8x8xf32>
    %c0_81 = arith.constant 0 : index
    %c0_82 = arith.constant 0 : index
    %c0_83 = arith.constant 0 : index
    %c0_84 = arith.constant 0 : index
    %150 = vector.load %arg27[%c0_81, %c0_82, %c0_83, %c0_84] : memref<2x4x8x8xf32, #tpu.memory_space<vmem>>, vector<2x4x8x8xf32>
    tpu.vector_store %arg27[%c0_81, %c0_82, %c0_83, %c0_84], %149 {strides = array<i32>} : memref<2x4x8x8xf32, #tpu.memory_space<vmem>>, vector<2x4x8x8xf32>,
    %151 = vector.shape_cast %149 : vector<2x4x8x8xf32> to vector<8x8x8xf32>
    %152 = arith.truncf %151 : vector<8x8x8xf32> to vector<8x8x8xbf16>
    "tpu.trace_start"() <{level = 10 : i32, message = "zqk,zkd->zqd"}> : () -> ()
    %cst_85 = arith.constant dense<0.000000e+00> : vector<8x8x8xf32>
    %153 = tpu.matmul %152, %135, %cst_85 {dimension_numbers = #tpu.dot_dimension_numbers<[2], [1], [1], [2], [0, 0, 0, 1, 1, 2], [0], [0]>} : vector<8x8x8xbf16>, vector<8x8x8xbf16>, vector<8x8x8xf32> -> vector<8x8x8xf32>
    "tpu.trace_stop"() : () -> ()
    %154 = vector.shape_cast %153 : vector<8x8x8xf32> to vector<2x4x8x8xf32>
    %155 = tpu.transpose %154, [0, 2, 1, 3] : vector<2x4x8x8xf32> -> vector<2x8x4x8xf32>
    %156 = vector.shape_cast %155 : vector<2x8x4x8xf32> to vector<16x32xf32>
    %157 = arith.truncf %156 : vector<16x32xf32> to vector<16x32xbf16>
    %cst_86 = arith.constant dense<0.000000e+00> : vector<16x32xf32>
    %158 = tpu.matmul %157, %14, %cst_86 {dimension_numbers = #tpu.dot_dimension_numbers<[1], [0], [0], [1], [0, 0, 1, 1], [], []>} : vector<16x32xbf16>, vector<32x32xbf16>, vector<16x32xf32> -> vector<16x32xf32>
    %159 = vector.broadcast %15 : vector<1x32xf32> to vector<16x32xf32>
    %160 = arith.addf %158, %159 : vector<16x32xf32>
    %161 = arith.addf %160, %111 : vector<16x32xf32>
    %cst_87 = arith.constant dense<0.000000e+00> : vector<16xf32>
    %162 = vector.multi_reduction <add>, %161, %cst_87 [1] : vector<16x32xf32> to vector<16xf32>
    %163 = vector.shape_cast %162 : vector<16xf32> to vector<16x1xf32>
    %cst_88 = arith.constant 3.200000e+01 : f32
    %164 = vector.broadcast %cst_88 : f32 to vector<16x1xf32>
    %165 = arith.divf %163, %164 : vector<16x1xf32>
    %166 = vector.broadcast %165 : vector<16x1xf32> to vector<16x32xf32>
    %167 = arith.subf %161, %166 : vector<16x32xf32>
    %168 = arith.mulf %167, %167 : vector<16x32xf32>
    %cst_89 = arith.constant dense<0.000000e+00> : vector<16xf32>
    %169 = vector.multi_reduction <add>, %168, %cst_89 [1] : vector<16x32xf32> to vector<16xf32>
    %170 = vector.shape_cast %169 : vector<16xf32> to vector<16x1xf32>
    %cst_90 = arith.constant 3.200000e+01 : f32
    %171 = vector.broadcast %cst_90 : f32 to vector<16x1xf32>
    %172 = arith.divf %170, %171 : vector<16x1xf32>
    %173 = vector.broadcast %165 : vector<16x1xf32> to vector<16x32xf32>
    %174 = arith.subf %161, %173 : vector<16x32xf32>
    %cst_91 = arith.constant 9.99999974E-6 : f32
    %175 = vector.broadcast %cst_91 : f32 to vector<16x1xf32>
    %176 = arith.addf %172, %175 : vector<16x1xf32>
    %177 = math.rsqrt %176 : vector<16x1xf32>
    %178 = vector.broadcast %177 : vector<16x1xf32> to vector<16x32xf32>
    %179 = arith.mulf %174, %178 : vector<16x32xf32>
    %180 = vector.broadcast %22 : vector<1x32xf32> to vector<16x32xf32>
    %181 = arith.mulf %179, %180 : vector<16x32xf32>
    %182 = vector.broadcast %23 : vector<1x32xf32> to vector<16x32xf32>
    %183 = arith.addf %181, %182 : vector<16x32xf32>
    %184 = arith.truncf %183 : vector<16x32xf32> to vector<16x32xbf16>
    %cst_92 = arith.constant dense<0.000000e+00> : vector<16x64xf32>
    %185 = tpu.matmul %184, %16, %cst_92 {dimension_numbers = #tpu.dot_dimension_numbers<[1], [0], [0], [1], [0, 0, 1, 1], [], []>} : vector<16x32xbf16>, vector<32x64xbf16>, vector<16x64xf32> -> vector<16x64xf32>
    %186 = vector.broadcast %17 : vector<1x64xf32> to vector<16x64xf32>
    %187 = arith.addf %185, %186 : vector<16x64xf32>
    %cst_93 = arith.constant 5.000000e-01 : f32
    %188 = vector.broadcast %cst_93 : f32 to vector<16x64xf32>
    %189 = arith.mulf %188, %187 : vector<16x64xf32>
    %cst_94 = arith.constant 0.707106769 : f32
    %190 = vector.broadcast %cst_94 : f32 to vector<16x64xf32>
    %191 = arith.mulf %187, %190 : vector<16x64xf32>
    %192 = math.erf %191 : vector<16x64xf32>
    %cst_95 = arith.constant 1.000000e+00 : f32
    %193 = vector.broadcast %cst_95 : f32 to vector<16x64xf32>
    %194 = arith.addf %193, %192 : vector<16x64xf32>
    %195 = arith.mulf %189, %194 : vector<16x64xf32>
    %196 = arith.truncf %195 : vector<16x64xf32> to vector<16x64xbf16>
    %cst_96 = arith.constant dense<0.000000e+00> : vector<16x32xf32>
    %197 = tpu.matmul %196, %18, %cst_96 {dimension_numbers = #tpu.dot_dimension_numbers<[1], [0], [0], [1], [0, 0, 1, 1], [], []>} : vector<16x64xbf16>, vector<64x32xbf16>, vector<16x32xf32> -> vector<16x32xf32>
    %198 = vector.broadcast %19 : vector<1x32xf32> to vector<16x32xf32>
    %199 = arith.addf %197, %198 : vector<16x32xf32>
    %200 = arith.addf %199, %183 : vector<16x32xf32>
    %cst_97 = arith.constant dense<0.000000e+00> : vector<16xf32>
    %201 = vector.multi_reduction <add>, %200, %cst_97 [1] : vector<16x32xf32> to vector<16xf32>
    %202 = vector.shape_cast %201 : vector<16xf32> to vector<16x1xf32>
    %cst_98 = arith.constant 3.200000e+01 : f32
    %203 = vector.broadcast %cst_98 : f32 to vector<16x1xf32>
    %204 = arith.divf %202, %203 : vector<16x1xf32>
    %205 = vector.broadcast %204 : vector<16x1xf32> to vector<16x32xf32>
    %206 = arith.subf %200, %205 : vector<16x32xf32>
    %207 = arith.mulf %206, %206 : vector<16x32xf32>
    %cst_99 = arith.constant dense<0.000000e+00> : vector<16xf32>
    %208 = vector.multi_reduction <add>, %207, %cst_99 [1] : vector<16x32xf32> to vector<16xf32>
    %209 = vector.shape_cast %208 : vector<16xf32> to vector<16x1xf32>
    %cst_100 = arith.constant 3.200000e+01 : f32
    %210 = vector.broadcast %cst_100 : f32 to vector<16x1xf32>
    %211 = arith.divf %209, %210 : vector<16x1xf32>
    %212 = vector.broadcast %204 : vector<16x1xf32> to vector<16x32xf32>
    %213 = arith.subf %200, %212 : vector<16x32xf32>
    %cst_101 = arith.constant 9.99999974E-6 : f32
    %214 = vector.broadcast %cst_101 : f32 to vector<16x1xf32>
    %215 = arith.addf %211, %214 : vector<16x1xf32>
    %216 = math.rsqrt %215 : vector<16x1xf32>
    %217 = vector.broadcast %216 : vector<16x1xf32> to vector<16x32xf32>
    %218 = arith.mulf %213, %217 : vector<16x32xf32>
    %219 = vector.broadcast %24 : vector<1x32xf32> to vector<16x32xf32>
    %220 = arith.mulf %218, %219 : vector<16x32xf32>
    %221 = vector.broadcast %25 : vector<1x32xf32> to vector<16x32xf32>
    %222 = arith.addf %220, %221 : vector<16x32xf32>
    %223 = vector.shape_cast %222 : vector<16x32xf32> to vector<2x8x32xf32>
    %c0_102 = arith.constant 0 : index
    %c0_103 = arith.constant 0 : index
    %c0_104 = arith.constant 0 : index
    %224 = vector.load %arg25[%c0_102, %c0_103, %c0_104] : memref<2x8x32xf32, #tpu.memory_space<vmem>>, vector<2x8x32xf32>
    tpu.vector_store %arg25[%c0_102, %c0_103, %c0_104], %223 {strides = array<i32>} : memref<2x8x32xf32, #tpu.memory_space<vmem>>, vector<2x8x32xf32>,
    return
  }
  func.func @transform_0(%arg0: i32) -> (i32, i32, i32) {
    %c0_i32 = arith.constant 0 : i32
    %c0_i32_0 = arith.constant 0 : i32
    %c0_i32_1 = arith.constant 0 : i32
    return %arg0, %c0_i32, %c0_i32_0 : i32, i32, i32
  }
  func.func @transform_1(%arg0: i32) -> (i32, i32, i32, i32) {
    %c0_i32 = arith.constant 0 : i32
    %c0_i32_0 = arith.constant 0 : i32
    %c0_i32_1 = arith.constant 0 : i32
    %c0_i32_2 = arith.constant 0 : i32
    return %arg0, %c0_i32, %c0_i32_0, %c0_i32_1 : i32, i32, i32, i32
  }
  func.func @transform_2(%arg0: i32) -> (i32, i32, i32) {
    %c0_i32 = arith.constant 0 : i32
    %c0_i32_0 = arith.constant 0 : i32
    %c0_i32_1 = arith.constant 0 : i32
    return %arg0, %c0_i32, %c0_i32_0 : i32, i32, i32
  }
  func.func @transform_3(%arg0: i32) -> (i32, i32, i32) {
    %c0_i32 = arith.constant 0 : i32
    %c0_i32_0 = arith.constant 0 : i32
    %c0_i32_1 = arith.constant 0 : i32
    return %arg0, %c0_i32, %c0_i32_0 : i32, i32, i32
  }
  func.func @transform_4(%arg0: i32) -> (i32, i32) {
    %c0_i32 = arith.constant 0 : i32
    %c0_i32_0 = arith.constant 0 : i32
    %c0_i32_1 = arith.constant 0 : i32
    return %c0_i32, %c0_i32_0 : i32, i32
  }
  func.func @transform_5(%arg0: i32) -> (i32, i32) {
    %c0_i32 = arith.constant 0 : i32
    %c0_i32_0 = arith.constant 0 : i32
    %c0_i32_1 = arith.constant 0 : i32
    return %c0_i32, %c0_i32_0 : i32, i32
  }
  func.func @transform_6(%arg0: i32) -> (i32, i32) {
    %c0_i32 = arith.constant 0 : i32
    %c0_i32_0 = arith.constant 0 : i32
    %c0_i32_1 = arith.constant 0 : i32
    return %c0_i32, %c0_i32_0 : i32, i32
  }
  func.func @transform_7(%arg0: i32) -> (i32, i32) {
    %c0_i32 = arith.constant 0 : i32
    %c0_i32_0 = arith.constant 0 : i32
    %c0_i32_1 = arith.constant 0 : i32
    return %c0_i32, %c0_i32_0 : i32, i32
  }
  func.func @transform_8(%arg0: i32) -> (i32, i32) {
    %c0_i32 = arith.constant 0 : i32
    %c0_i32_0 = arith.constant 0 : i32
    %c0_i32_1 = arith.constant 0 : i32
    return %c0_i32, %c0_i32_0 : i32, i32
  }
  func.func @transform_9(%arg0: i32) -> (i32, i32) {
    %c0_i32 = arith.constant 0 : i32
    %c0_i32_0 = arith.constant 0 : i32
    %c0_i32_1 = arith.constant 0 : i32
    return %c0_i32, %c0_i32_0 : i32, i32
  }
  func.func @transform_10(%arg0: i32) -> (i32, i32) {
    %c0_i32 = arith.constant 0 : i32
    %c0_i32_0 = arith.constant 0 : i32
    %c0_i32_1 = arith.constant 0 : i32
    return %c0_i32, %c0_i32_0 : i32, i32
  }
  func.func @transform_11(%arg0: i32) -> (i32, i32) {
    %c0_i32 = arith.constant 0 : i32
    %c0_i32_0 = arith.constant 0 : i32
    %c0_i32_1 = arith.constant 0 : i32
    return %c0_i32, %c0_i32_0 : i32, i32
  }
  func.func @transform_12(%arg0: i32) -> (i32, i32) {
    %c0_i32 = arith.constant 0 : i32
    %c0_i32_0 = arith.constant 0 : i32
    %c0_i32_1 = arith.constant 0 : i32
    return %c0_i32, %c0_i32_0 : i32, i32
  }
  func.func @transform_13(%arg0: i32) -> (i32, i32) {
    %c0_i32 = arith.constant 0 : i32
    %c0_i32_0 = arith.constant 0 : i32
    %c0_i32_1 = arith.constant 0 : i32
    return %c0_i32, %c0_i32_0 : i32, i32
  }
  func.func @transform_14(%arg0: i32) -> (i32, i32) {
    %c0_i32 = arith.constant 0 : i32
    %c0_i32_0 = arith.constant 0 : i32
    %c0_i32_1 = arith.constant 0 : i32
    return %c0_i32, %c0_i32_0 : i32, i32
  }
  func.func @transform_15(%arg0: i32) -> (i32, i32) {
    %c0_i32 = arith.constant 0 : i32
    %c0_i32_0 = arith.constant 0 : i32
    %c0_i32_1 = arith.constant 0 : i32
    return %c0_i32, %c0_i32_0 : i32, i32
  }
  func.func @transform_16(%arg0: i32) -> (i32, i32) {
    %c0_i32 = arith.constant 0 : i32
    %c0_i32_0 = arith.constant 0 : i32
    %c0_i32_1 = arith.constant 0 : i32
    return %c0_i32, %c0_i32_0 : i32, i32
  }
  func.func @transform_17(%arg0: i32) -> (i32, i32) {
    %c0_i32 = arith.constant 0 : i32
    %c0_i32_0 = arith.constant 0 : i32
    %c0_i32_1 = arith.constant 0 : i32
    return %c0_i32, %c0_i32_0 : i32, i32
  }
  func.func @transform_18(%arg0: i32) -> (i32, i32) {
    %c0_i32 = arith.constant 0 : i32
    %c0_i32_0 = arith.constant 0 : i32
    %c0_i32_1 = arith.constant 0 : i32
    return %c0_i32, %c0_i32_0 : i32, i32
  }
  func.func @transform_19(%arg0: i32) -> (i32, i32) {
    %c0_i32 = arith.constant 0 : i32
    %c0_i32_0 = arith.constant 0 : i32
    %c0_i32_1 = arith.constant 0 : i32
    return %c0_i32, %c0_i32_0 : i32, i32
  }
  func.func @transform_20(%arg0: i32) -> (i32, i32) {
    %c0_i32 = arith.constant 0 : i32
    %c0_i32_0 = arith.constant 0 : i32
    %c0_i32_1 = arith.constant 0 : i32
    return %c0_i32, %c0_i32_0 : i32, i32
  }
  func.func @transform_21(%arg0: i32) -> (i32, i32) {
    %c0_i32 = arith.constant 0 : i32
    %c0_i32_0 = arith.constant 0 : i32
    %c0_i32_1 = arith.constant 0 : i32
    return %c0_i32, %c0_i32_0 : i32, i32
  }
  func.func @transform_22(%arg0: i32) -> (i32, i32) {
    %c0_i32 = arith.constant 0 : i32
    %c0_i32_0 = arith.constant 0 : i32
    %c0_i32_1 = arith.constant 0 : i32
    return %c0_i32, %c0_i32_0 : i32, i32
  }
  func.func @transform_23(%arg0: i32) -> (i32, i32) {
    %c0_i32 = arith.constant 0 : i32
    %c0_i32_0 = arith.constant 0 : i32
    %c0_i32_1 = arith.constant 0 : i32
    return %c0_i32, %c0_i32_0 : i32, i32
  }
  func.func @transform_24(%arg0: i32) -> (i32, i32, i32) {
    %c0_i32 = arith.constant 0 : i32
    %c0_i32_0 = arith.constant 0 : i32
    %c0_i32_1 = arith.constant 0 : i32
    return %arg0, %c0_i32, %c0_i32_0 : i32, i32, i32
  }
  func.func @transform_25(%arg0: i32) -> (i32, i32, i32, i32) {
    %c0_i32 = arith.constant 0 : i32
    %c0_i32_0 = arith.constant 0 : i32
    %c0_i32_1 = arith.constant 0 : i32
    %c0_i32_2 = arith.constant 0 : i32
    return %arg0, %c0_i32, %c0_i32_0, %c0_i32_1 : i32, i32, i32, i32
  }
  func.func @transform_26(%arg0: i32) -> (i32, i32, i32, i32) {
    %c0_i32 = arith.constant 0 : i32
    %c0_i32_0 = arith.constant 0 : i32
    %c0_i32_1 = arith.constant 0 : i32
    %c0_i32_2 = arith.constant 0 : i32
    return %arg0, %c0_i32, %c0_i32_0, %c0_i32_1 : i32, i32, i32, i32
  }
}

</mosaic_0001>

<llo_original>
// kernel: tpu_custom_call.1
$region0: #{tpu_custom_call.1}
  #allocation0 [shape = 'u32[]', space=smem, size = 0x4, offset = 0x4, fixed_abs, tag = 'smem constant byte address 0x4 - core index']
  #allocation1 [shape = 'u32[144,128]{1,0:T(1,128)}', space=vmem, size = 0x12000, scoped, tag = 'internal scratch']
  %s0 = inlined_call_operand.vmem [shape: f32[2,8,32], index: 0, kind: input, shape index: {}]
  %s1 = inlined_call_operand.vmem [shape: f32[2,1,8,8], index: 1, kind: input, shape index: {}]
  %s2 = inlined_call_operand.vmem [shape: f32[2,8,32], index: 2, kind: input, shape index: {}]
  %s3 = inlined_call_operand.vmem [shape: f32[2,1,8], index: 3, kind: input, shape index: {}]
  %s4 = inlined_call_operand.hbm [shape: bf16[32,96], index: 4, kind: input, shape index: {}]
  %s5 = inlined_call_operand.vmem [shape: f32[1,96], index: 5, kind: input, shape index: {}]
  %s6 = inlined_call_operand.hbm [shape: bf16[32,32], index: 6, kind: input, shape index: {}]
  %s7 = inlined_call_operand.vmem [shape: f32[1,32], index: 7, kind: input, shape index: {}]
  %s8 = inlined_call_operand.hbm [shape: bf16[32,32], index: 8, kind: input, shape index: {}]
  %s9 = inlined_call_operand.vmem [shape: f32[1,32], index: 9, kind: input, shape index: {}]
  %s10 = inlined_call_operand.hbm [shape: bf16[32,64], index: 10, kind: input, shape index: {}]
  %s11 = inlined_call_operand.vmem [shape: f32[1,64], index: 11, kind: input, shape index: {}]
  %s12 = inlined_call_operand.hbm [shape: bf16[32,32], index: 12, kind: input, shape index: {}]
  %s13 = inlined_call_operand.vmem [shape: f32[1,32], index: 13, kind: input, shape index: {}]
  %s14 = inlined_call_operand.hbm [shape: bf16[32,64], index: 14, kind: input, shape index: {}]
  %s15 = inlined_call_operand.vmem [shape: f32[1,64], index: 15, kind: input, shape index: {}]
  %s16 = inlined_call_operand.vmem [shape: bf16[64,32], index: 16, kind: input, shape index: {}]
  %s17 = inlined_call_operand.vmem [shape: f32[1,32], index: 17, kind: input, shape index: {}]
  %s18 = inlined_call_operand.vmem [shape: f32[1,32], index: 18, kind: input, shape index: {}]
  %s19 = inlined_call_operand.vmem [shape: f32[1,32], index: 19, kind: input, shape index: {}]
  %s20 = inlined_call_operand.vmem [shape: f32[1,32], index: 20, kind: input, shape index: {}]
  %s21 = inlined_call_operand.vmem [shape: f32[1,32], index: 21, kind: input, shape index: {}]
  %s22 = inlined_call_operand.vmem [shape: f32[1,32], index: 22, kind: input, shape index: {}]
  %s23 = inlined_call_operand.vmem [shape: f32[1,32], index: 23, kind: input, shape index: {}]
  %s24 = inlined_call_operand.hbm [shape: f32[2,8,32], index: 24, kind: output, shape index: {0}]
  %s25 = inlined_call_operand.hbm [shape: f32[2,4,8,8], index: 25, kind: output, shape index: {1}]
  %s26 = inlined_call_operand.hbm [shape: f32[2,4,8,8], index: 26, kind: output, shape index: {2}]
  %27 = xla_tuple %s24, %s25, %s26
  %s28 = sld [smem:[#allocation0]]
  $region146: #{tpu_custom_call.1} parent=0
    _
  %s30 = ssub.s32 1, %s28
  %s31 = scalar_select 0, %s30, %s28
  $region1: #{tpu_custom_call.1} parent=0
    #allocation2 [shape = 'u8[8192]{0}', space=vmem, size = 0x2000, scoped, tag = 'input window, operand 4, single buffered']
    #allocation3 [shape = 's32[1]{0}', space=sflag, size = 0x4, scoped, tag = 'scoped memory for tpu_custom_call.1']
    #allocation4 [shape = 's32[1]{0}', space=sflag, size = 0x4, scoped, tag = 'scoped memory for tpu_custom_call.1']
    #allocation5 [shape = 'u8[8192]{0}', space=vmem, size = 0x2000, scoped, tag = 'input window, operand 6, single buffered']
    #allocation6 [shape = 's32[1]{0}', space=sflag, size = 0x4, scoped, tag = 'scoped memory for tpu_custom_call.1']
    #allocation7 [shape = 'u8[8192]{0}', space=vmem, size = 0x2000, scoped, tag = 'input window, operand 8, single buffered']
    #allocation8 [shape = 'u8[8192]{0}', space=vmem, size = 0x2000, scoped, tag = 'input window, operand 10, single buffered']
    #allocation9 [shape = 's32[1]{0}', space=sflag, size = 0x4, scoped, tag = 'scoped memory for tpu_custom_call.1']
    #allocation10 [shape = 'u8[8192]{0}', space=vmem, size = 0x2000, scoped, tag = 'input window, operand 12, single buffered']
    #allocation11 [shape = 'u8[8192]{0}', space=vmem, size = 0x2000, scoped, tag = 'input window, operand 14, single buffered']
    #allocation12 [shape = 's32[1]{0}', space=sflag, size = 0x4, scoped, tag = 'scoped memory for tpu_custom_call.1']
    #allocation13 [shape = 'u8[8192]{0}', space=vmem, size = 0x2000, scoped, tag = 'output window, operand 0, single buffered']
    #allocation14 [shape = 'u8[32768]{0}', space=vmem, size = 0x8000, scoped, tag = 'output window, operand 1, single buffered']
    #allocation15 [shape = 's32[1]{0}', space=sflag, size = 0x4, scoped, tag = 'scoped memory for tpu_custom_call.1']
    #allocation16 [shape = 'u8[32768]{0}', space=vmem, size = 0x8000, scoped, tag = 'output window, operand 2, single buffered']
    %32 = vsyncpa [#allocation3], 0
    %33 = vsyncpa [#allocation6], 0
    %34 = vsyncpa [#allocation9], 0
    %35 = vsyncpa [#allocation12], 0
    %36 = vsyncpa [#allocation4], 0
    %37 = vsyncpa [#allocation15], 0
    // Predicated region
    $region2: #{tpu_custom_call.1} parent=1 // pred_check
      _
    $region3: #{tpu_custom_call.1} parent=1 // pred_check_branch
      %39 = sbr.rel (0) target = $region5
    $region4: #{tpu_custom_call.1} parent=1 // pred_region
      _
    $region5: #{tpu_custom_call.1} parent=1 // pred_fallthru
      _
    // Predicated region
    $region6: #{tpu_custom_call.1} parent=1 // pred_check
      _
    $region7: #{tpu_custom_call.1} parent=1 // pred_check_branch
      %41 = sbr.rel (0) target = $region9
    $region8: #{tpu_custom_call.1} parent=1 // pred_region
      _
    $region9: #{tpu_custom_call.1} parent=1 // pred_fallthru
      _
    // Predicated region
    $region10: #{tpu_custom_call.1} parent=1 // pred_check
      _
    $region11: #{tpu_custom_call.1} parent=1 // pred_check_branch
      %43 = sbr.rel (0) target = $region13
    $region12: #{tpu_custom_call.1} parent=1 // pred_region
      _
    $region13: #{tpu_custom_call.1} parent=1 // pred_fallthru
      _
    // Predicated region
    $region14: #{tpu_custom_call.1} parent=1 // pred_check
      _
    $region15: #{tpu_custom_call.1} parent=1 // pred_check_branch
      %45 = sbr.rel (0) target = $region17
    $region16: #{tpu_custom_call.1} parent=1 // pred_region
      _
    $region17: #{tpu_custom_call.1} parent=1 // pred_fallthru
      _
    // Predicated region
    $region18: #{tpu_custom_call.1} parent=1 // pred_check
      _
    $region19: #{tpu_custom_call.1} parent=1 // pred_check_branch
      %47 = sbr.rel (0) target = $region21
    $region20: #{tpu_custom_call.1} parent=1 // pred_region
      %s49 = ssub.s32 256, 256
      %50 = vsyncadd [#allocation3], %s49
      %s51 = sshll.u32 [#allocation2], 4
      %s52 = int_to_ptr.vmem [resolvable:$true] %s51
      %57 = dma.hbm_to_vmem [thread:$0]  %s4, 256, %s52, [#allocation3], 64, 64, 4
    $region21: #{tpu_custom_call.1} parent=1 // pred_fallthru
      _
    // Predicated region
    $region22: #{tpu_custom_call.1} parent=1 // pred_check
      _
    $region23: #{tpu_custom_call.1} parent=1 // pred_check_branch
      %59 = sbr.rel (0) target = $region25
    $region24: #{tpu_custom_call.1} parent=1 // pred_region
      _
    $region25: #{tpu_custom_call.1} parent=1 // pred_fallthru
      _
    // Predicated region
    $region26: #{tpu_custom_call.1} parent=1 // pred_check
      _
    $region27: #{tpu_custom_call.1} parent=1 // pred_check_branch
      %61 = sbr.rel (0) target = $region29
    $region28: #{tpu_custom_call.1} parent=1 // pred_region
      %s63 = ssub.s32 256, 256
      %64 = vsyncadd [#allocation6], %s63
      %s65 = sshll.u32 [#allocation5], 4
      %s66 = int_to_ptr.vmem [resolvable:$true] %s65
      %71 = dma.hbm_to_vmem [thread:$0]  %s6, 256, %s66, [#allocation6], 64, 64, 4
    $region29: #{tpu_custom_call.1} parent=1 // pred_fallthru
      _
    // Predicated region
    $region30: #{tpu_custom_call.1} parent=1 // pred_check
      _
    $region31: #{tpu_custom_call.1} parent=1 // pred_check_branch
      %73 = sbr.rel (0) target = $region33
    $region32: #{tpu_custom_call.1} parent=1 // pred_region
      _
    $region33: #{tpu_custom_call.1} parent=1 // pred_fallthru
      _
    // Predicated region
    $region34: #{tpu_custom_call.1} parent=1 // pred_check
      _
    $region35: #{tpu_custom_call.1} parent=1 // pred_check_branch
      %75 = sbr.rel (0) target = $region37
    $region36: #{tpu_custom_call.1} parent=1 // pred_region
      %s77 = ssub.s32 256, 256
      %78 = vsyncadd [#allocation6], %s77
      %s79 = sshll.u32 [#allocation7], 4
      %s80 = int_to_ptr.vmem [resolvable:$true] %s79
      %85 = dma.hbm_to_vmem [thread:$0]  %s8, 256, %s80, [#allocation6], 64, 64, 4
    $region37: #{tpu_custom_call.1} parent=1 // pred_fallthru
      _
    // Predicated region
    $region38: #{tpu_custom_call.1} parent=1 // pred_check
      _
    $region39: #{tpu_custom_call.1} parent=1 // pred_check_branch
      %87 = sbr.rel (0) target = $region41
    $region40: #{tpu_custom_call.1} parent=1 // pred_region
      _
    $region41: #{tpu_custom_call.1} parent=1 // pred_fallthru
      _
    // Predicated region
    $region42: #{tpu_custom_call.1} parent=1 // pred_check
      _
    $region43: #{tpu_custom_call.1} parent=1 // pred_check_branch
      %89 = sbr.rel (0) target = $region45
    $region44: #{tpu_custom_call.1} parent=1 // pred_region
      %s91 = ssub.s32 256, 256
      %92 = vsyncadd [#allocation9], %s91
      %s93 = sshll.u32 [#allocation8], 4
      %s94 = int_to_ptr.vmem [resolvable:$true] %s93
      %99 = dma.hbm_to_vmem [thread:$0]  %s10, 256, %s94, [#allocation9], 64, 64, 4
    $region45: #{tpu_custom_call.1} parent=1 // pred_fallthru
      _
    // Predicated region
    $region46: #{tpu_custom_call.1} parent=1 // pred_check
      _
    $region47: #{tpu_custom_call.1} parent=1 // pred_check_branch
      %101 = sbr.rel (0) target = $region49
    $region48: #{tpu_custom_call.1} parent=1 // pred_region
      _
    $region49: #{tpu_custom_call.1} parent=1 // pred_fallthru
      _
    // Predicated region
    $region50: #{tpu_custom_call.1} parent=1 // pred_check
      _
    $region51: #{tpu_custom_call.1} parent=1 // pred_check_branch
      %103 = sbr.rel (0) target = $region53
    $region52: #{tpu_custom_call.1} parent=1 // pred_region
      %s105 = ssub.s32 256, 256
      %106 = vsyncadd [#allocation9], %s105
      %s107 = sshll.u32 [#allocation10], 4
      %s108 = int_to_ptr.vmem [resolvable:$true] %s107
      %113 = dma.hbm_to_vmem [thread:$0]  %s12, 256, %s108, [#allocation9], 64, 64, 4
    $region53: #{tpu_custom_call.1} parent=1 // pred_fallthru
      _
    // Predicated region
    $region54: #{tpu_custom_call.1} parent=1 // pred_check
      _
    $region55: #{tpu_custom_call.1} parent=1 // pred_check_branch
      %115 = sbr.rel (0) target = $region57
    $region56: #{tpu_custom_call.1} parent=1 // pred_region
      _
    $region57: #{tpu_custom_call.1} parent=1 // pred_fallthru
      _
    // Predicated region
    $region58: #{tpu_custom_call.1} parent=1 // pred_check
      _
    $region59: #{tpu_custom_call.1} parent=1 // pred_check_branch
      %117 = sbr.rel (0) target = $region61
    $region60: #{tpu_custom_call.1} parent=1 // pred_region
      %s119 = ssub.s32 256, 256
      %120 = vsyncadd [#allocation12], %s119
      %s121 = sshll.u32 [#allocation11], 4
      %s122 = int_to_ptr.vmem [resolvable:$true] %s121
      %127 = dma.hbm_to_vmem [thread:$0]  %s14, 256, %s122, [#allocation12], 64, 64, 4
    $region61: #{tpu_custom_call.1} parent=1 // pred_fallthru
      _
    // Predicated region
    $region62: #{tpu_custom_call.1} parent=1 // pred_check
      _
    $region63: #{tpu_custom_call.1} parent=1 // pred_check_branch
      %129 = sbr.rel (0) target = $region65
    $region64: #{tpu_custom_call.1} parent=1 // pred_region
      _
    $region65: #{tpu_custom_call.1} parent=1 // pred_fallthru
      _
    // Predicated region
    $region66: #{tpu_custom_call.1} parent=1 // pred_check
      _
    $region67: #{tpu_custom_call.1} parent=1 // pred_check_branch
      %131 = sbr.rel (0) target = $region69
    $region68: #{tpu_custom_call.1} parent=1 // pred_region
      _
    $region69: #{tpu_custom_call.1} parent=1 // pred_fallthru
      _
    // Predicated region
    $region70: #{tpu_custom_call.1} parent=1 // pred_check
      _
    $region71: #{tpu_custom_call.1} parent=1 // pred_check_branch
      %133 = sbr.rel (0) target = $region73
    $region72: #{tpu_custom_call.1} parent=1 // pred_region
      _
    $region73: #{tpu_custom_call.1} parent=1 // pred_fallthru
      _
    // Predicated region
    $region74: #{tpu_custom_call.1} parent=1 // pred_check
      _
    $region75: #{tpu_custom_call.1} parent=1 // pred_check_branch
      %135 = sbr.rel (0) target = $region77
    $region76: #{tpu_custom_call.1} parent=1 // pred_region
      _
    $region77: #{tpu_custom_call.1} parent=1 // pred_fallthru
      _
    // Predicated region
    $region78: #{tpu_custom_call.1} parent=1 // pred_check
      _
    $region79: #{tpu_custom_call.1} parent=1 // pred_check_branch
      %137 = sbr.rel (0) target = $region81
    $region80: #{tpu_custom_call.1} parent=1 // pred_region
      _
    $region81: #{tpu_custom_call.1} parent=1 // pred_fallthru
      _
    // Predicated region
    $region82: #{tpu_custom_call.1} parent=1 // pred_check
      _
    $region83: #{tpu_custom_call.1} parent=1 // pred_check_branch
      %139 = sbr.rel (0) target = $region85
    $region84: #{tpu_custom_call.1} parent=1 // pred_region
      _
    $region85: #{tpu_custom_call.1} parent=1 // pred_fallthru
      _
    // Predicated region
    $region86: #{tpu_custom_call.1} parent=1 // pred_check
      _
    $region87: #{tpu_custom_call.1} parent=1 // pred_check_branch
      %141 = sbr.rel (0) target = $region89
    $region88: #{tpu_custom_call.1} parent=1 // pred_region
      _
    $region89: #{tpu_custom_call.1} parent=1 // pred_fallthru
      _
    // Predicated region
    $region90: #{tpu_custom_call.1} parent=1 // pred_check
      _
    $region91: #{tpu_custom_call.1} parent=1 // pred_check_branch
      %143 = sbr.rel (0) target = $region93
    $region92: #{tpu_custom_call.1} parent=1 // pred_region
      _
    $region93: #{tpu_custom_call.1} parent=1 // pred_fallthru
      _
    // Predicated region
    $region94: #{tpu_custom_call.1} parent=1 // pred_check
      _
    $region95: #{tpu_custom_call.1} parent=1 // pred_check_branch
      %145 = sbr.rel (0) target = $region97
    $region96: #{tpu_custom_call.1} parent=1 // pred_region
      _
    $region97: #{tpu_custom_call.1} parent=1 // pred_fallthru
      _
    // Predicated region
    $region98: #{tpu_custom_call.1} parent=1 // pred_check
      _
    $region99: #{tpu_custom_call.1} parent=1 // pred_check_branch
      %147 = sbr.rel (0) target = $region101
    $region100: #{tpu_custom_call.1} parent=1 // pred_region
      %148 = dma.done [#allocation3], 256
    $region101: #{tpu_custom_call.1} parent=1 // pred_fallthru
      _
    // Predicated region
    $region102: #{tpu_custom_call.1} parent=1 // pred_check
      _
    $region103: #{tpu_custom_call.1} parent=1 // pred_check_branch
      %150 = sbr.rel (0) target = $region105
    $region104: #{tpu_custom_call.1} parent=1 // pred_region
      %151 = dma.done [#allocation6], 256
    $region105: #{tpu_custom_call.1} parent=1 // pred_fallthru
      _
    // Predicated region
    $region106: #{tpu_custom_call.1} parent=1 // pred_check
      _
    $region107: #{tpu_custom_call.1} parent=1 // pred_check_branch
      %153 = sbr.rel (0) target = $region109
    $region108: #{tpu_custom_call.1} parent=1 // pred_region
      %154 = dma.done [#allocation6], 256
    $region109: #{tpu_custom_call.1} parent=1 // pred_fallthru
      _
    // Predicated region
    $region110: #{tpu_custom_call.1} parent=1 // pred_check
      _
    $region111: #{tpu_custom_call.1} parent=1 // pred_check_branch
      %156 = sbr.rel (0) target = $region113
    $region112: #{tpu_custom_call.1} parent=1 // pred_region
      %157 = dma.done [#allocation9], 256
    $region113: #{tpu_custom_call.1} parent=1 // pred_fallthru
      _
    // Predicated region
    $region114: #{tpu_custom_call.1} parent=1 // pred_check
      _
    $region115: #{tpu_custom_call.1} parent=1 // pred_check_branch
      %159 = sbr.rel (0) target = $region117
    $region116: #{tpu_custom_call.1} parent=1 // pred_region
      %160 = dma.done [#allocation9], 256
    $region117: #{tpu_custom_call.1} parent=1 // pred_fallthru
      _
    // Predicated region
    $region118: #{tpu_custom_call.1} parent=1 // pred_check
      _
    $region119: #{tpu_custom_call.1} parent=1 // pred_check_branch
      %162 = sbr.rel (0) target = $region121
    $region120: #{tpu_custom_call.1} parent=1 // pred_region
      %163 = dma.done [#allocation12], 256
    $region121: #{tpu_custom_call.1} parent=1 // pred_fallthru
      _
    %v165 = vld [vmem:[%s0] sm:$0xff]
    %v166 = vld [vmem:[%s0 + $0x8] sm:$0xff]
    %v167 = vld [vmem:[%s2] sm:$0xff]
    %v168 = vld [vmem:[%s2 + $0x8] sm:$0xff]
    %v169 = vld [vmem:[%s1] sm:$0xff]
    %v170 = vld [vmem:[%s1 + $0x8] sm:$0xff]
    %v171 = vld [vmem:[%s3] sm:$0x1]
    %v172 = vld [vmem:[%s3 + $0x1] sm:$0x1]
    %v173 = vld [vmem:[#allocation2] sm:$0xf]
    %v174 = vld [vmem:[#allocation2 + $0x4] sm:$0xf]
    %v175 = vld [vmem:[#allocation2 + $0x8] sm:$0xf]
    %v176 = vld [vmem:[#allocation2 + $0xc] sm:$0xf]
    %v177 = vld [vmem:[%s5] sm:$0x1]
    %v178 = vld [vmem:[#allocation5] sm:$0xf]
    %v179 = vld [vmem:[#allocation5 + $0x4] sm:$0xf]
    %v180 = vld [vmem:[#allocation5 + $0x8] sm:$0xf]
    %v181 = vld [vmem:[#allocation5 + $0xc] sm:$0xf]
    %v182 = vld [vmem:[%s7] sm:$0x1]
    %v183 = vld [vmem:[#allocation7] sm:$0xf]
    %v184 = vld [vmem:[#allocation7 + $0x4] sm:$0xf]
    %v185 = vld [vmem:[#allocation7 + $0x8] sm:$0xf]
    %v186 = vld [vmem:[#allocation7 + $0xc] sm:$0xf]
    %v187 = vld [vmem:[%s9] sm:$0x1]
    %v188 = vld [vmem:[#allocation8] sm:$0xf]
    %v189 = vld [vmem:[#allocation8 + $0x4] sm:$0xf]
    %v190 = vld [vmem:[#allocation8 + $0x8] sm:$0xf]
    %v191 = vld [vmem:[#allocation8 + $0xc] sm:$0xf]
    %v192 = vld [vmem:[%s11] sm:$0x1]
    %v193 = vld [vmem:[#allocation10] sm:$0xf]
    %v194 = vld [vmem:[#allocation10 + $0x4] sm:$0xf]
    %v195 = vld [vmem:[#allocation10 + $0x8] sm:$0xf]
    %v196 = vld [vmem:[#allocation10 + $0xc] sm:$0xf]
    %v197 = vld [vmem:[%s13] sm:$0x1]
    %v198 = vld [vmem:[#allocation11] sm:$0xf]
    %v199 = vld [vmem:[#allocation11 + $0x4] sm:$0xf]
    %v200 = vld [vmem:[#allocation11 + $0x8] sm:$0xf]
    %v201 = vld [vmem:[#allocation11 + $0xc] sm:$0xf]
    %v202 = vld [vmem:[%s15] sm:$0x1]
    %v203 = vld [vmem:[%s16] sm:$0xf]
    %v204 = vld [vmem:[%s16 + $0x4] sm:$0xf]
    %v205 = vld [vmem:[%s16 + $0x8] sm:$0xf]
    %v206 = vld [vmem:[%s16 + $0xc] sm:$0xf]
    %v207 = vld [vmem:[%s16 + $0x10] sm:$0xf]
    %v208 = vld [vmem:[%s16 + $0x14] sm:$0xf]
    %v209 = vld [vmem:[%s16 + $0x18] sm:$0xf]
    %v210 = vld [vmem:[%s16 + $0x1c] sm:$0xf]
    %v211 = vld [vmem:[%s17] sm:$0x1]
    %v212 = vld [vmem:[%s18] sm:$0x1]
    %v213 = vld [vmem:[%s19] sm:$0x1]
    %v214 = vld [vmem:[%s20] sm:$0x1]
    %v215 = vld [vmem:[%s21] sm:$0x1]
    %v216 = vld [vmem:[%s22] sm:$0x1]
    %v217 = vld [vmem:[%s23] sm:$0x1]
    %v218 = vsub.f32 1.0, %v169
    %v219 = vsub.f32 1.0, %v170
    %vm220 = vcmp.eq.f32.partialorder %v218, 1.0
    %vm221 = vcmp.eq.f32.partialorder %v219, 1.0
    %v222 = vsel %vm220, -9.223372e+18, %v218
    %v223 = vsel %vm221, -9.223372e+18, %v219
    %v224 = vmul.f32 %v222, 0.35355338
    %v225 = vmul.f32 %v223, 0.35355338
    %v226 = vsub.f32 1.0, %v171
    %v227 = vsub.f32 1.0, %v172
    %vm228 = vcmp.eq.f32.partialorder %v226, 1.0
    %vm229 = vcmp.eq.f32.partialorder %v227, 1.0
    %v230 = vsel %vm228, -9.223372e+18, %v226
    %v231 = vsel %vm229, -9.223372e+18, %v227
    %v232 = vmul.f32 %v230, 0.35355338
    %v233 = vmul.f32 %v231, 0.35355338
    %v234 = vpack.c.bf16 %v166, %v165
    %v236 = vlaneseq
    %v237 = vshrl.u32 %v236, 7
    %v238 = vsub.s32 0, %v237
    %v239 = vrot.slane %v177, %v238
    %v245 = vunpack.c.l.b16 %v173
    %v246 = vunpack.c.l.b16 %v174
    %v247 = vunpack.c.l.b16 %v175
    %v248 = vunpack.c.l.b16 %v176
    %v249 = vpack.c.b16 %v246, %v245
    %v250 = vpack.c.b16 %v248, %v247
    %vm253 = vcmask 261120
    %v255 = vsel %vm253, %v234, 0
    %257 = vmatprep.subr.bf16.mxu0 0
    %258 = vmatpush1.bf16.msra.mxu0 0
    %259 = vmatprep.subr.bf16.mxu0 0
    %260 = vmatpush1.bf16.msra.mxu0 0
    %261 = vmatprep.subr.bf16.mxu0 0
    %262 = vmatpush1.bf16.msra.mxu0 0
    %263 = vmatprep.subr.bf16.mxu0 0
    %264 = vmatpush1.bf16.msra.mxu0 0
    %265 = vmatprep.subr.bf16.mxu0 0
    %266 = vmatpush1.bf16.msra.mxu0 0
    %267 = vmatprep.subr.bf16.mxu0 0
    %268 = vmatpush1.bf16.msra.mxu0 0
    %269 = vmatprep.subr.bf16.mxu0 0
    %270 = vmatpush1.bf16.msra.mxu0 %v250
    %271 = vmatprep.subr.bf16.mxu0 0
    %272 = vmatpush1.bf16.msra.mxu0 %v249
    %273 = vmatprep.subr.bf16.mxu0 0
    %274 = vmatpush2.bf16.msra.mxu0 0
    %275 = vmatprep.subr.bf16.mxu0 0
    %276 = vmatpush2.bf16.msra.mxu0 0
    %277 = vmatprep.subr.bf16.mxu0 0
    %278 = vmatpush2.bf16.msra.mxu0 0
    %279 = vmatprep.subr.bf16.mxu0 0
    %280 = vmatpush2.bf16.msra.mxu0 0
    %281 = vmatprep.subr.bf16.mxu0 0
    %282 = vmatpush2.bf16.msra.mxu0 0
    %283 = vmatprep.subr.bf16.mxu0 0
    %284 = vmatpush2.bf16.msra.mxu0 0
    %285 = vmatprep.subr.bf16.mxu0 0
    %286 = vmatpush2.bf16.msra.mxu0 0
    %287 = vmatprep.subr.bf16.mxu0 0
    %288 = vmatpush2.bf16.msra.mxu0 0
    %289 = vmatprep.mubr.bf16.mxu0 0
    %290 = vmatmul.mubr.bf16.gmra.mxu0 %v255
    %v291 = vpop.f32.mrf.mxu0
    %v292 = vadd.f32 %v239, %v291
    %v293 = vpop.f32.mrf.mxu0
    %v294 = vpop.f32.mrf.mxu0
    %v295 = vadd.f32 %v239, %v294
    %v296 = vpop.f32.mrf.mxu0
    %297 = vdwg.mxu0
    %v298 = vmul.f32 %v292, 0.35355338
    %v299 = vmul.f32 %v295, 0.35355338
    %302 = vrot.lane.b32.xlu0 %v298, 120
    %v303 = vpop.permute.xlu0 %302
    %304 = vrot.lane.b32.xlu0 %v299, 120
    %v305 = vpop.permute.xlu0 %304
    %308 = vrot.lane.b32.xlu0 %v298, 112
    %v309 = vpop.permute.xlu0 %308
    %310 = vrot.lane.b32.xlu0 %v299, 112
    %v311 = vpop.permute.xlu0 %310
    %314 = vrot.lane.b32.xlu0 %v298, 104
    %v315 = vpop.permute.xlu0 %314
    %316 = vrot.lane.b32.xlu0 %v299, 104
    %v317 = vpop.permute.xlu0 %316
    %v320 = vcombine.low %v298, %v309
    %v321 = vcombine.high %v298, %v309
    %v323 = vunpack.c.l.s4 1983009808
    %v324 = vunpack.c.0.s8 %v323
    %v325 = vlaneseq
    %v326 = vshrl.u32 %v325, 7
    %v327 = vsub.s32 %v324, %v326
    %v328 = vrot.slane %v320, %v327
    %v330 = vunpack.c.l.s4 1983009808
    %v331 = vunpack.c.0.s8 %v330
    %v332 = vlaneseq
    %v333 = vshrl.u32 %v332, 7
    %v334 = vsub.s32 %v331, %v333
    %v335 = vrot.slane %v321, %v334
    %v336 = vcombine.low %v303, %v315
    %v337 = vcombine.high %v303, %v315
    %v339 = vunpack.c.l.s4 1983009808
    %v340 = vunpack.c.0.s8 %v339
    %v341 = vlaneseq
    %v342 = vshrl.u32 %v341, 7
    %v343 = vsub.s32 %v340, %v342
    %v344 = vrot.slane %v336, %v343
    %v346 = vunpack.c.l.s4 1983009808
    %v347 = vunpack.c.0.s8 %v346
    %v348 = vlaneseq
    %v349 = vshrl.u32 %v348, 7
    %v350 = vsub.s32 %v347, %v349
    %v351 = vrot.slane %v337, %v350
    %v352 = vcombine.low %v328, %v344
    %v353 = vcombine.high %v328, %v344
    %v355 = vunpack.c.l.s4 1934713408
    %v356 = vunpack.c.0.s8 %v355
    %v357 = vlaneseq
    %v358 = vshrl.u32 %v357, 7
    %v359 = vsub.s32 %v356, %v358
    %v360 = vrot.slane %v352, %v359
    %v362 = vunpack.c.l.s4 1934713408
    %v363 = vunpack.c.0.s8 %v362
    %v364 = vlaneseq
    %v365 = vshrl.u32 %v364, 7
    %v366 = vsub.s32 %v363, %v365
    %v367 = vrot.slane %v353, %v366
    %v368 = vcombine.low %v335, %v351
    %v369 = vcombine.high %v335, %v351
    %v371 = vunpack.c.l.s4 1934713408
    %v372 = vunpack.c.0.s8 %v371
    %v373 = vlaneseq
    %v374 = vshrl.u32 %v373, 7
    %v375 = vsub.s32 %v372, %v374
    %v376 = vrot.slane %v368, %v375
    %v378 = vunpack.c.l.s4 1934713408
    %v379 = vunpack.c.0.s8 %v378
    %v380 = vlaneseq
    %v381 = vshrl.u32 %v380, 7
    %v382 = vsub.s32 %v379, %v381
    %v383 = vrot.slane %v369, %v382
    %v384 = vcombine.high %v360, 0.0
    %v385 = vcombine.high %v367, 0.0
    %v386 = vcombine.high %v376, 0.0
    %v387 = vcombine.high %v383, 0.0
    %v388 = vcombine.low %v299, %v311
    %v389 = vcombine.high %v299, %v311
    %v391 = vunpack.c.l.s4 1983009808
    %v392 = vunpack.c.0.s8 %v391
    %v393 = vlaneseq
    %v394 = vshrl.u32 %v393, 7
    %v395 = vsub.s32 %v392, %v394
    %v396 = vrot.slane %v388, %v395
    %v398 = vunpack.c.l.s4 1983009808
    %v399 = vunpack.c.0.s8 %v398
    %v400 = vlaneseq
    %v401 = vshrl.u32 %v400, 7
    %v402 = vsub.s32 %v399, %v401
    %v403 = vrot.slane %v389, %v402
    %v404 = vcombine.low %v305, %v317
    %v405 = vcombine.high %v305, %v317
    %v407 = vunpack.c.l.s4 1983009808
    %v408 = vunpack.c.0.s8 %v407
    %v409 = vlaneseq
    %v410 = vshrl.u32 %v409, 7
    %v411 = vsub.s32 %v408, %v410
    %v412 = vrot.slane %v404, %v411
    %v414 = vunpack.c.l.s4 1983009808
    %v415 = vunpack.c.0.s8 %v414
    %v416 = vlaneseq
    %v417 = vshrl.u32 %v416, 7
    %v418 = vsub.s32 %v415, %v417
    %v419 = vrot.slane %v405, %v418
    %v420 = vcombine.low %v396, %v412
    %v421 = vcombine.high %v396, %v412
    %v423 = vunpack.c.l.s4 1934713408
    %v424 = vunpack.c.0.s8 %v423
    %v425 = vlaneseq
    %v426 = vshrl.u32 %v425, 7
    %v427 = vsub.s32 %v424, %v426
    %v428 = vrot.slane %v420, %v427
    %v430 = vunpack.c.l.s4 1934713408
    %v431 = vunpack.c.0.s8 %v430
    %v432 = vlaneseq
    %v433 = vshrl.u32 %v432, 7
    %v434 = vsub.s32 %v431, %v433
    %v435 = vrot.slane %v421, %v434
    %v436 = vcombine.low %v403, %v419
    %v437 = vcombine.high %v403, %v419
    %v439 = vunpack.c.l.s4 1934713408
    %v440 = vunpack.c.0.s8 %v439
    %v441 = vlaneseq
    %v442 = vshrl.u32 %v441, 7
    %v443 = vsub.s32 %v440, %v442
    %v444 = vrot.slane %v436, %v443
    %v446 = vunpack.c.l.s4 1934713408
    %v447 = vunpack.c.0.s8 %v446
    %v448 = vlaneseq
    %v449 = vshrl.u32 %v448, 7
    %v450 = vsub.s32 %v447, %v449
    %v451 = vrot.slane %v437, %v450
    %v452 = vcombine.high %v428, 0.0
    %v453 = vcombine.high %v435, 0.0
    %v454 = vcombine.high %v444, 0.0
    %v455 = vcombine.high %v451, 0.0
    %v456 = vcombine.low %v360, %v367
    %v458 = vunpack.c.l.s4 1983009808
    %v459 = vunpack.c.0.s8 %v458
    %v460 = vlaneseq
    %v461 = vshrl.u32 %v460, 7
    %v462 = vsub.s32 %v459, %v461
    %v463 = vrot.slane %v456, %v462
    %v464 = vcombine.low %v384, %v385
    %v466 = vunpack.c.l.s4 1983009808
    %v467 = vunpack.c.0.s8 %v466
    %v468 = vlaneseq
    %v469 = vshrl.u32 %v468, 7
    %v470 = vsub.s32 %v467, %v469
    %v471 = vrot.slane %v464, %v470
    %v472 = vcombine.low %v376, %v383
    %v474 = vunpack.c.l.s4 1983009808
    %v475 = vunpack.c.0.s8 %v474
    %v476 = vlaneseq
    %v477 = vshrl.u32 %v476, 7
    %v478 = vsub.s32 %v475, %v477
    %v479 = vrot.slane %v472, %v478
    %v480 = vcombine.low %v386, %v387
    %v482 = vunpack.c.l.s4 1983009808
    %v483 = vunpack.c.0.s8 %v482
    %v484 = vlaneseq
    %v485 = vshrl.u32 %v484, 7
    %v486 = vsub.s32 %v483, %v485
    %v487 = vrot.slane %v480, %v486
    %v488 = vcombine.low %v463, %v471
    %v489 = vcombine.high %v463, %v471
    %v491 = vunpack.c.l.s4 1934713408
    %v492 = vunpack.c.0.s8 %v491
    %v493 = vlaneseq
    %v494 = vshrl.u32 %v493, 7
    %v495 = vsub.s32 %v492, %v494
    %v496 = vrot.slane %v488, %v495
    %v498 = vunpack.c.l.s4 1934713408
    %v499 = vunpack.c.0.s8 %v498
    %v500 = vlaneseq
    %v501 = vshrl.u32 %v500, 7
    %v502 = vsub.s32 %v499, %v501
    %v503 = vrot.slane %v489, %v502
    %v504 = vcombine.low %v479, %v487
    %v505 = vcombine.high %v479, %v487
    %v507 = vunpack.c.l.s4 1934713408
    %v508 = vunpack.c.0.s8 %v507
    %v509 = vlaneseq
    %v510 = vshrl.u32 %v509, 7
    %v511 = vsub.s32 %v508, %v510
    %v512 = vrot.slane %v504, %v511
    %v514 = vunpack.c.l.s4 1934713408
    %v515 = vunpack.c.0.s8 %v514
    %v516 = vlaneseq
    %v517 = vshrl.u32 %v516, 7
    %v518 = vsub.s32 %v515, %v517
    %v519 = vrot.slane %v505, %v518
    %v520 = vcombine.low %v496, %v512
    %v521 = vcombine.high %v496, %v512
    %v522 = vcombine.low %v503, %v519
    %v523 = vcombine.high %v503, %v519
    %v524 = vcombine.low %v428, %v435
    %v526 = vunpack.c.l.s4 1983009808
    %v527 = vunpack.c.0.s8 %v526
    %v528 = vlaneseq
    %v529 = vshrl.u32 %v528, 7
    %v530 = vsub.s32 %v527, %v529
    %v531 = vrot.slane %v524, %v530
    %v532 = vcombine.low %v452, %v453
    %v534 = vunpack.c.l.s4 1983009808
    %v535 = vunpack.c.0.s8 %v534
    %v536 = vlaneseq
    %v537 = vshrl.u32 %v536, 7
    %v538 = vsub.s32 %v535, %v537
    %v539 = vrot.slane %v532, %v538
    %v540 = vcombine.low %v444, %v451
    %v542 = vunpack.c.l.s4 1983009808
    %v543 = vunpack.c.0.s8 %v542
    %v544 = vlaneseq
    %v545 = vshrl.u32 %v544, 7
    %v546 = vsub.s32 %v543, %v545
    %v547 = vrot.slane %v540, %v546
    %v548 = vcombine.low %v454, %v455
    %v550 = vunpack.c.l.s4 1983009808
    %v551 = vunpack.c.0.s8 %v550
    %v552 = vlaneseq
    %v553 = vshrl.u32 %v552, 7
    %v554 = vsub.s32 %v551, %v553
    %v555 = vrot.slane %v548, %v554
    %v556 = vcombine.low %v531, %v539
    %v557 = vcombine.high %v531, %v539
    %v559 = vunpack.c.l.s4 1934713408
    %v560 = vunpack.c.0.s8 %v559
    %v561 = vlaneseq
    %v562 = vshrl.u32 %v561, 7
    %v563 = vsub.s32 %v560, %v562
    %v564 = vrot.slane %v556, %v563
    %v566 = vunpack.c.l.s4 1934713408
    %v567 = vunpack.c.0.s8 %v566
    %v568 = vlaneseq
    %v569 = vshrl.u32 %v568, 7
    %v570 = vsub.s32 %v567, %v569
    %v571 = vrot.slane %v557, %v570
    %v572 = vcombine.low %v547, %v555
    %v573 = vcombine.high %v547, %v555
    %v575 = vunpack.c.l.s4 1934713408
    %v576 = vunpack.c.0.s8 %v575
    %v577 = vlaneseq
    %v578 = vshrl.u32 %v577, 7
    %v579 = vsub.s32 %v576, %v578
    %v580 = vrot.slane %v572, %v579
    %v582 = vunpack.c.l.s4 1934713408
    %v583 = vunpack.c.0.s8 %v582
    %v584 = vlaneseq
    %v585 = vshrl.u32 %v584, 7
    %v586 = vsub.s32 %v583, %v585
    %v587 = vrot.slane %v573, %v586
    %v588 = vcombine.low %v564, %v580
    %v589 = vcombine.high %v564, %v580
    %v590 = vcombine.low %v571, %v587
    %v591 = vcombine.high %v571, %v587
    %v592 = vpack.c.bf16 %v520, %v520
    %v593 = vpack.c.bf16 %v521, %v521
    %v594 = vpack.c.bf16 %v522, %v522
    %v595 = vpack.c.bf16 %v523, %v523
    %v596 = vpack.c.bf16 %v588, %v588
    %v597 = vpack.c.bf16 %v589, %v589
    %v598 = vpack.c.bf16 %v590, %v590
    %v599 = vpack.c.bf16 %v591, %v591
    %602 = vrot.lane.b32.xlu0 %v292, 120
    %v603 = vpop.permute.xlu0 %602
    %604 = vrot.lane.b32.xlu0 %v295, 120
    %v605 = vpop.permute.xlu0 %604
    %606 = vrot.lane.b32.xlu0 %v292, 112
    %v607 = vpop.permute.xlu0 %606
    %608 = vrot.lane.b32.xlu0 %v295, 112
    %v609 = vpop.permute.xlu0 %608
    %610 = vrot.lane.b32.xlu0 %v292, 104
    %v611 = vpop.permute.xlu0 %610
    %612 = vrot.lane.b32.xlu0 %v295, 104
    %v613 = vpop.permute.xlu0 %612
    %614 = vrot.lane.b32.xlu0 %v292, 96
    %v615 = vpop.permute.xlu0 %614
    %616 = vrot.lane.b32.xlu0 %v295, 96
    %v617 = vpop.permute.xlu0 %616
    %618 = vrot.lane.b32.xlu0 %v603, 96
    %v619 = vpop.permute.xlu0 %618
    %620 = vrot.lane.b32.xlu0 %v605, 96
    %v621 = vpop.permute.xlu0 %620
    %622 = vrot.lane.b32.xlu0 %v607, 96
    %v623 = vpop.permute.xlu0 %622
    %624 = vrot.lane.b32.xlu0 %v609, 96
    %v625 = vpop.permute.xlu0 %624
    %626 = vrot.lane.b32.xlu0 %v611, 96
    %v627 = vpop.permute.xlu0 %626
    %628 = vrot.lane.b32.xlu0 %v613, 96
    %v629 = vpop.permute.xlu0 %628
    %v638 = vcombine.low %v615, %v623
    %v639 = vcombine.high %v615, %v623
    %v641 = vunpack.c.l.s4 1983009808
    %v642 = vunpack.c.0.s8 %v641
    %v643 = vlaneseq
    %v644 = vshrl.u32 %v643, 7
    %v645 = vsub.s32 %v642, %v644
    %v646 = vrot.slane %v638, %v645
    %v648 = vunpack.c.l.s4 1983009808
    %v649 = vunpack.c.0.s8 %v648
    %v650 = vlaneseq
    %v651 = vshrl.u32 %v650, 7
    %v652 = vsub.s32 %v649, %v651
    %v653 = vrot.slane %v639, %v652
    %v654 = vcombine.low %v619, %v627
    %v655 = vcombine.high %v619, %v627
    %v657 = vunpack.c.l.s4 1983009808
    %v658 = vunpack.c.0.s8 %v657
    %v659 = vlaneseq
    %v660 = vshrl.u32 %v659, 7
    %v661 = vsub.s32 %v658, %v660
    %v662 = vrot.slane %v654, %v661
    %v664 = vunpack.c.l.s4 1983009808
    %v665 = vunpack.c.0.s8 %v664
    %v666 = vlaneseq
    %v667 = vshrl.u32 %v666, 7
    %v668 = vsub.s32 %v665, %v667
    %v669 = vrot.slane %v655, %v668
    %v670 = vcombine.low %v646, %v662
    %v671 = vcombine.high %v646, %v662
    %v673 = vunpack.c.l.s4 1934713408
    %v674 = vunpack.c.0.s8 %v673
    %v675 = vlaneseq
    %v676 = vshrl.u32 %v675, 7
    %v677 = vsub.s32 %v674, %v676
    %v678 = vrot.slane %v670, %v677
    %v680 = vunpack.c.l.s4 1934713408
    %v681 = vunpack.c.0.s8 %v680
    %v682 = vlaneseq
    %v683 = vshrl.u32 %v682, 7
    %v684 = vsub.s32 %v681, %v683
    %v685 = vrot.slane %v671, %v684
    %v686 = vcombine.low %v653, %v669
    %v687 = vcombine.high %v653, %v669
    %v689 = vunpack.c.l.s4 1934713408
    %v690 = vunpack.c.0.s8 %v689
    %v691 = vlaneseq
    %v692 = vshrl.u32 %v691, 7
    %v693 = vsub.s32 %v690, %v692
    %v694 = vrot.slane %v686, %v693
    %v696 = vunpack.c.l.s4 1934713408
    %v697 = vunpack.c.0.s8 %v696
    %v698 = vlaneseq
    %v699 = vshrl.u32 %v698, 7
    %v700 = vsub.s32 %v697, %v699
    %v701 = vrot.slane %v687, %v700
    %v702 = vcombine.high %v678, 0.0
    %v703 = vcombine.high %v685, 0.0
    %v704 = vcombine.high %v694, 0.0
    %v705 = vcombine.high %v701, 0.0
    %v706 = vcombine.low %v617, %v625
    %v707 = vcombine.high %v617, %v625
    %v709 = vunpack.c.l.s4 1983009808
    %v710 = vunpack.c.0.s8 %v709
    %v711 = vlaneseq
    %v712 = vshrl.u32 %v711, 7
    %v713 = vsub.s32 %v710, %v712
    %v714 = vrot.slane %v706, %v713
    %v716 = vunpack.c.l.s4 1983009808
    %v717 = vunpack.c.0.s8 %v716
    %v718 = vlaneseq
    %v719 = vshrl.u32 %v718, 7
    %v720 = vsub.s32 %v717, %v719
    %v721 = vrot.slane %v707, %v720
    %v722 = vcombine.low %v621, %v629
    %v723 = vcombine.high %v621, %v629
    %v725 = vunpack.c.l.s4 1983009808
    %v726 = vunpack.c.0.s8 %v725
    %v727 = vlaneseq
    %v728 = vshrl.u32 %v727, 7
    %v729 = vsub.s32 %v726, %v728
    %v730 = vrot.slane %v722, %v729
    %v732 = vunpack.c.l.s4 1983009808
    %v733 = vunpack.c.0.s8 %v732
    %v734 = vlaneseq
    %v735 = vshrl.u32 %v734, 7
    %v736 = vsub.s32 %v733, %v735
    %v737 = vrot.slane %v723, %v736
    %v738 = vcombine.low %v714, %v730
    %v739 = vcombine.high %v714, %v730
    %v741 = vunpack.c.l.s4 1934713408
    %v742 = vunpack.c.0.s8 %v741
    %v743 = vlaneseq
    %v744 = vshrl.u32 %v743, 7
    %v745 = vsub.s32 %v742, %v744
    %v746 = vrot.slane %v738, %v745
    %v748 = vunpack.c.l.s4 1934713408
    %v749 = vunpack.c.0.s8 %v748
    %v750 = vlaneseq
    %v751 = vshrl.u32 %v750, 7
    %v752 = vsub.s32 %v749, %v751
    %v753 = vrot.slane %v739, %v752
    %v754 = vcombine.low %v721, %v737
    %v755 = vcombine.high %v721, %v737
    %v757 = vunpack.c.l.s4 1934713408
    %v758 = vunpack.c.0.s8 %v757
    %v759 = vlaneseq
    %v760 = vshrl.u32 %v759, 7
    %v761 = vsub.s32 %v758, %v760
    %v762 = vrot.slane %v754, %v761
    %v764 = vunpack.c.l.s4 1934713408
    %v765 = vunpack.c.0.s8 %v764
    %v766 = vlaneseq
    %v767 = vshrl.u32 %v766, 7
    %v768 = vsub.s32 %v765, %v767
    %v769 = vrot.slane %v755, %v768
    %v770 = vcombine.high %v746, 0.0
    %v771 = vcombine.high %v753, 0.0
    %v772 = vcombine.high %v762, 0.0
    %v773 = vcombine.high %v769, 0.0
    %v774 = vcombine.low %v678, %v685
    %v776 = vunpack.c.l.s4 1983009808
    %v777 = vunpack.c.0.s8 %v776
    %v778 = vlaneseq
    %v779 = vshrl.u32 %v778, 7
    %v780 = vsub.s32 %v777, %v779
    %v781 = vrot.slane %v774, %v780
    %v782 = vcombine.low %v702, %v703
    %v784 = vunpack.c.l.s4 1983009808
    %v785 = vunpack.c.0.s8 %v784
    %v786 = vlaneseq
    %v787 = vshrl.u32 %v786, 7
    %v788 = vsub.s32 %v785, %v787
    %v789 = vrot.slane %v782, %v788
    %v790 = vcombine.low %v694, %v701
    %v792 = vunpack.c.l.s4 1983009808
    %v793 = vunpack.c.0.s8 %v792
    %v794 = vlaneseq
    %v795 = vshrl.u32 %v794, 7
    %v796 = vsub.s32 %v793, %v795
    %v797 = vrot.slane %v790, %v796
    %v798 = vcombine.low %v704, %v705
    %v800 = vunpack.c.l.s4 1983009808
    %v801 = vunpack.c.0.s8 %v800
    %v802 = vlaneseq
    %v803 = vshrl.u32 %v802, 7
    %v804 = vsub.s32 %v801, %v803
    %v805 = vrot.slane %v798, %v804
    %v806 = vcombine.low %v781, %v789
    %v807 = vcombine.high %v781, %v789
    %v809 = vunpack.c.l.s4 1934713408
    %v810 = vunpack.c.0.s8 %v809
    %v811 = vlaneseq
    %v812 = vshrl.u32 %v811, 7
    %v813 = vsub.s32 %v810, %v812
    %v814 = vrot.slane %v806, %v813
    %v816 = vunpack.c.l.s4 1934713408
    %v817 = vunpack.c.0.s8 %v816
    %v818 = vlaneseq
    %v819 = vshrl.u32 %v818, 7
    %v820 = vsub.s32 %v817, %v819
    %v821 = vrot.slane %v807, %v820
    %v822 = vcombine.low %v797, %v805
    %v823 = vcombine.high %v797, %v805
    %v825 = vunpack.c.l.s4 1934713408
    %v826 = vunpack.c.0.s8 %v825
    %v827 = vlaneseq
    %v828 = vshrl.u32 %v827, 7
    %v829 = vsub.s32 %v826, %v828
    %v830 = vrot.slane %v822, %v829
    %v832 = vunpack.c.l.s4 1934713408
    %v833 = vunpack.c.0.s8 %v832
    %v834 = vlaneseq
    %v835 = vshrl.u32 %v834, 7
    %v836 = vsub.s32 %v833, %v835
    %v837 = vrot.slane %v823, %v836
    %v838 = vcombine.low %v814, %v830
    %v839 = vcombine.high %v814, %v830
    %v840 = vcombine.low %v821, %v837
    %v841 = vcombine.high %v821, %v837
    %v842 = vcombine.low %v746, %v753
    %v844 = vunpack.c.l.s4 1983009808
    %v845 = vunpack.c.0.s8 %v844
    %v846 = vlaneseq
    %v847 = vshrl.u32 %v846, 7
    %v848 = vsub.s32 %v845, %v847
    %v849 = vrot.slane %v842, %v848
    %v850 = vcombine.low %v770, %v771
    %v852 = vunpack.c.l.s4 1983009808
    %v853 = vunpack.c.0.s8 %v852
    %v854 = vlaneseq
    %v855 = vshrl.u32 %v854, 7
    %v856 = vsub.s32 %v853, %v855
    %v857 = vrot.slane %v850, %v856
    %v858 = vcombine.low %v762, %v769
    %v860 = vunpack.c.l.s4 1983009808
    %v861 = vunpack.c.0.s8 %v860
    %v862 = vlaneseq
    %v863 = vshrl.u32 %v862, 7
    %v864 = vsub.s32 %v861, %v863
    %v865 = vrot.slane %v858, %v864
    %v866 = vcombine.low %v772, %v773
    %v868 = vunpack.c.l.s4 1983009808
    %v869 = vunpack.c.0.s8 %v868
    %v870 = vlaneseq
    %v871 = vshrl.u32 %v870, 7
    %v872 = vsub.s32 %v869, %v871
    %v873 = vrot.slane %v866, %v872
    %v874 = vcombine.low %v849, %v857
    %v875 = vcombine.high %v849, %v857
    %v877 = vunpack.c.l.s4 1934713408
    %v878 = vunpack.c.0.s8 %v877
    %v879 = vlaneseq
    %v880 = vshrl.u32 %v879, 7
    %v881 = vsub.s32 %v878, %v880
    %v882 = vrot.slane %v874, %v881
    %v884 = vunpack.c.l.s4 1934713408
    %v885 = vunpack.c.0.s8 %v884
    %v886 = vlaneseq
    %v887 = vshrl.u32 %v886, 7
    %v888 = vsub.s32 %v885, %v887
    %v889 = vrot.slane %v875, %v888
    %v890 = vcombine.low %v865, %v873
    %v891 = vcombine.high %v865, %v873
    %v893 = vunpack.c.l.s4 1934713408
    %v894 = vunpack.c.0.s8 %v893
    %v895 = vlaneseq
    %v896 = vshrl.u32 %v895, 7
    %v897 = vsub.s32 %v894, %v896
    %v898 = vrot.slane %v890, %v897
    %v900 = vunpack.c.l.s4 1934713408
    %v901 = vunpack.c.0.s8 %v900
    %v902 = vlaneseq
    %v903 = vshrl.u32 %v902, 7
    %v904 = vsub.s32 %v901, %v903
    %v905 = vrot.slane %v891, %v904
    %v906 = vcombine.low %v882, %v898
    %v907 = vcombine.high %v882, %v898
    %v908 = vcombine.low %v889, %v905
    %v909 = vcombine.high %v889, %v905
    %v910 = vpack.c.bf16 %v838, %v838
    %v911 = vpack.c.bf16 %v839, %v839
    %v912 = vpack.c.bf16 %v840, %v840
    %v913 = vpack.c.bf16 %v841, %v841
    %v914 = vpack.c.bf16 %v906, %v906
    %v915 = vpack.c.bf16 %v907, %v907
    %v916 = vpack.c.bf16 %v908, %v908
    %v917 = vpack.c.bf16 %v909, %v909
    %918 = vrot.lane.b32.xlu0 %v292, 64
    %v919 = vpop.permute.xlu0 %918
    %920 = vrot.lane.b32.xlu0 %v295, 64
    %v921 = vpop.permute.xlu0 %920
    %922 = vrot.lane.b32.xlu0 %v603, 64
    %v923 = vpop.permute.xlu0 %922
    %924 = vrot.lane.b32.xlu0 %v605, 64
    %v925 = vpop.permute.xlu0 %924
    %926 = vrot.lane.b32.xlu0 %v607, 64
    %v927 = vpop.permute.xlu0 %926
    %928 = vrot.lane.b32.xlu0 %v609, 64
    %v929 = vpop.permute.xlu0 %928
    %930 = vrot.lane.b32.xlu0 %v611, 64
    %v931 = vpop.permute.xlu0 %930
    %932 = vrot.lane.b32.xlu0 %v613, 64
    %v933 = vpop.permute.xlu0 %932
    %v942 = vcombine.low %v919, %v927
    %v943 = vcombine.high %v919, %v927
    %v945 = vunpack.c.l.s4 1983009808
    %v946 = vunpack.c.0.s8 %v945
    %v947 = vlaneseq
    %v948 = vshrl.u32 %v947, 7
    %v949 = vsub.s32 %v946, %v948
    %v950 = vrot.slane %v942, %v949
    %v952 = vunpack.c.l.s4 1983009808
    %v953 = vunpack.c.0.s8 %v952
    %v954 = vlaneseq
    %v955 = vshrl.u32 %v954, 7
    %v956 = vsub.s32 %v953, %v955
    %v957 = vrot.slane %v943, %v956
    %v958 = vcombine.low %v923, %v931
    %v959 = vcombine.high %v923, %v931
    %v961 = vunpack.c.l.s4 1983009808
    %v962 = vunpack.c.0.s8 %v961
    %v963 = vlaneseq
    %v964 = vshrl.u32 %v963, 7
    %v965 = vsub.s32 %v962, %v964
    %v966 = vrot.slane %v958, %v965
    %v968 = vunpack.c.l.s4 1983009808
    %v969 = vunpack.c.0.s8 %v968
    %v970 = vlaneseq
    %v971 = vshrl.u32 %v970, 7
    %v972 = vsub.s32 %v969, %v971
    %v973 = vrot.slane %v959, %v972
    %v974 = vcombine.low %v950, %v966
    %v975 = vcombine.high %v950, %v966
    %v977 = vunpack.c.l.s4 1934713408
    %v978 = vunpack.c.0.s8 %v977
    %v979 = vlaneseq
    %v980 = vshrl.u32 %v979, 7
    %v981 = vsub.s32 %v978, %v980
    %v982 = vrot.slane %v974, %v981
    %v984 = vunpack.c.l.s4 1934713408
    %v985 = vunpack.c.0.s8 %v984
    %v986 = vlaneseq
    %v987 = vshrl.u32 %v986, 7
    %v988 = vsub.s32 %v985, %v987
    %v989 = vrot.slane %v975, %v988
    %v990 = vcombine.low %v957, %v973
    %v991 = vcombine.high %v957, %v973
    %v993 = vunpack.c.l.s4 1934713408
    %v994 = vunpack.c.0.s8 %v993
    %v995 = vlaneseq
    %v996 = vshrl.u32 %v995, 7
    %v997 = vsub.s32 %v994, %v996
    %v998 = vrot.slane %v990, %v997
    %v1000 = vunpack.c.l.s4 1934713408
    %v1001 = vunpack.c.0.s8 %v1000
    %v1002 = vlaneseq
    %v1003 = vshrl.u32 %v1002, 7
    %v1004 = vsub.s32 %v1001, %v1003
    %v1005 = vrot.slane %v991, %v1004
    %v1006 = vcombine.high %v982, 0.0
    %v1007 = vcombine.high %v989, 0.0
    %v1008 = vcombine.high %v998, 0.0
    %v1009 = vcombine.high %v1005, 0.0
    %v1010 = vcombine.low %v921, %v929
    %v1011 = vcombine.high %v921, %v929
    %v1013 = vunpack.c.l.s4 1983009808
    %v1014 = vunpack.c.0.s8 %v1013
    %v1015 = vlaneseq
    %v1016 = vshrl.u32 %v1015, 7
    %v1017 = vsub.s32 %v1014, %v1016
    %v1018 = vrot.slane %v1010, %v1017
    %v1020 = vunpack.c.l.s4 1983009808
    %v1021 = vunpack.c.0.s8 %v1020
    %v1022 = vlaneseq
    %v1023 = vshrl.u32 %v1022, 7
    %v1024 = vsub.s32 %v1021, %v1023
    %v1025 = vrot.slane %v1011, %v1024
    %v1026 = vcombine.low %v925, %v933
    %v1027 = vcombine.high %v925, %v933
    %v1029 = vunpack.c.l.s4 1983009808
    %v1030 = vunpack.c.0.s8 %v1029
    %v1031 = vlaneseq
    %v1032 = vshrl.u32 %v1031, 7
    %v1033 = vsub.s32 %v1030, %v1032
    %v1034 = vrot.slane %v1026, %v1033
    %v1036 = vunpack.c.l.s4 1983009808
    %v1037 = vunpack.c.0.s8 %v1036
    %v1038 = vlaneseq
    %v1039 = vshrl.u32 %v1038, 7
    %v1040 = vsub.s32 %v1037, %v1039
    %v1041 = vrot.slane %v1027, %v1040
    %v1042 = vcombine.low %v1018, %v1034
    %v1043 = vcombine.high %v1018, %v1034
    %v1045 = vunpack.c.l.s4 1934713408
    %v1046 = vunpack.c.0.s8 %v1045
    %v1047 = vlaneseq
    %v1048 = vshrl.u32 %v1047, 7
    %v1049 = vsub.s32 %v1046, %v1048
    %v1050 = vrot.slane %v1042, %v1049
    %v1052 = vunpack.c.l.s4 1934713408
    %v1053 = vunpack.c.0.s8 %v1052
    %v1054 = vlaneseq
    %v1055 = vshrl.u32 %v1054, 7
    %v1056 = vsub.s32 %v1053, %v1055
    %v1057 = vrot.slane %v1043, %v1056
    %v1058 = vcombine.low %v1025, %v1041
    %v1059 = vcombine.high %v1025, %v1041
    %v1061 = vunpack.c.l.s4 1934713408
    %v1062 = vunpack.c.0.s8 %v1061
    %v1063 = vlaneseq
    %v1064 = vshrl.u32 %v1063, 7
    %v1065 = vsub.s32 %v1062, %v1064
    %v1066 = vrot.slane %v1058, %v1065
    %v1068 = vunpack.c.l.s4 1934713408
    %v1069 = vunpack.c.0.s8 %v1068
    %v1070 = vlaneseq
    %v1071 = vshrl.u32 %v1070, 7
    %v1072 = vsub.s32 %v1069, %v1071
    %v1073 = vrot.slane %v1059, %v1072
    %v1074 = vcombine.high %v1050, 0.0
    %v1075 = vcombine.high %v1057, 0.0
    %v1076 = vcombine.high %v1066, 0.0
    %v1077 = vcombine.high %v1073, 0.0
    %v1078 = vcombine.low %v982, %v989
    %v1080 = vunpack.c.l.s4 1983009808
    %v1081 = vunpack.c.0.s8 %v1080
    %v1082 = vlaneseq
    %v1083 = vshrl.u32 %v1082, 7
    %v1084 = vsub.s32 %v1081, %v1083
    %v1085 = vrot.slane %v1078, %v1084
    %v1086 = vcombine.low %v1006, %v1007
    %v1088 = vunpack.c.l.s4 1983009808
    %v1089 = vunpack.c.0.s8 %v1088
    %v1090 = vlaneseq
    %v1091 = vshrl.u32 %v1090, 7
    %v1092 = vsub.s32 %v1089, %v1091
    %v1093 = vrot.slane %v1086, %v1092
    %v1094 = vcombine.low %v998, %v1005
    %v1096 = vunpack.c.l.s4 1983009808
    %v1097 = vunpack.c.0.s8 %v1096
    %v1098 = vlaneseq
    %v1099 = vshrl.u32 %v1098, 7
    %v1100 = vsub.s32 %v1097, %v1099
    %v1101 = vrot.slane %v1094, %v1100
    %v1102 = vcombine.low %v1008, %v1009
    %v1104 = vunpack.c.l.s4 1983009808
    %v1105 = vunpack.c.0.s8 %v1104
    %v1106 = vlaneseq
    %v1107 = vshrl.u32 %v1106, 7
    %v1108 = vsub.s32 %v1105, %v1107
    %v1109 = vrot.slane %v1102, %v1108
    %v1110 = vcombine.low %v1085, %v1093
    %v1111 = vcombine.high %v1085, %v1093
    %v1113 = vunpack.c.l.s4 1934713408
    %v1114 = vunpack.c.0.s8 %v1113
    %v1115 = vlaneseq
    %v1116 = vshrl.u32 %v1115, 7
    %v1117 = vsub.s32 %v1114, %v1116
    %v1118 = vrot.slane %v1110, %v1117
    %v1120 = vunpack.c.l.s4 1934713408
    %v1121 = vunpack.c.0.s8 %v1120
    %v1122 = vlaneseq
    %v1123 = vshrl.u32 %v1122, 7
    %v1124 = vsub.s32 %v1121, %v1123
    %v1125 = vrot.slane %v1111, %v1124
    %v1126 = vcombine.low %v1101, %v1109
    %v1127 = vcombine.high %v1101, %v1109
    %v1129 = vunpack.c.l.s4 1934713408
    %v1130 = vunpack.c.0.s8 %v1129
    %v1131 = vlaneseq
    %v1132 = vshrl.u32 %v1131, 7
    %v1133 = vsub.s32 %v1130, %v1132
    %v1134 = vrot.slane %v1126, %v1133
    %v1136 = vunpack.c.l.s4 1934713408
    %v1137 = vunpack.c.0.s8 %v1136
    %v1138 = vlaneseq
    %v1139 = vshrl.u32 %v1138, 7
    %v1140 = vsub.s32 %v1137, %v1139
    %v1141 = vrot.slane %v1127, %v1140
    %v1142 = vcombine.low %v1118, %v1134
    %v1143 = vcombine.high %v1118, %v1134
    %v1144 = vcombine.low %v1125, %v1141
    %v1145 = vcombine.high %v1125, %v1141
    %v1146 = vcombine.low %v1050, %v1057
    %v1148 = vunpack.c.l.s4 1983009808
    %v1149 = vunpack.c.0.s8 %v1148
    %v1150 = vlaneseq
    %v1151 = vshrl.u32 %v1150, 7
    %v1152 = vsub.s32 %v1149, %v1151
    %v1153 = vrot.slane %v1146, %v1152
    %v1154 = vcombine.low %v1074, %v1075
    %v1156 = vunpack.c.l.s4 1983009808
    %v1157 = vunpack.c.0.s8 %v1156
    %v1158 = vlaneseq
    %v1159 = vshrl.u32 %v1158, 7
    %v1160 = vsub.s32 %v1157, %v1159
    %v1161 = vrot.slane %v1154, %v1160
    %v1162 = vcombine.low %v1066, %v1073
    %v1164 = vunpack.c.l.s4 1983009808
    %v1165 = vunpack.c.0.s8 %v1164
    %v1166 = vlaneseq
    %v1167 = vshrl.u32 %v1166, 7
    %v1168 = vsub.s32 %v1165, %v1167
    %v1169 = vrot.slane %v1162, %v1168
    %v1170 = vcombine.low %v1076, %v1077
    %v1172 = vunpack.c.l.s4 1983009808
    %v1173 = vunpack.c.0.s8 %v1172
    %v1174 = vlaneseq
    %v1175 = vshrl.u32 %v1174, 7
    %v1176 = vsub.s32 %v1173, %v1175
    %v1177 = vrot.slane %v1170, %v1176
    %v1178 = vcombine.low %v1153, %v1161
    %v1179 = vcombine.high %v1153, %v1161
    %v1181 = vunpack.c.l.s4 1934713408
    %v1182 = vunpack.c.0.s8 %v1181
    %v1183 = vlaneseq
    %v1184 = vshrl.u32 %v1183, 7
    %v1185 = vsub.s32 %v1182, %v1184
    %v1186 = vrot.slane %v1178, %v1185
    %v1188 = vunpack.c.l.s4 1934713408
    %v1189 = vunpack.c.0.s8 %v1188
    %v1190 = vlaneseq
    %v1191 = vshrl.u32 %v1190, 7
    %v1192 = vsub.s32 %v1189, %v1191
    %v1193 = vrot.slane %v1179, %v1192
    %v1194 = vcombine.low %v1169, %v1177
    %v1195 = vcombine.high %v1169, %v1177
    %v1197 = vunpack.c.l.s4 1934713408
    %v1198 = vunpack.c.0.s8 %v1197
    %v1199 = vlaneseq
    %v1200 = vshrl.u32 %v1199, 7
    %v1201 = vsub.s32 %v1198, %v1200
    %v1202 = vrot.slane %v1194, %v1201
    %v1204 = vunpack.c.l.s4 1934713408
    %v1205 = vunpack.c.0.s8 %v1204
    %v1206 = vlaneseq
    %v1207 = vshrl.u32 %v1206, 7
    %v1208 = vsub.s32 %v1205, %v1207
    %v1209 = vrot.slane %v1195, %v1208
    %v1210 = vcombine.low %v1186, %v1202
    %v1211 = vcombine.high %v1186, %v1202
    %v1212 = vcombine.low %v1193, %v1209
    %v1213 = vcombine.high %v1193, %v1209
    %v1214 = vpack.c.bf16 %v1142, %v1142
    %v1215 = vpack.c.bf16 %v1143, %v1143
    %v1216 = vpack.c.bf16 %v1144, %v1144
    %v1217 = vpack.c.bf16 %v1145, %v1145
    %v1218 = vpack.c.bf16 %v1210, %v1210
    %v1219 = vpack.c.bf16 %v1211, %v1211
    %v1220 = vpack.c.bf16 %v1212, %v1212
    %v1221 = vpack.c.bf16 %v1213, %v1213
    %vm1222 = vcmask 64512
    %v1224 = vsel %vm1222, %v592, 0
    %v1227 = vsel %vm1222, %v910, 0
    %1229 = vmatprep.subr.bf16.mxu0 0
    %1230 = vmatpush1.bf16.xpose.msra.mxu0 0
    %1231 = vmatprep.subr.bf16.mxu0 0
    %1232 = vmatpush1.bf16.xpose.msra.mxu0 0
    %1233 = vmatprep.subr.bf16.mxu0 0
    %1234 = vmatpush1.bf16.xpose.msra.mxu0 0
    %1235 = vmatprep.subr.bf16.mxu0 0
    %1236 = vmatpush1.bf16.xpose.msra.mxu0 0
    %1237 = vmatprep.subr.bf16.mxu0 0
    %1238 = vmatpush1.bf16.xpose.msra.mxu0 0
    %1239 = vmatprep.subr.bf16.mxu0 0
    %1240 = vmatpush1.bf16.xpose.msra.mxu0 0
    %1241 = vmatprep.subr.bf16.mxu0 0
    %1242 = vmatpush1.bf16.xpose.msra.mxu0 0
    %1243 = vmatprep.subr.bf16.mxu0 0
    %1244 = vmatpush1.bf16.xpose.msra.mxu0 %v1227
    %1245 = vmatprep.subr.bf16.mxu0 0
    %1246 = vmatpush2.bf16.xpose.msra.mxu0 0
    %1247 = vmatprep.subr.bf16.mxu0 0
    %1248 = vmatpush2.bf16.xpose.msra.mxu0 0
    %1249 = vmatprep.subr.bf16.mxu0 0
    %1250 = vmatpush2.bf16.xpose.msra.mxu0 0
    %1251 = vmatprep.subr.bf16.mxu0 0
    %1252 = vmatpush2.bf16.xpose.msra.mxu0 0
    %1253 = vmatprep.subr.bf16.mxu0 0
    %1254 = vmatpush2.bf16.xpose.msra.mxu0 0
    %1255 = vmatprep.subr.bf16.mxu0 0
    %1256 = vmatpush2.bf16.xpose.msra.mxu0 0
    %1257 = vmatprep.subr.bf16.mxu0 0
    %1258 = vmatpush2.bf16.xpose.msra.mxu0 0
    %1259 = vmatprep.subr.bf16.mxu0 0
    %1260 = vmatpush2.bf16.xpose.msra.mxu0 0
    %1261 = vmatprep.mubr.bf16.mxu0 0
    %1262 = vmatmul.mubr.bf16.gmra.mxu0 %v1224
    %v1263 = vpop.f32.mrf.mxu0
    %v1264 = vadd.f32 0.0, %v1263
    %v1265 = vpop.f32.mrf.mxu0
    %v1266 = vpop.f32.mrf.mxu0
    %v1267 = vpop.f32.mrf.mxu0
    %1268 = vdwg.mxu0
    %v1270 = vsel %vm1222, %v593, 0
    %v1273 = vsel %vm1222, %v911, 0
    %1275 = vmatprep.subr.bf16.mxu0 0
    %1276 = vmatpush1.bf16.xpose.msra.mxu0 0
    %1277 = vmatprep.subr.bf16.mxu0 0
    %1278 = vmatpush1.bf16.xpose.msra.mxu0 0
    %1279 = vmatprep.subr.bf16.mxu0 0
    %1280 = vmatpush1.bf16.xpose.msra.mxu0 0
    %1281 = vmatprep.subr.bf16.mxu0 0
    %1282 = vmatpush1.bf16.xpose.msra.mxu0 0
    %1283 = vmatprep.subr.bf16.mxu0 0
    %1284 = vmatpush1.bf16.xpose.msra.mxu0 0
    %1285 = vmatprep.subr.bf16.mxu0 0
    %1286 = vmatpush1.bf16.xpose.msra.mxu0 0
    %1287 = vmatprep.subr.bf16.mxu0 0
    %1288 = vmatpush1.bf16.xpose.msra.mxu0 0
    %1289 = vmatprep.subr.bf16.mxu0 0
    %1290 = vmatpush1.bf16.xpose.msra.mxu0 %v1273
    %1291 = vmatprep.subr.bf16.mxu0 0
    %1292 = vmatpush2.bf16.xpose.msra.mxu0 0
    %1293 = vmatprep.subr.bf16.mxu0 0
    %1294 = vmatpush2.bf16.xpose.msra.mxu0 0
    %1295 = vmatprep.subr.bf16.mxu0 0
    %1296 = vmatpush2.bf16.xpose.msra.mxu0 0
    %1297 = vmatprep.subr.bf16.mxu0 0
    %1298 = vmatpush2.bf16.xpose.msra.mxu0 0
    %1299 = vmatprep.subr.bf16.mxu0 0
    %1300 = vmatpush2.bf16.xpose.msra.mxu0 0
    %1301 = vmatprep.subr.bf16.mxu0 0
    %1302 = vmatpush2.bf16.xpose.msra.mxu0 0
    %1303 = vmatprep.subr.bf16.mxu0 0
    %1304 = vmatpush2.bf16.xpose.msra.mxu0 0
    %1305 = vmatprep.subr.bf16.mxu0 0
    %1306 = vmatpush2.bf16.xpose.msra.mxu0 0
    %1307 = vmatprep.mubr.bf16.mxu0 0
    %1308 = vmatmul.mubr.bf16.gmra.mxu0 %v1270
    %v1309 = vpop.f32.mrf.mxu0
    %v1310 = vadd.f32 0.0, %v1309
    %v1311 = vpop.f32.mrf.mxu0
    %v1312 = vpop.f32.mrf.mxu0
    %v1313 = vpop.f32.mrf.mxu0
    %1314 = vdwg.mxu0
    %v1316 = vsel %vm1222, %v594, 0
    %v1319 = vsel %vm1222, %v912, 0
    %1321 = vmatprep.subr.bf16.mxu0 0
    %1322 = vmatpush1.bf16.xpose.msra.mxu0 0
    %1323 = vmatprep.subr.bf16.mxu0 0
    %1324 = vmatpush1.bf16.xpose.msra.mxu0 0
    %1325 = vmatprep.subr.bf16.mxu0 0
    %1326 = vmatpush1.bf16.xpose.msra.mxu0 0
    %1327 = vmatprep.subr.bf16.mxu0 0
    %1328 = vmatpush1.bf16.xpose.msra.mxu0 0
    %1329 = vmatprep.subr.bf16.mxu0 0
    %1330 = vmatpush1.bf16.xpose.msra.mxu0 0
    %1331 = vmatprep.subr.bf16.mxu0 0
    %1332 = vmatpush1.bf16.xpose.msra.mxu0 0
    %1333 = vmatprep.subr.bf16.mxu0 0
    %1334 = vmatpush1.bf16.xpose.msra.mxu0 0
    %1335 = vmatprep.subr.bf16.mxu0 0
    %1336 = vmatpush1.bf16.xpose.msra.mxu0 %v1319
    %1337 = vmatprep.subr.bf16.mxu0 0
    %1338 = vmatpush2.bf16.xpose.msra.mxu0 0
    %1339 = vmatprep.subr.bf16.mxu0 0
    %1340 = vmatpush2.bf16.xpose.msra.mxu0 0
    %1341 = vmatprep.subr.bf16.mxu0 0
    %1342 = vmatpush2.bf16.xpose.msra.mxu0 0
    %1343 = vmatprep.subr.bf16.mxu0 0
    %1344 = vmatpush2.bf16.xpose.msra.mxu0 0
    %1345 = vmatprep.subr.bf16.mxu0 0
    %1346 = vmatpush2.bf16.xpose.msra.mxu0 0
    %1347 = vmatprep.subr.bf16.mxu0 0
    %1348 = vmatpush2.bf16.xpose.msra.mxu0 0
    %1349 = vmatprep.subr.bf16.mxu0 0
    %1350 = vmatpush2.bf16.xpose.msra.mxu0 0
    %1351 = vmatprep.subr.bf16.mxu0 0
    %1352 = vmatpush2.bf16.xpose.msra.mxu0 0
    %1353 = vmatprep.mubr.bf16.mxu0 0
    %1354 = vmatmul.mubr.bf16.gmra.mxu0 %v1316
    %v1355 = vpop.f32.mrf.mxu0
    %v1356 = vadd.f32 0.0, %v1355
    %v1357 = vpop.f32.mrf.mxu0
    %v1358 = vpop.f32.mrf.mxu0
    %v1359 = vpop.f32.mrf.mxu0
    %1360 = vdwg.mxu0
    %v1362 = vsel %vm1222, %v595, 0
    %v1365 = vsel %vm1222, %v913, 0
    %1367 = vmatprep.subr.bf16.mxu0 0
    %1368 = vmatpush1.bf16.xpose.msra.mxu0 0
    %1369 = vmatprep.subr.bf16.mxu0 0
    %1370 = vmatpush1.bf16.xpose.msra.mxu0 0
    %1371 = vmatprep.subr.bf16.mxu0 0
    %1372 = vmatpush1.bf16.xpose.msra.mxu0 0
    %1373 = vmatprep.subr.bf16.mxu0 0
    %1374 = vmatpush1.bf16.xpose.msra.mxu0 0
    %1375 = vmatprep.subr.bf16.mxu0 0
    %1376 = vmatpush1.bf16.xpose.msra.mxu0 0
    %1377 = vmatprep.subr.bf16.mxu0 0
    %1378 = vmatpush1.bf16.xpose.msra.mxu0 0
    %1379 = vmatprep.subr.bf16.mxu0 0
    %1380 = vmatpush1.bf16.xpose.msra.mxu0 0
    %1381 = vmatprep.subr.bf16.mxu0 0
    %1382 = vmatpush1.bf16.xpose.msra.mxu0 %v1365
    %1383 = vmatprep.subr.bf16.mxu0 0
    %1384 = vmatpush2.bf16.xpose.msra.mxu0 0
    %1385 = vmatprep.subr.bf16.mxu0 0
    %1386 = vmatpush2.bf16.xpose.msra.mxu0 0
    %1387 = vmatprep.subr.bf16.mxu0 0
    %1388 = vmatpush2.bf16.xpose.msra.mxu0 0
    %1389 = vmatprep.subr.bf16.mxu0 0
    %1390 = vmatpush2.bf16.xpose.msra.mxu0 0
    %1391 = vmatprep.subr.bf16.mxu0 0
    %1392 = vmatpush2.bf16.xpose.msra.mxu0 0
    %1393 = vmatprep.subr.bf16.mxu0 0
    %1394 = vmatpush2.bf16.xpose.msra.mxu0 0
    %1395 = vmatprep.subr.bf16.mxu0 0
    %1396 = vmatpush2.bf16.xpose.msra.mxu0 0
    %1397 = vmatprep.subr.bf16.mxu0 0
    %1398 = vmatpush2.bf16.xpose.msra.mxu0 0
    %1399 = vmatprep.mubr.bf16.mxu0 0
    %1400 = vmatmul.mubr.bf16.gmra.mxu0 %v1362
    %v1401 = vpop.f32.mrf.mxu0
    %v1402 = vadd.f32 0.0, %v1401
    %v1403 = vpop.f32.mrf.mxu0
    %v1404 = vpop.f32.mrf.mxu0
    %v1405 = vpop.f32.mrf.mxu0
    %1406 = vdwg.mxu0
    %v1408 = vsel %vm1222, %v596, 0
    %v1411 = vsel %vm1222, %v914, 0
    %1413 = vmatprep.subr.bf16.mxu0 0
    %1414 = vmatpush1.bf16.xpose.msra.mxu0 0
    %1415 = vmatprep.subr.bf16.mxu0 0
    %1416 = vmatpush1.bf16.xpose.msra.mxu0 0
    %1417 = vmatprep.subr.bf16.mxu0 0
    %1418 = vmatpush1.bf16.xpose.msra.mxu0 0
    %1419 = vmatprep.subr.bf16.mxu0 0
    %1420 = vmatpush1.bf16.xpose.msra.mxu0 0
    %1421 = vmatprep.subr.bf16.mxu0 0
    %1422 = vmatpush1.bf16.xpose.msra.mxu0 0
    %1423 = vmatprep.subr.bf16.mxu0 0
    %1424 = vmatpush1.bf16.xpose.msra.mxu0 0
    %1425 = vmatprep.subr.bf16.mxu0 0
    %1426 = vmatpush1.bf16.xpose.msra.mxu0 0
    %1427 = vmatprep.subr.bf16.mxu0 0
    %1428 = vmatpush1.bf16.xpose.msra.mxu0 %v1411
    %1429 = vmatprep.subr.bf16.mxu0 0
    %1430 = vmatpush2.bf16.xpose.msra.mxu0 0
    %1431 = vmatprep.subr.bf16.mxu0 0
    %1432 = vmatpush2.bf16.xpose.msra.mxu0 0
    %1433 = vmatprep.subr.bf16.mxu0 0
    %1434 = vmatpush2.bf16.xpose.msra.mxu0 0
    %1435 = vmatprep.subr.bf16.mxu0 0
    %1436 = vmatpush2.bf16.xpose.msra.mxu0 0
    %1437 = vmatprep.subr.bf16.mxu0 0
    %1438 = vmatpush2.bf16.xpose.msra.mxu0 0
    %1439 = vmatprep.subr.bf16.mxu0 0
    %1440 = vmatpush2.bf16.xpose.msra.mxu0 0
    %1441 = vmatprep.subr.bf16.mxu0 0
    %1442 = vmatpush2.bf16.xpose.msra.mxu0 0
    %1443 = vmatprep.subr.bf16.mxu0 0
    %1444 = vmatpush2.bf16.xpose.msra.mxu0 0
    %1445 = vmatprep.mubr.bf16.mxu0 0
    %1446 = vmatmul.mubr.bf16.gmra.mxu0 %v1408
    %v1447 = vpop.f32.mrf.mxu0
    %v1448 = vadd.f32 0.0, %v1447
    %v1449 = vpop.f32.mrf.mxu0
    %v1450 = vpop.f32.mrf.mxu0
    %v1451 = vpop.f32.mrf.mxu0
    %1452 = vdwg.mxu0
    %v1454 = vsel %vm1222, %v597, 0
    %v1457 = vsel %vm1222, %v915, 0
    %1459 = vmatprep.subr.bf16.mxu0 0
    %1460 = vmatpush1.bf16.xpose.msra.mxu0 0
    %1461 = vmatprep.subr.bf16.mxu0 0
    %1462 = vmatpush1.bf16.xpose.msra.mxu0 0
    %1463 = vmatprep.subr.bf16.mxu0 0
    %1464 = vmatpush1.bf16.xpose.msra.mxu0 0
    %1465 = vmatprep.subr.bf16.mxu0 0
    %1466 = vmatpush1.bf16.xpose.msra.mxu0 0
    %1467 = vmatprep.subr.bf16.mxu0 0
    %1468 = vmatpush1.bf16.xpose.msra.mxu0 0
    %1469 = vmatprep.subr.bf16.mxu0 0
    %1470 = vmatpush1.bf16.xpose.msra.mxu0 0
    %1471 = vmatprep.subr.bf16.mxu0 0
    %1472 = vmatpush1.bf16.xpose.msra.mxu0 0
    %1473 = vmatprep.subr.bf16.mxu0 0
    %1474 = vmatpush1.bf16.xpose.msra.mxu0 %v1457
    %1475 = vmatprep.subr.bf16.mxu0 0
    %1476 = vmatpush2.bf16.xpose.msra.mxu0 0
    %1477 = vmatprep.subr.bf16.mxu0 0
    %1478 = vmatpush2.bf16.xpose.msra.mxu0 0
    %1479 = vmatprep.subr.bf16.mxu0 0
    %1480 = vmatpush2.bf16.xpose.msra.mxu0 0
    %1481 = vmatprep.subr.bf16.mxu0 0
    %1482 = vmatpush2.bf16.xpose.msra.mxu0 0
    %1483 = vmatprep.subr.bf16.mxu0 0
    %1484 = vmatpush2.bf16.xpose.msra.mxu0 0
    %1485 = vmatprep.subr.bf16.mxu0 0
    %1486 = vmatpush2.bf16.xpose.msra.mxu0 0
    %1487 = vmatprep.subr.bf16.mxu0 0
    %1488 = vmatpush2.bf16.xpose.msra.mxu0 0
    %1489 = vmatprep.subr.bf16.mxu0 0
    %1490 = vmatpush2.bf16.xpose.msra.mxu0 0
    %1491 = vmatprep.mubr.bf16.mxu0 0
    %1492 = vmatmul.mubr.bf16.gmra.mxu0 %v1454
    %v1493 = vpop.f32.mrf.mxu0
    %v1494 = vadd.f32 0.0, %v1493
    %v1495 = vpop.f32.mrf.mxu0
    %v1496 = vpop.f32.mrf.mxu0
    %v1497 = vpop.f32.mrf.mxu0
    %1498 = vdwg.mxu0
    %v1500 = vsel %vm1222, %v598, 0
    %v1503 = vsel %vm1222, %v916, 0
    %1505 = vmatprep.subr.bf16.mxu0 0
    %1506 = vmatpush1.bf16.xpose.msra.mxu0 0
    %1507 = vmatprep.subr.bf16.mxu0 0
    %1508 = vmatpush1.bf16.xpose.msra.mxu0 0
    %1509 = vmatprep.subr.bf16.mxu0 0
    %1510 = vmatpush1.bf16.xpose.msra.mxu0 0
    %1511 = vmatprep.subr.bf16.mxu0 0
    %1512 = vmatpush1.bf16.xpose.msra.mxu0 0
    %1513 = vmatprep.subr.bf16.mxu0 0
    %1514 = vmatpush1.bf16.xpose.msra.mxu0 0
    %1515 = vmatprep.subr.bf16.mxu0 0
    %1516 = vmatpush1.bf16.xpose.msra.mxu0 0
    %1517 = vmatprep.subr.bf16.mxu0 0
    %1518 = vmatpush1.bf16.xpose.msra.mxu0 0
    %1519 = vmatprep.subr.bf16.mxu0 0
    %1520 = vmatpush1.bf16.xpose.msra.mxu0 %v1503
    %1521 = vmatprep.subr.bf16.mxu0 0
    %1522 = vmatpush2.bf16.xpose.msra.mxu0 0
    %1523 = vmatprep.subr.bf16.mxu0 0
    %1524 = vmatpush2.bf16.xpose.msra.mxu0 0
    %1525 = vmatprep.subr.bf16.mxu0 0
    %1526 = vmatpush2.bf16.xpose.msra.mxu0 0
    %1527 = vmatprep.subr.bf16.mxu0 0
    %1528 = vmatpush2.bf16.xpose.msra.mxu0 0
    %1529 = vmatprep.subr.bf16.mxu0 0
    %1530 = vmatpush2.bf16.xpose.msra.mxu0 0
    %1531 = vmatprep.subr.bf16.mxu0 0
    %1532 = vmatpush2.bf16.xpose.msra.mxu0 0
    %1533 = vmatprep.subr.bf16.mxu0 0
    %1534 = vmatpush2.bf16.xpose.msra.mxu0 0
    %1535 = vmatprep.subr.bf16.mxu0 0
    %1536 = vmatpush2.bf16.xpose.msra.mxu0 0
    %1537 = vmatprep.mubr.bf16.mxu0 0
    %1538 = vmatmul.mubr.bf16.gmra.mxu0 %v1500
    %v1539 = vpop.f32.mrf.mxu0
    %v1540 = vadd.f32 0.0, %v1539
    %v1541 = vpop.f32.mrf.mxu0
    %v1542 = vpop.f32.mrf.mxu0
    %v1543 = vpop.f32.mrf.mxu0
    %1544 = vdwg.mxu0
    %v1546 = vsel %vm1222, %v599, 0
    %v1549 = vsel %vm1222, %v917, 0
    %1551 = vmatprep.subr.bf16.mxu0 0
    %1552 = vmatpush1.bf16.xpose.msra.mxu0 0
    %1553 = vmatprep.subr.bf16.mxu0 0
    %1554 = vmatpush1.bf16.xpose.msra.mxu0 0
    %1555 = vmatprep.subr.bf16.mxu0 0
    %1556 = vmatpush1.bf16.xpose.msra.mxu0 0
    %1557 = vmatprep.subr.bf16.mxu0 0
    %1558 = vmatpush1.bf16.xpose.msra.mxu0 0
    %1559 = vmatprep.subr.bf16.mxu0 0
    %1560 = vmatpush1.bf16.xpose.msra.mxu0 0
    %1561 = vmatprep.subr.bf16.mxu0 0
    %1562 = vmatpush1.bf16.xpose.msra.mxu0 0
    %1563 = vmatprep.subr.bf16.mxu0 0
    %1564 = vmatpush1.bf16.xpose.msra.mxu0 0
    %1565 = vmatprep.subr.bf16.mxu0 0
    %1566 = vmatpush1.bf16.xpose.msra.mxu0 %v1549
    %1567 = vmatprep.subr.bf16.mxu0 0
    %1568 = vmatpush2.bf16.xpose.msra.mxu0 0
    %1569 = vmatprep.subr.bf16.mxu0 0
    %1570 = vmatpush2.bf16.xpose.msra.mxu0 0
    %1571 = vmatprep.subr.bf16.mxu0 0
    %1572 = vmatpush2.bf16.xpose.msra.mxu0 0
    %1573 = vmatprep.subr.bf16.mxu0 0
    %1574 = vmatpush2.bf16.xpose.msra.mxu0 0
    %1575 = vmatprep.subr.bf16.mxu0 0
    %1576 = vmatpush2.bf16.xpose.msra.mxu0 0
    %1577 = vmatprep.subr.bf16.mxu0 0
    %1578 = vmatpush2.bf16.xpose.msra.mxu0 0
    %1579 = vmatprep.subr.bf16.mxu0 0
    %1580 = vmatpush2.bf16.xpose.msra.mxu0 0
    %1581 = vmatprep.subr.bf16.mxu0 0
    %1582 = vmatpush2.bf16.xpose.msra.mxu0 0
    %1583 = vmatprep.mubr.bf16.mxu0 0
    %1584 = vmatmul.mubr.bf16.gmra.mxu0 %v1546
    %v1585 = vpop.f32.mrf.mxu0
    %v1586 = vadd.f32 0.0, %v1585
    %v1587 = vpop.f32.mrf.mxu0
    %v1588 = vpop.f32.mrf.mxu0
    %v1589 = vpop.f32.mrf.mxu0
    %1590 = vdwg.mxu0
    %v1591 = vadd.f32 %v1264, %v224
    %v1592 = vadd.f32 %v1310, %v224
    %v1593 = vadd.f32 %v1356, %v224
    %v1594 = vadd.f32 %v1402, %v224
    %v1595 = vadd.f32 %v1448, %v225
    %v1596 = vadd.f32 %v1494, %v225
    %v1597 = vadd.f32 %v1540, %v225
    %v1598 = vadd.f32 %v1586, %v225
    %v1599 = vsel %vm1222, %v1591, -inf
    %1600 = vmax.xlane.f32.xlu0 %v1599
    %v1601 = vpop.xlane.xlu0 %1600
    %v1602 = vsel %vm1222, %v1592, -inf
    %1603 = vmax.xlane.f32.xlu0 %v1602
    %v1604 = vpop.xlane.xlu0 %1603
    %v1605 = vsel %vm1222, %v1593, -inf
    %1606 = vmax.xlane.f32.xlu0 %v1605
    %v1607 = vpop.xlane.xlu0 %1606
    %v1608 = vsel %vm1222, %v1594, -inf
    %1609 = vmax.xlane.f32.xlu0 %v1608
    %v1610 = vpop.xlane.xlu0 %1609
    %v1611 = vsel %vm1222, %v1595, -inf
    %1612 = vmax.xlane.f32.xlu0 %v1611
    %v1613 = vpop.xlane.xlu0 %1612
    %v1614 = vsel %vm1222, %v1596, -inf
    %1615 = vmax.xlane.f32.xlu0 %v1614
    %v1616 = vpop.xlane.xlu0 %1615
    %v1617 = vsel %vm1222, %v1597, -inf
    %1618 = vmax.xlane.f32.xlu0 %v1617
    %v1619 = vpop.xlane.xlu0 %1618
    %v1620 = vsel %vm1222, %v1598, -inf
    %1621 = vmax.xlane.f32.xlu0 %v1620
    %v1622 = vpop.xlane.xlu0 %1621
    %v1623 = vsub.f32 %v1591, %v1601
    %v1624 = vsub.f32 %v1592, %v1604
    %v1625 = vsub.f32 %v1593, %v1607
    %v1626 = vsub.f32 %v1594, %v1610
    %v1627 = vsub.f32 %v1595, %v1613
    %v1628 = vsub.f32 %v1596, %v1616
    %v1629 = vsub.f32 %v1597, %v1619
    %v1630 = vsub.f32 %v1598, %v1622
    %v1631 = vmul.f32 %v1623, 1.442695
    %v1632 = vpow.pop %v1631
    %v1633 = vmul.f32 %v1624, 1.442695
    %v1634 = vpow.pop %v1633
    %v1635 = vmul.f32 %v1625, 1.442695
    %v1636 = vpow.pop %v1635
    %v1637 = vmul.f32 %v1626, 1.442695
    %v1638 = vpow.pop %v1637
    %v1639 = vmul.f32 %v1627, 1.442695
    %v1640 = vpow.pop %v1639
    %v1641 = vmul.f32 %v1628, 1.442695
    %v1642 = vpow.pop %v1641
    %v1643 = vmul.f32 %v1629, 1.442695
    %v1644 = vpow.pop %v1643
    %v1645 = vmul.f32 %v1630, 1.442695
    %v1646 = vpow.pop %v1645
    %v1647 = vsel %vm1222, %v1632, 0.0
    %1648 = vadd.xlane.f32.xlu0 %v1647
    %v1649 = vpop.xlane.xlu0 %1648
    %v1650 = vsel %vm1222, %v1634, 0.0
    %1651 = vadd.xlane.f32.xlu0 %v1650
    %v1652 = vpop.xlane.xlu0 %1651
    %v1653 = vsel %vm1222, %v1636, 0.0
    %1654 = vadd.xlane.f32.xlu0 %v1653
    %v1655 = vpop.xlane.xlu0 %1654
    %v1656 = vsel %vm1222, %v1638, 0.0
    %1657 = vadd.xlane.f32.xlu0 %v1656
    %v1658 = vpop.xlane.xlu0 %1657
    %v1659 = vsel %vm1222, %v1640, 0.0
    %1660 = vadd.xlane.f32.xlu0 %v1659
    %v1661 = vpop.xlane.xlu0 %1660
    %v1662 = vsel %vm1222, %v1642, 0.0
    %1663 = vadd.xlane.f32.xlu0 %v1662
    %v1664 = vpop.xlane.xlu0 %1663
    %v1665 = vsel %vm1222, %v1644, 0.0
    %1666 = vadd.xlane.f32.xlu0 %v1665
    %v1667 = vpop.xlane.xlu0 %1666
    %v1668 = vsel %vm1222, %v1646, 0.0
    %1669 = vadd.xlane.f32.xlu0 %v1668
    %v1670 = vpop.xlane.xlu0 %1669
    %v1671 = vrcp.pop %v1649
    %v1672 = vrcp.pop %v1652
    %v1673 = vrcp.pop %v1655
    %v1674 = vrcp.pop %v1658
    %v1675 = vrcp.pop %v1661
    %v1676 = vrcp.pop %v1664
    %v1677 = vrcp.pop %v1667
    %v1678 = vrcp.pop %v1670
    %v1679 = vmul.f32 %v1632, %v1671
    %v1680 = vmul.f32 %v1634, %v1672
    %v1681 = vmul.f32 %v1636, %v1673
    %v1682 = vmul.f32 %v1638, %v1674
    %v1683 = vmul.f32 %v1640, %v1675
    %v1684 = vmul.f32 %v1642, %v1676
    %v1685 = vmul.f32 %v1644, %v1677
    %v1686 = vmul.f32 %v1646, %v1678
    %1687 = vst.msk [vmem:[#allocation14] sm:$0xff] %vm1222, %v1679
    %1688 = vst.msk [vmem:[#allocation14 + $0x8] sm:$0xff] %vm1222, %v1680
    %1689 = vst.msk [vmem:[#allocation14 + $0x10] sm:$0xff] %vm1222, %v1681
    %1690 = vst.msk [vmem:[#allocation14 + $0x18] sm:$0xff] %vm1222, %v1682
    %1691 = vst.msk [vmem:[#allocation14 + $0x20] sm:$0xff] %vm1222, %v1683
    %1692 = vst.msk [vmem:[#allocation14 + $0x28] sm:$0xff] %vm1222, %v1684
    %1693 = vst.msk [vmem:[#allocation14 + $0x30] sm:$0xff] %vm1222, %v1685
    %1694 = vst.msk [vmem:[#allocation14 + $0x38] sm:$0xff] %vm1222, %v1686
    %v1695 = vpack.c.bf16 %v1679, %v1679
    %v1696 = vpack.c.bf16 %v1680, %v1680
    %v1697 = vpack.c.bf16 %v1681, %v1681
    %v1698 = vpack.c.bf16 %v1682, %v1682
    %v1699 = vpack.c.bf16 %v1683, %v1683
    %v1700 = vpack.c.bf16 %v1684, %v1684
    %v1701 = vpack.c.bf16 %v1685, %v1685
    %v1702 = vpack.c.bf16 %v1686, %v1686
    %v1704 = vsel %vm1222, %v1695, 0
    %vm1706 = vcmask 1043456
    %v1708 = vsel %vm1706, %v1214, 0
    %1710 = vmatprep.subr.bf16.mxu0 0
    %1711 = vmatpush1.bf16.msra.mxu0 0
    %1712 = vmatprep.subr.bf16.mxu0 0
    %1713 = vmatpush1.bf16.msra.mxu0 0
    %1714 = vmatprep.subr.bf16.mxu0 0
    %1715 = vmatpush1.bf16.msra.mxu0 0
    %1716 = vmatprep.subr.bf16.mxu0 0
    %1717 = vmatpush1.bf16.msra.mxu0 0
    %1718 = vmatprep.subr.bf16.mxu0 0
    %1719 = vmatpush1.bf16.msra.mxu0 0
    %1720 = vmatprep.subr.bf16.mxu0 0
    %1721 = vmatpush1.bf16.msra.mxu0 0
    %1722 = vmatprep.subr.bf16.mxu0 0
    %1723 = vmatpush1.bf16.msra.mxu0 0
    %1724 = vmatprep.subr.bf16.mxu0 0
    %1725 = vmatpush1.bf16.msra.mxu0 %v1708
    %1726 = vmatprep.subr.bf16.mxu0 0
    %1727 = vmatpush2.bf16.msra.mxu0 0
    %1728 = vmatprep.subr.bf16.mxu0 0
    %1729 = vmatpush2.bf16.msra.mxu0 0
    %1730 = vmatprep.subr.bf16.mxu0 0
    %1731 = vmatpush2.bf16.msra.mxu0 0
    %1732 = vmatprep.subr.bf16.mxu0 0
    %1733 = vmatpush2.bf16.msra.mxu0 0
    %1734 = vmatprep.subr.bf16.mxu0 0
    %1735 = vmatpush2.bf16.msra.mxu0 0
    %1736 = vmatprep.subr.bf16.mxu0 0
    %1737 = vmatpush2.bf16.msra.mxu0 0
    %1738 = vmatprep.subr.bf16.mxu0 0
    %1739 = vmatpush2.bf16.msra.mxu0 0
    %1740 = vmatprep.subr.bf16.mxu0 0
    %1741 = vmatpush2.bf16.msra.mxu0 0
    %1742 = vmatprep.mubr.bf16.mxu0 0
    %1743 = vmatmul.mubr.bf16.gmra.mxu0 %v1704
    %v1744 = vpop.f32.mrf.mxu0
    %v1745 = vadd.f32 0.0, %v1744
    %v1746 = vpop.f32.mrf.mxu0
    %v1747 = vpop.f32.mrf.mxu0
    %v1748 = vpop.f32.mrf.mxu0
    %1749 = vdwg.mxu0
    %v1751 = vsel %vm1222, %v1696, 0
    %v1754 = vsel %vm1706, %v1215, 0
    %1756 = vmatprep.subr.bf16.mxu0 0
    %1757 = vmatpush1.bf16.msra.mxu0 0
    %1758 = vmatprep.subr.bf16.mxu0 0
    %1759 = vmatpush1.bf16.msra.mxu0 0
    %1760 = vmatprep.subr.bf16.mxu0 0
    %1761 = vmatpush1.bf16.msra.mxu0 0
    %1762 = vmatprep.subr.bf16.mxu0 0
    %1763 = vmatpush1.bf16.msra.mxu0 0
    %1764 = vmatprep.subr.bf16.mxu0 0
    %1765 = vmatpush1.bf16.msra.mxu0 0
    %1766 = vmatprep.subr.bf16.mxu0 0
    %1767 = vmatpush1.bf16.msra.mxu0 0
    %1768 = vmatprep.subr.bf16.mxu0 0
    %1769 = vmatpush1.bf16.msra.mxu0 0
    %1770 = vmatprep.subr.bf16.mxu0 0
    %1771 = vmatpush1.bf16.msra.mxu0 %v1754
    %1772 = vmatprep.subr.bf16.mxu0 0
    %1773 = vmatpush2.bf16.msra.mxu0 0
    %1774 = vmatprep.subr.bf16.mxu0 0
    %1775 = vmatpush2.bf16.msra.mxu0 0
    %1776 = vmatprep.subr.bf16.mxu0 0
    %1777 = vmatpush2.bf16.msra.mxu0 0
    %1778 = vmatprep.subr.bf16.mxu0 0
    %1779 = vmatpush2.bf16.msra.mxu0 0
    %1780 = vmatprep.subr.bf16.mxu0 0
    %1781 = vmatpush2.bf16.msra.mxu0 0
    %1782 = vmatprep.subr.bf16.mxu0 0
    %1783 = vmatpush2.bf16.msra.mxu0 0
    %1784 = vmatprep.subr.bf16.mxu0 0
    %1785 = vmatpush2.bf16.msra.mxu0 0
    %1786 = vmatprep.subr.bf16.mxu0 0
    %1787 = vmatpush2.bf16.msra.mxu0 0
    %1788 = vmatprep.mubr.bf16.mxu0 0
    %1789 = vmatmul.mubr.bf16.gmra.mxu0 %v1751
    %v1790 = vpop.f32.mrf.mxu0
    %v1791 = vadd.f32 0.0, %v1790
    %v1792 = vpop.f32.mrf.mxu0
    %v1793 = vpop.f32.mrf.mxu0
    %v1794 = vpop.f32.mrf.mxu0
    %1795 = vdwg.mxu0
    %v1797 = vsel %vm1222, %v1697, 0
    %v1800 = vsel %vm1706, %v1216, 0
    %1802 = vmatprep.subr.bf16.mxu0 0
    %1803 = vmatpush1.bf16.msra.mxu0 0
    %1804 = vmatprep.subr.bf16.mxu0 0
    %1805 = vmatpush1.bf16.msra.mxu0 0
    %1806 = vmatprep.subr.bf16.mxu0 0
    %1807 = vmatpush1.bf16.msra.mxu0 0
    %1808 = vmatprep.subr.bf16.mxu0 0
    %1809 = vmatpush1.bf16.msra.mxu0 0
    %1810 = vmatprep.subr.bf16.mxu0 0
    %1811 = vmatpush1.bf16.msra.mxu0 0
    %1812 = vmatprep.subr.bf16.mxu0 0
    %1813 = vmatpush1.bf16.msra.mxu0 0
    %1814 = vmatprep.subr.bf16.mxu0 0
    %1815 = vmatpush1.bf16.msra.mxu0 0
    %1816 = vmatprep.subr.bf16.mxu0 0
    %1817 = vmatpush1.bf16.msra.mxu0 %v1800
    %1818 = vmatprep.subr.bf16.mxu0 0
    %1819 = vmatpush2.bf16.msra.mxu0 0
    %1820 = vmatprep.subr.bf16.mxu0 0
    %1821 = vmatpush2.bf16.msra.mxu0 0
    %1822 = vmatprep.subr.bf16.mxu0 0
    %1823 = vmatpush2.bf16.msra.mxu0 0
    %1824 = vmatprep.subr.bf16.mxu0 0
    %1825 = vmatpush2.bf16.msra.mxu0 0
    %1826 = vmatprep.subr.bf16.mxu0 0
    %1827 = vmatpush2.bf16.msra.mxu0 0
    %1828 = vmatprep.subr.bf16.mxu0 0
    %1829 = vmatpush2.bf16.msra.mxu0 0
    %1830 = vmatprep.subr.bf16.mxu0 0
    %1831 = vmatpush2.bf16.msra.mxu0 0
    %1832 = vmatprep.subr.bf16.mxu0 0
    %1833 = vmatpush2.bf16.msra.mxu0 0
    %1834 = vmatprep.mubr.bf16.mxu0 0
    %1835 = vmatmul.mubr.bf16.gmra.mxu0 %v1797
    %v1836 = vpop.f32.mrf.mxu0
    %v1837 = vadd.f32 0.0, %v1836
    %v1838 = vpop.f32.mrf.mxu0
    %v1839 = vpop.f32.mrf.mxu0
    %v1840 = vpop.f32.mrf.mxu0
    %1841 = vdwg.mxu0
    %v1843 = vsel %vm1222, %v1698, 0
    %v1846 = vsel %vm1706, %v1217, 0
    %1848 = vmatprep.subr.bf16.mxu0 0
    %1849 = vmatpush1.bf16.msra.mxu0 0
    %1850 = vmatprep.subr.bf16.mxu0 0
    %1851 = vmatpush1.bf16.msra.mxu0 0
    %1852 = vmatprep.subr.bf16.mxu0 0
    %1853 = vmatpush1.bf16.msra.mxu0 0
    %1854 = vmatprep.subr.bf16.mxu0 0
    %1855 = vmatpush1.bf16.msra.mxu0 0
    %1856 = vmatprep.subr.bf16.mxu0 0
    %1857 = vmatpush1.bf16.msra.mxu0 0
    %1858 = vmatprep.subr.bf16.mxu0 0
    %1859 = vmatpush1.bf16.msra.mxu0 0
    %1860 = vmatprep.subr.bf16.mxu0 0
    %1861 = vmatpush1.bf16.msra.mxu0 0
    %1862 = vmatprep.subr.bf16.mxu0 0
    %1863 = vmatpush1.bf16.msra.mxu0 %v1846
    %1864 = vmatprep.subr.bf16.mxu0 0
    %1865 = vmatpush2.bf16.msra.mxu0 0
    %1866 = vmatprep.subr.bf16.mxu0 0
    %1867 = vmatpush2.bf16.msra.mxu0 0
    %1868 = vmatprep.subr.bf16.mxu0 0
    %1869 = vmatpush2.bf16.msra.mxu0 0
    %1870 = vmatprep.subr.bf16.mxu0 0
    %1871 = vmatpush2.bf16.msra.mxu0 0
    %1872 = vmatprep.subr.bf16.mxu0 0
    %1873 = vmatpush2.bf16.msra.mxu0 0
    %1874 = vmatprep.subr.bf16.mxu0 0
    %1875 = vmatpush2.bf16.msra.mxu0 0
    %1876 = vmatprep.subr.bf16.mxu0 0
    %1877 = vmatpush2.bf16.msra.mxu0 0
    %1878 = vmatprep.subr.bf16.mxu0 0
    %1879 = vmatpush2.bf16.msra.mxu0 0
    %1880 = vmatprep.mubr.bf16.mxu0 0
    %1881 = vmatmul.mubr.bf16.gmra.mxu0 %v1843
    %v1882 = vpop.f32.mrf.mxu0
    %v1883 = vadd.f32 0.0, %v1882
    %v1884 = vpop.f32.mrf.mxu0
    %v1885 = vpop.f32.mrf.mxu0
    %v1886 = vpop.f32.mrf.mxu0
    %1887 = vdwg.mxu0
    %v1889 = vsel %vm1222, %v1699, 0
    %v1892 = vsel %vm1706, %v1218, 0
    %1894 = vmatprep.subr.bf16.mxu0 0
    %1895 = vmatpush1.bf16.msra.mxu0 0
    %1896 = vmatprep.subr.bf16.mxu0 0
    %1897 = vmatpush1.bf16.msra.mxu0 0
    %1898 = vmatprep.subr.bf16.mxu0 0
    %1899 = vmatpush1.bf16.msra.mxu0 0
    %1900 = vmatprep.subr.bf16.mxu0 0
    %1901 = vmatpush1.bf16.msra.mxu0 0
    %1902 = vmatprep.subr.bf16.mxu0 0
    %1903 = vmatpush1.bf16.msra.mxu0 0
    %1904 = vmatprep.subr.bf16.mxu0 0
    %1905 = vmatpush1.bf16.msra.mxu0 0
    %1906 = vmatprep.subr.bf16.mxu0 0
    %1907 = vmatpush1.bf16.msra.mxu0 0
    %1908 = vmatprep.subr.bf16.mxu0 0
    %1909 = vmatpush1.bf16.msra.mxu0 %v1892
    %1910 = vmatprep.subr.bf16.mxu0 0
    %1911 = vmatpush2.bf16.msra.mxu0 0
    %1912 = vmatprep.subr.bf16.mxu0 0
    %1913 = vmatpush2.bf16.msra.mxu0 0
    %1914 = vmatprep.subr.bf16.mxu0 0
    %1915 = vmatpush2.bf16.msra.mxu0 0
    %1916 = vmatprep.subr.bf16.mxu0 0
    %1917 = vmatpush2.bf16.msra.mxu0 0
    %1918 = vmatprep.subr.bf16.mxu0 0
    %1919 = vmatpush2.bf16.msra.mxu0 0
    %1920 = vmatprep.subr.bf16.mxu0 0
    %1921 = vmatpush2.bf16.msra.mxu0 0
    %1922 = vmatprep.subr.bf16.mxu0 0
    %1923 = vmatpush2.bf16.msra.mxu0 0
    %1924 = vmatprep.subr.bf16.mxu0 0
    %1925 = vmatpush2.bf16.msra.mxu0 0
    %1926 = vmatprep.mubr.bf16.mxu0 0
    %1927 = vmatmul.mubr.bf16.gmra.mxu0 %v1889
    %v1928 = vpop.f32.mrf.mxu0
    %v1929 = vadd.f32 0.0, %v1928
    %v1930 = vpop.f32.mrf.mxu0
    %v1931 = vpop.f32.mrf.mxu0
    %v1932 = vpop.f32.mrf.mxu0
    %1933 = vdwg.mxu0
    %v1935 = vsel %vm1222, %v1700, 0
    %v1938 = vsel %vm1706, %v1219, 0
    %1940 = vmatprep.subr.bf16.mxu0 0
    %1941 = vmatpush1.bf16.msra.mxu0 0
    %1942 = vmatprep.subr.bf16.mxu0 0
    %1943 = vmatpush1.bf16.msra.mxu0 0
    %1944 = vmatprep.subr.bf16.mxu0 0
    %1945 = vmatpush1.bf16.msra.mxu0 0
    %1946 = vmatprep.subr.bf16.mxu0 0
    %1947 = vmatpush1.bf16.msra.mxu0 0
    %1948 = vmatprep.subr.bf16.mxu0 0
    %1949 = vmatpush1.bf16.msra.mxu0 0
    %1950 = vmatprep.subr.bf16.mxu0 0
    %1951 = vmatpush1.bf16.msra.mxu0 0
    %1952 = vmatprep.subr.bf16.mxu0 0
    %1953 = vmatpush1.bf16.msra.mxu0 0
    %1954 = vmatprep.subr.bf16.mxu0 0
    %1955 = vmatpush1.bf16.msra.mxu0 %v1938
    %1956 = vmatprep.subr.bf16.mxu0 0
    %1957 = vmatpush2.bf16.msra.mxu0 0
    %1958 = vmatprep.subr.bf16.mxu0 0
    %1959 = vmatpush2.bf16.msra.mxu0 0
    %1960 = vmatprep.subr.bf16.mxu0 0
    %1961 = vmatpush2.bf16.msra.mxu0 0
    %1962 = vmatprep.subr.bf16.mxu0 0
    %1963 = vmatpush2.bf16.msra.mxu0 0
    %1964 = vmatprep.subr.bf16.mxu0 0
    %1965 = vmatpush2.bf16.msra.mxu0 0
    %1966 = vmatprep.subr.bf16.mxu0 0
    %1967 = vmatpush2.bf16.msra.mxu0 0
    %1968 = vmatprep.subr.bf16.mxu0 0
    %1969 = vmatpush2.bf16.msra.mxu0 0
    %1970 = vmatprep.subr.bf16.mxu0 0
    %1971 = vmatpush2.bf16.msra.mxu0 0
    %1972 = vmatprep.mubr.bf16.mxu0 0
    %1973 = vmatmul.mubr.bf16.gmra.mxu0 %v1935
    %v1974 = vpop.f32.mrf.mxu0
    %v1975 = vadd.f32 0.0, %v1974
    %v1976 = vpop.f32.mrf.mxu0
    %v1977 = vpop.f32.mrf.mxu0
    %v1978 = vpop.f32.mrf.mxu0
    %1979 = vdwg.mxu0
    %v1981 = vsel %vm1222, %v1701, 0
    %v1984 = vsel %vm1706, %v1220, 0
    %1986 = vmatprep.subr.bf16.mxu0 0
    %1987 = vmatpush1.bf16.msra.mxu0 0
    %1988 = vmatprep.subr.bf16.mxu0 0
    %1989 = vmatpush1.bf16.msra.mxu0 0
    %1990 = vmatprep.subr.bf16.mxu0 0
    %1991 = vmatpush1.bf16.msra.mxu0 0
    %1992 = vmatprep.subr.bf16.mxu0 0
    %1993 = vmatpush1.bf16.msra.mxu0 0
    %1994 = vmatprep.subr.bf16.mxu0 0
    %1995 = vmatpush1.bf16.msra.mxu0 0
    %1996 = vmatprep.subr.bf16.mxu0 0
    %1997 = vmatpush1.bf16.msra.mxu0 0
    %1998 = vmatprep.subr.bf16.mxu0 0
    %1999 = vmatpush1.bf16.msra.mxu0 0
    %2000 = vmatprep.subr.bf16.mxu0 0
    %2001 = vmatpush1.bf16.msra.mxu0 %v1984
    %2002 = vmatprep.subr.bf16.mxu0 0
    %2003 = vmatpush2.bf16.msra.mxu0 0
    %2004 = vmatprep.subr.bf16.mxu0 0
    %2005 = vmatpush2.bf16.msra.mxu0 0
    %2006 = vmatprep.subr.bf16.mxu0 0
    %2007 = vmatpush2.bf16.msra.mxu0 0
    %2008 = vmatprep.subr.bf16.mxu0 0
    %2009 = vmatpush2.bf16.msra.mxu0 0
    %2010 = vmatprep.subr.bf16.mxu0 0
    %2011 = vmatpush2.bf16.msra.mxu0 0
    %2012 = vmatprep.subr.bf16.mxu0 0
    %2013 = vmatpush2.bf16.msra.mxu0 0
    %2014 = vmatprep.subr.bf16.mxu0 0
    %2015 = vmatpush2.bf16.msra.mxu0 0
    %2016 = vmatprep.subr.bf16.mxu0 0
    %2017 = vmatpush2.bf16.msra.mxu0 0
    %2018 = vmatprep.mubr.bf16.mxu0 0
    %2019 = vmatmul.mubr.bf16.gmra.mxu0 %v1981
    %v2020 = vpop.f32.mrf.mxu0
    %v2021 = vadd.f32 0.0, %v2020
    %v2022 = vpop.f32.mrf.mxu0
    %v2023 = vpop.f32.mrf.mxu0
    %v2024 = vpop.f32.mrf.mxu0
    %2025 = vdwg.mxu0
    %v2027 = vsel %vm1222, %v1702, 0
    %v2030 = vsel %vm1706, %v1221, 0
    %2032 = vmatprep.subr.bf16.mxu0 0
    %2033 = vmatpush1.bf16.msra.mxu0 0
    %2034 = vmatprep.subr.bf16.mxu0 0
    %2035 = vmatpush1.bf16.msra.mxu0 0
    %2036 = vmatprep.subr.bf16.mxu0 0
    %2037 = vmatpush1.bf16.msra.mxu0 0
    %2038 = vmatprep.subr.bf16.mxu0 0
    %2039 = vmatpush1.bf16.msra.mxu0 0
    %2040 = vmatprep.subr.bf16.mxu0 0
    %2041 = vmatpush1.bf16.msra.mxu0 0
    %2042 = vmatprep.subr.bf16.mxu0 0
    %2043 = vmatpush1.bf16.msra.mxu0 0
    %2044 = vmatprep.subr.bf16.mxu0 0
    %2045 = vmatpush1.bf16.msra.mxu0 0
    %2046 = vmatprep.subr.bf16.mxu0 0
    %2047 = vmatpush1.bf16.msra.mxu0 %v2030
    %2048 = vmatprep.subr.bf16.mxu0 0
    %2049 = vmatpush2.bf16.msra.mxu0 0
    %2050 = vmatprep.subr.bf16.mxu0 0
    %2051 = vmatpush2.bf16.msra.mxu0 0
    %2052 = vmatprep.subr.bf16.mxu0 0
    %2053 = vmatpush2.bf16.msra.mxu0 0
    %2054 = vmatprep.subr.bf16.mxu0 0
    %2055 = vmatpush2.bf16.msra.mxu0 0
    %2056 = vmatprep.subr.bf16.mxu0 0
    %2057 = vmatpush2.bf16.msra.mxu0 0
    %2058 = vmatprep.subr.bf16.mxu0 0
    %2059 = vmatpush2.bf16.msra.mxu0 0
    %2060 = vmatprep.subr.bf16.mxu0 0
    %2061 = vmatpush2.bf16.msra.mxu0 0
    %2062 = vmatprep.subr.bf16.mxu0 0
    %2063 = vmatpush2.bf16.msra.mxu0 0
    %2064 = vmatprep.mubr.bf16.mxu0 0
    %2065 = vmatmul.mubr.bf16.gmra.mxu0 %v2027
    %v2066 = vpop.f32.mrf.mxu0
    %v2067 = vadd.f32 0.0, %v2066
    %v2068 = vpop.f32.mrf.mxu0
    %v2069 = vpop.f32.mrf.mxu0
    %v2070 = vpop.f32.mrf.mxu0
    %2071 = vdwg.mxu0
    %v2072 = vcombine.low %v1745, %v1837
    %v2073 = vcombine.high %v1745, %v1837
    %v2075 = vunpack.c.l.s4 1983009808
    %v2076 = vunpack.c.0.s8 %v2075
    %v2077 = vlaneseq
    %v2078 = vshrl.u32 %v2077, 7
    %v2079 = vsub.s32 %v2076, %v2078
    %v2080 = vrot.slane %v2072, %v2079
    %v2082 = vunpack.c.l.s4 1983009808
    %v2083 = vunpack.c.0.s8 %v2082
    %v2084 = vlaneseq
    %v2085 = vshrl.u32 %v2084, 7
    %v2086 = vsub.s32 %v2083, %v2085
    %v2087 = vrot.slane %v2073, %v2086
    %v2088 = vcombine.low %v1791, %v1883
    %v2089 = vcombine.high %v1791, %v1883
    %v2091 = vunpack.c.l.s4 1983009808
    %v2092 = vunpack.c.0.s8 %v2091
    %v2093 = vlaneseq
    %v2094 = vshrl.u32 %v2093, 7
    %v2095 = vsub.s32 %v2092, %v2094
    %v2096 = vrot.slane %v2088, %v2095
    %v2098 = vunpack.c.l.s4 1983009808
    %v2099 = vunpack.c.0.s8 %v2098
    %v2100 = vlaneseq
    %v2101 = vshrl.u32 %v2100, 7
    %v2102 = vsub.s32 %v2099, %v2101
    %v2103 = vrot.slane %v2089, %v2102
    %v2104 = vcombine.low %v2080, %v2096
    %v2105 = vcombine.high %v2080, %v2096
    %v2107 = vunpack.c.l.s4 1934713408
    %v2108 = vunpack.c.0.s8 %v2107
    %v2109 = vlaneseq
    %v2110 = vshrl.u32 %v2109, 7
    %v2111 = vsub.s32 %v2108, %v2110
    %v2112 = vrot.slane %v2104, %v2111
    %v2114 = vunpack.c.l.s4 1934713408
    %v2115 = vunpack.c.0.s8 %v2114
    %v2116 = vlaneseq
    %v2117 = vshrl.u32 %v2116, 7
    %v2118 = vsub.s32 %v2115, %v2117
    %v2119 = vrot.slane %v2105, %v2118
    %v2120 = vcombine.low %v2087, %v2103
    %v2121 = vcombine.high %v2087, %v2103
    %v2123 = vunpack.c.l.s4 1934713408
    %v2124 = vunpack.c.0.s8 %v2123
    %v2125 = vlaneseq
    %v2126 = vshrl.u32 %v2125, 7
    %v2127 = vsub.s32 %v2124, %v2126
    %v2128 = vrot.slane %v2120, %v2127
    %v2130 = vunpack.c.l.s4 1934713408
    %v2131 = vunpack.c.0.s8 %v2130
    %v2132 = vlaneseq
    %v2133 = vshrl.u32 %v2132, 7
    %v2134 = vsub.s32 %v2131, %v2133
    %v2135 = vrot.slane %v2121, %v2134
    %v2136 = vcombine.high %v2112, 0.0
    %v2137 = vcombine.high %v2119, 0.0
    %v2138 = vcombine.high %v2128, 0.0
    %v2139 = vcombine.high %v2135, 0.0
    %v2140 = vcombine.low %v1929, %v2021
    %v2141 = vcombine.high %v1929, %v2021
    %v2143 = vunpack.c.l.s4 1983009808
    %v2144 = vunpack.c.0.s8 %v2143
    %v2145 = vlaneseq
    %v2146 = vshrl.u32 %v2145, 7
    %v2147 = vsub.s32 %v2144, %v2146
    %v2148 = vrot.slane %v2140, %v2147
    %v2150 = vunpack.c.l.s4 1983009808
    %v2151 = vunpack.c.0.s8 %v2150
    %v2152 = vlaneseq
    %v2153 = vshrl.u32 %v2152, 7
    %v2154 = vsub.s32 %v2151, %v2153
    %v2155 = vrot.slane %v2141, %v2154
    %v2156 = vcombine.low %v1975, %v2067
    %v2157 = vcombine.high %v1975, %v2067
    %v2159 = vunpack.c.l.s4 1983009808
    %v2160 = vunpack.c.0.s8 %v2159
    %v2161 = vlaneseq
    %v2162 = vshrl.u32 %v2161, 7
    %v2163 = vsub.s32 %v2160, %v2162
    %v2164 = vrot.slane %v2156, %v2163
    %v2166 = vunpack.c.l.s4 1983009808
    %v2167 = vunpack.c.0.s8 %v2166
    %v2168 = vlaneseq
    %v2169 = vshrl.u32 %v2168, 7
    %v2170 = vsub.s32 %v2167, %v2169
    %v2171 = vrot.slane %v2157, %v2170
    %v2172 = vcombine.low %v2148, %v2164
    %v2173 = vcombine.high %v2148, %v2164
    %v2175 = vunpack.c.l.s4 1934713408
    %v2176 = vunpack.c.0.s8 %v2175
    %v2177 = vlaneseq
    %v2178 = vshrl.u32 %v2177, 7
    %v2179 = vsub.s32 %v2176, %v2178
    %v2180 = vrot.slane %v2172, %v2179
    %v2182 = vunpack.c.l.s4 1934713408
    %v2183 = vunpack.c.0.s8 %v2182
    %v2184 = vlaneseq
    %v2185 = vshrl.u32 %v2184, 7
    %v2186 = vsub.s32 %v2183, %v2185
    %v2187 = vrot.slane %v2173, %v2186
    %v2188 = vcombine.low %v2155, %v2171
    %v2189 = vcombine.high %v2155, %v2171
    %v2191 = vunpack.c.l.s4 1934713408
    %v2192 = vunpack.c.0.s8 %v2191
    %v2193 = vlaneseq
    %v2194 = vshrl.u32 %v2193, 7
    %v2195 = vsub.s32 %v2192, %v2194
    %v2196 = vrot.slane %v2188, %v2195
    %v2198 = vunpack.c.l.s4 1934713408
    %v2199 = vunpack.c.0.s8 %v2198
    %v2200 = vlaneseq
    %v2201 = vshrl.u32 %v2200, 7
    %v2202 = vsub.s32 %v2199, %v2201
    %v2203 = vrot.slane %v2189, %v2202
    %v2204 = vcombine.high %v2180, 0.0
    %v2205 = vcombine.high %v2187, 0.0
    %v2206 = vcombine.high %v2196, 0.0
    %v2207 = vcombine.high %v2203, 0.0
    %v2208 = vcombine.low %v2112, %v2119
    %v2210 = vunpack.c.l.s4 1983009808
    %v2211 = vunpack.c.0.s8 %v2210
    %v2212 = vlaneseq
    %v2213 = vshrl.u32 %v2212, 7
    %v2214 = vsub.s32 %v2211, %v2213
    %v2215 = vrot.slane %v2208, %v2214
    %v2216 = vcombine.low %v2136, %v2137
    %v2218 = vunpack.c.l.s4 1983009808
    %v2219 = vunpack.c.0.s8 %v2218
    %v2220 = vlaneseq
    %v2221 = vshrl.u32 %v2220, 7
    %v2222 = vsub.s32 %v2219, %v2221
    %v2223 = vrot.slane %v2216, %v2222
    %v2224 = vcombine.low %v2128, %v2135
    %v2226 = vunpack.c.l.s4 1983009808
    %v2227 = vunpack.c.0.s8 %v2226
    %v2228 = vlaneseq
    %v2229 = vshrl.u32 %v2228, 7
    %v2230 = vsub.s32 %v2227, %v2229
    %v2231 = vrot.slane %v2224, %v2230
    %v2232 = vcombine.low %v2138, %v2139
    %v2234 = vunpack.c.l.s4 1983009808
    %v2235 = vunpack.c.0.s8 %v2234
    %v2236 = vlaneseq
    %v2237 = vshrl.u32 %v2236, 7
    %v2238 = vsub.s32 %v2235, %v2237
    %v2239 = vrot.slane %v2232, %v2238
    %v2240 = vcombine.low %v2215, %v2223
    %v2241 = vcombine.high %v2215, %v2223
    %v2243 = vunpack.c.l.s4 1934713408
    %v2244 = vunpack.c.0.s8 %v2243
    %v2245 = vlaneseq
    %v2246 = vshrl.u32 %v2245, 7
    %v2247 = vsub.s32 %v2244, %v2246
    %v2248 = vrot.slane %v2240, %v2247
    %v2250 = vunpack.c.l.s4 1934713408
    %v2251 = vunpack.c.0.s8 %v2250
    %v2252 = vlaneseq
    %v2253 = vshrl.u32 %v2252, 7
    %v2254 = vsub.s32 %v2251, %v2253
    %v2255 = vrot.slane %v2241, %v2254
    %v2256 = vcombine.low %v2231, %v2239
    %v2257 = vcombine.high %v2231, %v2239
    %v2259 = vunpack.c.l.s4 1934713408
    %v2260 = vunpack.c.0.s8 %v2259
    %v2261 = vlaneseq
    %v2262 = vshrl.u32 %v2261, 7
    %v2263 = vsub.s32 %v2260, %v2262
    %v2264 = vrot.slane %v2256, %v2263
    %v2266 = vunpack.c.l.s4 1934713408
    %v2267 = vunpack.c.0.s8 %v2266
    %v2268 = vlaneseq
    %v2269 = vshrl.u32 %v2268, 7
    %v2270 = vsub.s32 %v2267, %v2269
    %v2271 = vrot.slane %v2257, %v2270
    %v2272 = vcombine.low %v2248, %v2264
    %v2273 = vcombine.high %v2248, %v2264
    %v2274 = vcombine.low %v2255, %v2271
    %v2275 = vcombine.high %v2255, %v2271
    %v2276 = vcombine.low %v2180, %v2187
    %v2278 = vunpack.c.l.s4 1983009808
    %v2279 = vunpack.c.0.s8 %v2278
    %v2280 = vlaneseq
    %v2281 = vshrl.u32 %v2280, 7
    %v2282 = vsub.s32 %v2279, %v2281
    %v2283 = vrot.slane %v2276, %v2282
    %v2284 = vcombine.low %v2204, %v2205
    %v2286 = vunpack.c.l.s4 1983009808
    %v2287 = vunpack.c.0.s8 %v2286
    %v2288 = vlaneseq
    %v2289 = vshrl.u32 %v2288, 7
    %v2290 = vsub.s32 %v2287, %v2289
    %v2291 = vrot.slane %v2284, %v2290
    %v2292 = vcombine.low %v2196, %v2203
    %v2294 = vunpack.c.l.s4 1983009808
    %v2295 = vunpack.c.0.s8 %v2294
    %v2296 = vlaneseq
    %v2297 = vshrl.u32 %v2296, 7
    %v2298 = vsub.s32 %v2295, %v2297
    %v2299 = vrot.slane %v2292, %v2298
    %v2300 = vcombine.low %v2206, %v2207
    %v2302 = vunpack.c.l.s4 1983009808
    %v2303 = vunpack.c.0.s8 %v2302
    %v2304 = vlaneseq
    %v2305 = vshrl.u32 %v2304, 7
    %v2306 = vsub.s32 %v2303, %v2305
    %v2307 = vrot.slane %v2300, %v2306
    %v2308 = vcombine.low %v2283, %v2291
    %v2309 = vcombine.high %v2283, %v2291
    %v2311 = vunpack.c.l.s4 1934713408
    %v2312 = vunpack.c.0.s8 %v2311
    %v2313 = vlaneseq
    %v2314 = vshrl.u32 %v2313, 7
    %v2315 = vsub.s32 %v2312, %v2314
    %v2316 = vrot.slane %v2308, %v2315
    %v2318 = vunpack.c.l.s4 1934713408
    %v2319 = vunpack.c.0.s8 %v2318
    %v2320 = vlaneseq
    %v2321 = vshrl.u32 %v2320, 7
    %v2322 = vsub.s32 %v2319, %v2321
    %v2323 = vrot.slane %v2309, %v2322
    %v2324 = vcombine.low %v2299, %v2307
    %v2325 = vcombine.high %v2299, %v2307
    %v2327 = vunpack.c.l.s4 1934713408
    %v2328 = vunpack.c.0.s8 %v2327
    %v2329 = vlaneseq
    %v2330 = vshrl.u32 %v2329, 7
    %v2331 = vsub.s32 %v2328, %v2330
    %v2332 = vrot.slane %v2324, %v2331
    %v2334 = vunpack.c.l.s4 1934713408
    %v2335 = vunpack.c.0.s8 %v2334
    %v2336 = vlaneseq
    %v2337 = vshrl.u32 %v2336, 7
    %v2338 = vsub.s32 %v2335, %v2337
    %v2339 = vrot.slane %v2325, %v2338
    %v2340 = vcombine.low %v2316, %v2332
    %v2341 = vcombine.high %v2316, %v2332
    %v2342 = vcombine.low %v2323, %v2339
    %v2343 = vcombine.high %v2323, %v2339
    %2346 = vrot.lane.b32.xlu0 %v2273, 8
    %v2347 = vpop.permute.xlu0 %2346
    %2348 = vrot.lane.b32.xlu0 %v2341, 8
    %v2349 = vpop.permute.xlu0 %2348
    %2354 = vrot.lane.b32.xlu0 %v2274, 16
    %v2355 = vpop.permute.xlu0 %2354
    %2356 = vrot.lane.b32.xlu0 %v2342, 16
    %v2357 = vpop.permute.xlu0 %2356
    %2362 = vrot.lane.b32.xlu0 %v2275, 24
    %v2363 = vpop.permute.xlu0 %2362
    %2364 = vrot.lane.b32.xlu0 %v2343, 24
    %v2365 = vpop.permute.xlu0 %2364
    %v2368 = vsel %vm1222, %v2272, %v2347
    %v2369 = vsel %vm1222, %v2340, %v2349
    %vm2370 = vcmask 130048
    %v2371 = vsel %vm2370, %v2368, %v2355
    %v2372 = vsel %vm2370, %v2369, %v2357
    %vm2373 = vcmask 195584
    %v2374 = vsel %vm2373, %v2371, %v2363
    %v2375 = vsel %vm2373, %v2372, %v2365
    %v2376 = vpack.c.bf16 %v2375, %v2374
    %v2378 = vlaneseq
    %v2379 = vshrl.u32 %v2378, 7
    %v2380 = vsub.s32 0, %v2379
    %v2381 = vrot.slane %v182, %v2380
    %v2387 = vunpack.c.l.b16 %v178
    %v2388 = vunpack.c.l.b16 %v179
    %v2389 = vunpack.c.l.b16 %v180
    %v2390 = vunpack.c.l.b16 %v181
    %v2391 = vpack.c.b16 %v2388, %v2387
    %v2392 = vpack.c.b16 %v2390, %v2389
    %v2396 = vsel %vm253, %v2376, 0
    %2398 = vmatprep.subr.bf16.mxu0 0
    %2399 = vmatpush1.bf16.msra.mxu0 0
    %2400 = vmatprep.subr.bf16.mxu0 0
    %2401 = vmatpush1.bf16.msra.mxu0 0
    %2402 = vmatprep.subr.bf16.mxu0 0
    %2403 = vmatpush1.bf16.msra.mxu0 0
    %2404 = vmatprep.subr.bf16.mxu0 0
    %2405 = vmatpush1.bf16.msra.mxu0 0
    %2406 = vmatprep.subr.bf16.mxu0 0
    %2407 = vmatpush1.bf16.msra.mxu0 0
    %2408 = vmatprep.subr.bf16.mxu0 0
    %2409 = vmatpush1.bf16.msra.mxu0 0
    %2410 = vmatprep.subr.bf16.mxu0 0
    %2411 = vmatpush1.bf16.msra.mxu0 %v2392
    %2412 = vmatprep.subr.bf16.mxu0 0
    %2413 = vmatpush1.bf16.msra.mxu0 %v2391
    %2414 = vmatprep.subr.bf16.mxu0 0
    %2415 = vmatpush2.bf16.msra.mxu0 0
    %2416 = vmatprep.subr.bf16.mxu0 0
    %2417 = vmatpush2.bf16.msra.mxu0 0
    %2418 = vmatprep.subr.bf16.mxu0 0
    %2419 = vmatpush2.bf16.msra.mxu0 0
    %2420 = vmatprep.subr.bf16.mxu0 0
    %2421 = vmatpush2.bf16.msra.mxu0 0
    %2422 = vmatprep.subr.bf16.mxu0 0
    %2423 = vmatpush2.bf16.msra.mxu0 0
    %2424 = vmatprep.subr.bf16.mxu0 0
    %2425 = vmatpush2.bf16.msra.mxu0 0
    %2426 = vmatprep.subr.bf16.mxu0 0
    %2427 = vmatpush2.bf16.msra.mxu0 0
    %2428 = vmatprep.subr.bf16.mxu0 0
    %2429 = vmatpush2.bf16.msra.mxu0 0
    %2430 = vmatprep.mubr.bf16.mxu0 0
    %2431 = vmatmul.mubr.bf16.gmra.mxu0 %v2396
    %v2432 = vpop.f32.mrf.mxu0
    %v2433 = vadd.f32 %v2381, %v2432
    %v2434 = vpop.f32.mrf.mxu0
    %v2435 = vpop.f32.mrf.mxu0
    %v2436 = vadd.f32 %v2381, %v2435
    %v2437 = vpop.f32.mrf.mxu0
    %2438 = vdwg.mxu0
    %v2439 = vadd.f32 %v2433, %v165
    %v2440 = vadd.f32 %v2436, %v166
    %v2441 = vsel %vm253, %v2439, 0.0
    %2442 = vadd.xlane.f32.xlu0 %v2441
    %v2443 = vpop.xlane.xlu0 %2442
    %v2444 = vsel %vm253, %v2440, 0.0
    %2445 = vadd.xlane.f32.xlu0 %v2444
    %v2446 = vpop.xlane.xlu0 %2445
    %v2447 = vrcp.pop 32.0
    %v2448 = vmul.f32 %v2443, %v2447
    %v2449 = vmul.f32 %v2446, %v2447
    %v2450 = vsub.f32 %v2439, %v2448
    %v2451 = vsub.f32 %v2440, %v2449
    %v2452 = vmul.f32 %v2450, %v2450
    %v2453 = vmul.f32 %v2451, %v2451
    %v2454 = vsel %vm253, %v2452, 0.0
    %2455 = vadd.xlane.f32.xlu0 %v2454
    %v2456 = vpop.xlane.xlu0 %2455
    %v2457 = vsel %vm253, %v2453, 0.0
    %2458 = vadd.xlane.f32.xlu0 %v2457
    %v2459 = vpop.xlane.xlu0 %2458
    %v2460 = vmul.f32 %v2456, %v2447
    %v2461 = vmul.f32 %v2459, %v2447
    %v2462 = vadd.f32 %v2460, 1e-05
    %v2463 = vadd.f32 %v2461, 1e-05
    %v2464 = vrsqrt.pop %v2462
    %v2465 = vrsqrt.pop %v2463
    %v2466 = vmul.f32 %v2450, %v2464
    %v2467 = vmul.f32 %v2451, %v2465
    %v2469 = vlaneseq
    %v2470 = vshrl.u32 %v2469, 7
    %v2471 = vsub.s32 0, %v2470
    %v2472 = vrot.slane %v212, %v2471
    %v2474 = vmul.f32 %v2466, %v2472
    %v2475 = vmul.f32 %v2467, %v2472
    %v2477 = vlaneseq
    %v2478 = vshrl.u32 %v2477, 7
    %v2479 = vsub.s32 0, %v2478
    %v2480 = vrot.slane %v213, %v2479
    %v2482 = vadd.f32 %v2474, %v2480
    %v2483 = vadd.f32 %v2475, %v2480
    %v2484 = vpack.c.bf16 %v2483, %v2482
    %v2485 = vpack.c.bf16 %v168, %v167
    %v2487 = vlaneseq
    %v2488 = vshrl.u32 %v2487, 7
    %v2489 = vsub.s32 0, %v2488
    %v2490 = vrot.slane %v187, %v2489
    %v2496 = vunpack.c.l.b16 %v183
    %v2497 = vunpack.c.l.b16 %v184
    %v2498 = vunpack.c.l.b16 %v185
    %v2499 = vunpack.c.l.b16 %v186
    %v2500 = vpack.c.b16 %v2497, %v2496
    %v2501 = vpack.c.b16 %v2499, %v2498
    %v2505 = vsel %vm253, %v2484, 0
    %2507 = vmatprep.subr.bf16.mxu0 0
    %2508 = vmatpush1.bf16.msra.mxu0 0
    %2509 = vmatprep.subr.bf16.mxu0 0
    %2510 = vmatpush1.bf16.msra.mxu0 0
    %2511 = vmatprep.subr.bf16.mxu0 0
    %2512 = vmatpush1.bf16.msra.mxu0 0
    %2513 = vmatprep.subr.bf16.mxu0 0
    %2514 = vmatpush1.bf16.msra.mxu0 0
    %2515 = vmatprep.subr.bf16.mxu0 0
    %2516 = vmatpush1.bf16.msra.mxu0 0
    %2517 = vmatprep.subr.bf16.mxu0 0
    %2518 = vmatpush1.bf16.msra.mxu0 0
    %2519 = vmatprep.subr.bf16.mxu0 0
    %2520 = vmatpush1.bf16.msra.mxu0 %v2501
    %2521 = vmatprep.subr.bf16.mxu0 0
    %2522 = vmatpush1.bf16.msra.mxu0 %v2500
    %2523 = vmatprep.subr.bf16.mxu0 0
    %2524 = vmatpush2.bf16.msra.mxu0 0
    %2525 = vmatprep.subr.bf16.mxu0 0
    %2526 = vmatpush2.bf16.msra.mxu0 0
    %2527 = vmatprep.subr.bf16.mxu0 0
    %2528 = vmatpush2.bf16.msra.mxu0 0
    %2529 = vmatprep.subr.bf16.mxu0 0
    %2530 = vmatpush2.bf16.msra.mxu0 0
    %2531 = vmatprep.subr.bf16.mxu0 0
    %2532 = vmatpush2.bf16.msra.mxu0 0
    %2533 = vmatprep.subr.bf16.mxu0 0
    %2534 = vmatpush2.bf16.msra.mxu0 0
    %2535 = vmatprep.subr.bf16.mxu0 0
    %2536 = vmatpush2.bf16.msra.mxu0 0
    %2537 = vmatprep.subr.bf16.mxu0 0
    %2538 = vmatpush2.bf16.msra.mxu0 0
    %2539 = vmatprep.mubr.bf16.mxu0 0
    %2540 = vmatmul.mubr.bf16.gmra.mxu0 %v2505
    %v2541 = vpop.f32.mrf.mxu0
    %v2542 = vadd.f32 %v2490, %v2541
    %v2543 = vpop.f32.mrf.mxu0
    %v2544 = vpop.f32.mrf.mxu0
    %v2545 = vadd.f32 %v2490, %v2544
    %v2546 = vpop.f32.mrf.mxu0
    %2547 = vdwg.mxu0
    %v2549 = vlaneseq
    %v2550 = vshrl.u32 %v2549, 7
    %v2551 = vsub.s32 0, %v2550
    %v2552 = vrot.slane %v192, %v2551
    %v2558 = vunpack.c.l.b16 %v188
    %v2559 = vunpack.c.l.b16 %v189
    %v2560 = vunpack.c.l.b16 %v190
    %v2561 = vunpack.c.l.b16 %v191
    %v2562 = vpack.c.b16 %v2559, %v2558
    %v2563 = vpack.c.b16 %v2561, %v2560
    %v2567 = vsel %vm253, %v2485, 0
    %2569 = vmatprep.subr.bf16.mxu0 0
    %2570 = vmatpush1.bf16.msra.mxu0 0
    %2571 = vmatprep.subr.bf16.mxu0 0
    %2572 = vmatpush1.bf16.msra.mxu0 0
    %2573 = vmatprep.subr.bf16.mxu0 0
    %2574 = vmatpush1.bf16.msra.mxu0 0
    %2575 = vmatprep.subr.bf16.mxu0 0
    %2576 = vmatpush1.bf16.msra.mxu0 0
    %2577 = vmatprep.subr.bf16.mxu0 0
    %2578 = vmatpush1.bf16.msra.mxu0 0
    %2579 = vmatprep.subr.bf16.mxu0 0
    %2580 = vmatpush1.bf16.msra.mxu0 0
    %2581 = vmatprep.subr.bf16.mxu0 0
    %2582 = vmatpush1.bf16.msra.mxu0 %v2563
    %2583 = vmatprep.subr.bf16.mxu0 0
    %2584 = vmatpush1.bf16.msra.mxu0 %v2562
    %2585 = vmatprep.subr.bf16.mxu0 0
    %2586 = vmatpush2.bf16.msra.mxu0 0
    %2587 = vmatprep.subr.bf16.mxu0 0
    %2588 = vmatpush2.bf16.msra.mxu0 0
    %2589 = vmatprep.subr.bf16.mxu0 0
    %2590 = vmatpush2.bf16.msra.mxu0 0
    %2591 = vmatprep.subr.bf16.mxu0 0
    %2592 = vmatpush2.bf16.msra.mxu0 0
    %2593 = vmatprep.subr.bf16.mxu0 0
    %2594 = vmatpush2.bf16.msra.mxu0 0
    %2595 = vmatprep.subr.bf16.mxu0 0
    %2596 = vmatpush2.bf16.msra.mxu0 0
    %2597 = vmatprep.subr.bf16.mxu0 0
    %2598 = vmatpush2.bf16.msra.mxu0 0
    %2599 = vmatprep.subr.bf16.mxu0 0
    %2600 = vmatpush2.bf16.msra.mxu0 0
    %2601 = vmatprep.mubr.bf16.mxu0 0
    %2602 = vmatmul.mubr.bf16.gmra.mxu0 %v2567
    %v2603 = vpop.f32.mrf.mxu0
    %v2604 = vadd.f32 %v2552, %v2603
    %v2605 = vpop.f32.mrf.mxu0
    %v2606 = vpop.f32.mrf.mxu0
    %v2607 = vadd.f32 %v2552, %v2606
    %v2608 = vpop.f32.mrf.mxu0
    %2609 = vdwg.mxu0
    %v2610 = vmul.f32 %v2542, 0.35355338
    %v2611 = vmul.f32 %v2545, 0.35355338
    %2614 = vrot.lane.b32.xlu0 %v2610, 120
    %v2615 = vpop.permute.xlu0 %2614
    %2616 = vrot.lane.b32.xlu0 %v2611, 120
    %v2617 = vpop.permute.xlu0 %2616
    %2620 = vrot.lane.b32.xlu0 %v2610, 112
    %v2621 = vpop.permute.xlu0 %2620
    %2622 = vrot.lane.b32.xlu0 %v2611, 112
    %v2623 = vpop.permute.xlu0 %2622
    %2626 = vrot.lane.b32.xlu0 %v2610, 104
    %v2627 = vpop.permute.xlu0 %2626
    %2628 = vrot.lane.b32.xlu0 %v2611, 104
    %v2629 = vpop.permute.xlu0 %2628
    %v2632 = vcombine.low %v2610, %v2621
    %v2633 = vcombine.high %v2610, %v2621
    %v2635 = vunpack.c.l.s4 1983009808
    %v2636 = vunpack.c.0.s8 %v2635
    %v2637 = vlaneseq
    %v2638 = vshrl.u32 %v2637, 7
    %v2639 = vsub.s32 %v2636, %v2638
    %v2640 = vrot.slane %v2632, %v2639
    %v2642 = vunpack.c.l.s4 1983009808
    %v2643 = vunpack.c.0.s8 %v2642
    %v2644 = vlaneseq
    %v2645 = vshrl.u32 %v2644, 7
    %v2646 = vsub.s32 %v2643, %v2645
    %v2647 = vrot.slane %v2633, %v2646
    %v2648 = vcombine.low %v2615, %v2627
    %v2649 = vcombine.high %v2615, %v2627
    %v2651 = vunpack.c.l.s4 1983009808
    %v2652 = vunpack.c.0.s8 %v2651
    %v2653 = vlaneseq
    %v2654 = vshrl.u32 %v2653, 7
    %v2655 = vsub.s32 %v2652, %v2654
    %v2656 = vrot.slane %v2648, %v2655
    %v2658 = vunpack.c.l.s4 1983009808
    %v2659 = vunpack.c.0.s8 %v2658
    %v2660 = vlaneseq
    %v2661 = vshrl.u32 %v2660, 7
    %v2662 = vsub.s32 %v2659, %v2661
    %v2663 = vrot.slane %v2649, %v2662
    %v2664 = vcombine.low %v2640, %v2656
    %v2665 = vcombine.high %v2640, %v2656
    %v2667 = vunpack.c.l.s4 1934713408
    %v2668 = vunpack.c.0.s8 %v2667
    %v2669 = vlaneseq
    %v2670 = vshrl.u32 %v2669, 7
    %v2671 = vsub.s32 %v2668, %v2670
    %v2672 = vrot.slane %v2664, %v2671
    %v2674 = vunpack.c.l.s4 1934713408
    %v2675 = vunpack.c.0.s8 %v2674
    %v2676 = vlaneseq
    %v2677 = vshrl.u32 %v2676, 7
    %v2678 = vsub.s32 %v2675, %v2677
    %v2679 = vrot.slane %v2665, %v2678
    %v2680 = vcombine.low %v2647, %v2663
    %v2681 = vcombine.high %v2647, %v2663
    %v2683 = vunpack.c.l.s4 1934713408
    %v2684 = vunpack.c.0.s8 %v2683
    %v2685 = vlaneseq
    %v2686 = vshrl.u32 %v2685, 7
    %v2687 = vsub.s32 %v2684, %v2686
    %v2688 = vrot.slane %v2680, %v2687
    %v2690 = vunpack.c.l.s4 1934713408
    %v2691 = vunpack.c.0.s8 %v2690
    %v2692 = vlaneseq
    %v2693 = vshrl.u32 %v2692, 7
    %v2694 = vsub.s32 %v2691, %v2693
    %v2695 = vrot.slane %v2681, %v2694
    %v2696 = vcombine.high %v2672, 0.0
    %v2697 = vcombine.high %v2679, 0.0
    %v2698 = vcombine.high %v2688, 0.0
    %v2699 = vcombine.high %v2695, 0.0
    %v2700 = vcombine.low %v2611, %v2623
    %v2701 = vcombine.high %v2611, %v2623
    %v2703 = vunpack.c.l.s4 1983009808
    %v2704 = vunpack.c.0.s8 %v2703
    %v2705 = vlaneseq
    %v2706 = vshrl.u32 %v2705, 7
    %v2707 = vsub.s32 %v2704, %v2706
    %v2708 = vrot.slane %v2700, %v2707
    %v2710 = vunpack.c.l.s4 1983009808
    %v2711 = vunpack.c.0.s8 %v2710
    %v2712 = vlaneseq
    %v2713 = vshrl.u32 %v2712, 7
    %v2714 = vsub.s32 %v2711, %v2713
    %v2715 = vrot.slane %v2701, %v2714
    %v2716 = vcombine.low %v2617, %v2629
    %v2717 = vcombine.high %v2617, %v2629
    %v2719 = vunpack.c.l.s4 1983009808
    %v2720 = vunpack.c.0.s8 %v2719
    %v2721 = vlaneseq
    %v2722 = vshrl.u32 %v2721, 7
    %v2723 = vsub.s32 %v2720, %v2722
    %v2724 = vrot.slane %v2716, %v2723
    %v2726 = vunpack.c.l.s4 1983009808
    %v2727 = vunpack.c.0.s8 %v2726
    %v2728 = vlaneseq
    %v2729 = vshrl.u32 %v2728, 7
    %v2730 = vsub.s32 %v2727, %v2729
    %v2731 = vrot.slane %v2717, %v2730
    %v2732 = vcombine.low %v2708, %v2724
    %v2733 = vcombine.high %v2708, %v2724
    %v2735 = vunpack.c.l.s4 1934713408
    %v2736 = vunpack.c.0.s8 %v2735
    %v2737 = vlaneseq
    %v2738 = vshrl.u32 %v2737, 7
    %v2739 = vsub.s32 %v2736, %v2738
    %v2740 = vrot.slane %v2732, %v2739
    %v2742 = vunpack.c.l.s4 1934713408
    %v2743 = vunpack.c.0.s8 %v2742
    %v2744 = vlaneseq
    %v2745 = vshrl.u32 %v2744, 7
    %v2746 = vsub.s32 %v2743, %v2745
    %v2747 = vrot.slane %v2733, %v2746
    %v2748 = vcombine.low %v2715, %v2731
    %v2749 = vcombine.high %v2715, %v2731
    %v2751 = vunpack.c.l.s4 1934713408
    %v2752 = vunpack.c.0.s8 %v2751
    %v2753 = vlaneseq
    %v2754 = vshrl.u32 %v2753, 7
    %v2755 = vsub.s32 %v2752, %v2754
    %v2756 = vrot.slane %v2748, %v2755
    %v2758 = vunpack.c.l.s4 1934713408
    %v2759 = vunpack.c.0.s8 %v2758
    %v2760 = vlaneseq
    %v2761 = vshrl.u32 %v2760, 7
    %v2762 = vsub.s32 %v2759, %v2761
    %v2763 = vrot.slane %v2749, %v2762
    %v2764 = vcombine.high %v2740, 0.0
    %v2765 = vcombine.high %v2747, 0.0
    %v2766 = vcombine.high %v2756, 0.0
    %v2767 = vcombine.high %v2763, 0.0
    %v2768 = vcombine.low %v2672, %v2679
    %v2770 = vunpack.c.l.s4 1983009808
    %v2771 = vunpack.c.0.s8 %v2770
    %v2772 = vlaneseq
    %v2773 = vshrl.u32 %v2772, 7
    %v2774 = vsub.s32 %v2771, %v2773
    %v2775 = vrot.slane %v2768, %v2774
    %v2776 = vcombine.low %v2696, %v2697
    %v2778 = vunpack.c.l.s4 1983009808
    %v2779 = vunpack.c.0.s8 %v2778
    %v2780 = vlaneseq
    %v2781 = vshrl.u32 %v2780, 7
    %v2782 = vsub.s32 %v2779, %v2781
    %v2783 = vrot.slane %v2776, %v2782
    %v2784 = vcombine.low %v2688, %v2695
    %v2786 = vunpack.c.l.s4 1983009808
    %v2787 = vunpack.c.0.s8 %v2786
    %v2788 = vlaneseq
    %v2789 = vshrl.u32 %v2788, 7
    %v2790 = vsub.s32 %v2787, %v2789
    %v2791 = vrot.slane %v2784, %v2790
    %v2792 = vcombine.low %v2698, %v2699
    %v2794 = vunpack.c.l.s4 1983009808
    %v2795 = vunpack.c.0.s8 %v2794
    %v2796 = vlaneseq
    %v2797 = vshrl.u32 %v2796, 7
    %v2798 = vsub.s32 %v2795, %v2797
    %v2799 = vrot.slane %v2792, %v2798
    %v2800 = vcombine.low %v2775, %v2783
    %v2801 = vcombine.high %v2775, %v2783
    %v2803 = vunpack.c.l.s4 1934713408
    %v2804 = vunpack.c.0.s8 %v2803
    %v2805 = vlaneseq
    %v2806 = vshrl.u32 %v2805, 7
    %v2807 = vsub.s32 %v2804, %v2806
    %v2808 = vrot.slane %v2800, %v2807
    %v2810 = vunpack.c.l.s4 1934713408
    %v2811 = vunpack.c.0.s8 %v2810
    %v2812 = vlaneseq
    %v2813 = vshrl.u32 %v2812, 7
    %v2814 = vsub.s32 %v2811, %v2813
    %v2815 = vrot.slane %v2801, %v2814
    %v2816 = vcombine.low %v2791, %v2799
    %v2817 = vcombine.high %v2791, %v2799
    %v2819 = vunpack.c.l.s4 1934713408
    %v2820 = vunpack.c.0.s8 %v2819
    %v2821 = vlaneseq
    %v2822 = vshrl.u32 %v2821, 7
    %v2823 = vsub.s32 %v2820, %v2822
    %v2824 = vrot.slane %v2816, %v2823
    %v2826 = vunpack.c.l.s4 1934713408
    %v2827 = vunpack.c.0.s8 %v2826
    %v2828 = vlaneseq
    %v2829 = vshrl.u32 %v2828, 7
    %v2830 = vsub.s32 %v2827, %v2829
    %v2831 = vrot.slane %v2817, %v2830
    %v2832 = vcombine.low %v2808, %v2824
    %v2833 = vcombine.high %v2808, %v2824
    %v2834 = vcombine.low %v2815, %v2831
    %v2835 = vcombine.high %v2815, %v2831
    %v2836 = vcombine.low %v2740, %v2747
    %v2838 = vunpack.c.l.s4 1983009808
    %v2839 = vunpack.c.0.s8 %v2838
    %v2840 = vlaneseq
    %v2841 = vshrl.u32 %v2840, 7
    %v2842 = vsub.s32 %v2839, %v2841
    %v2843 = vrot.slane %v2836, %v2842
    %v2844 = vcombine.low %v2764, %v2765
    %v2846 = vunpack.c.l.s4 1983009808
    %v2847 = vunpack.c.0.s8 %v2846
    %v2848 = vlaneseq
    %v2849 = vshrl.u32 %v2848, 7
    %v2850 = vsub.s32 %v2847, %v2849
    %v2851 = vrot.slane %v2844, %v2850
    %v2852 = vcombine.low %v2756, %v2763
    %v2854 = vunpack.c.l.s4 1983009808
    %v2855 = vunpack.c.0.s8 %v2854
    %v2856 = vlaneseq
    %v2857 = vshrl.u32 %v2856, 7
    %v2858 = vsub.s32 %v2855, %v2857
    %v2859 = vrot.slane %v2852, %v2858
    %v2860 = vcombine.low %v2766, %v2767
    %v2862 = vunpack.c.l.s4 1983009808
    %v2863 = vunpack.c.0.s8 %v2862
    %v2864 = vlaneseq
    %v2865 = vshrl.u32 %v2864, 7
    %v2866 = vsub.s32 %v2863, %v2865
    %v2867 = vrot.slane %v2860, %v2866
    %v2868 = vcombine.low %v2843, %v2851
    %v2869 = vcombine.high %v2843, %v2851
    %v2871 = vunpack.c.l.s4 1934713408
    %v2872 = vunpack.c.0.s8 %v2871
    %v2873 = vlaneseq
    %v2874 = vshrl.u32 %v2873, 7
    %v2875 = vsub.s32 %v2872, %v2874
    %v2876 = vrot.slane %v2868, %v2875
    %v2878 = vunpack.c.l.s4 1934713408
    %v2879 = vunpack.c.0.s8 %v2878
    %v2880 = vlaneseq
    %v2881 = vshrl.u32 %v2880, 7
    %v2882 = vsub.s32 %v2879, %v2881
    %v2883 = vrot.slane %v2869, %v2882
    %v2884 = vcombine.low %v2859, %v2867
    %v2885 = vcombine.high %v2859, %v2867
    %v2887 = vunpack.c.l.s4 1934713408
    %v2888 = vunpack.c.0.s8 %v2887
    %v2889 = vlaneseq
    %v2890 = vshrl.u32 %v2889, 7
    %v2891 = vsub.s32 %v2888, %v2890
    %v2892 = vrot.slane %v2884, %v2891
    %v2894 = vunpack.c.l.s4 1934713408
    %v2895 = vunpack.c.0.s8 %v2894
    %v2896 = vlaneseq
    %v2897 = vshrl.u32 %v2896, 7
    %v2898 = vsub.s32 %v2895, %v2897
    %v2899 = vrot.slane %v2885, %v2898
    %v2900 = vcombine.low %v2876, %v2892
    %v2901 = vcombine.high %v2876, %v2892
    %v2902 = vcombine.low %v2883, %v2899
    %v2903 = vcombine.high %v2883, %v2899
    %v2904 = vpack.c.bf16 %v2832, %v2832
    %v2905 = vpack.c.bf16 %v2833, %v2833
    %v2906 = vpack.c.bf16 %v2834, %v2834
    %v2907 = vpack.c.bf16 %v2835, %v2835
    %v2908 = vpack.c.bf16 %v2900, %v2900
    %v2909 = vpack.c.bf16 %v2901, %v2901
    %v2910 = vpack.c.bf16 %v2902, %v2902
    %v2911 = vpack.c.bf16 %v2903, %v2903
    %2914 = vrot.lane.b32.xlu0 %v2604, 120
    %v2915 = vpop.permute.xlu0 %2914
    %2916 = vrot.lane.b32.xlu0 %v2607, 120
    %v2917 = vpop.permute.xlu0 %2916
    %2920 = vrot.lane.b32.xlu0 %v2604, 112
    %v2921 = vpop.permute.xlu0 %2920
    %2922 = vrot.lane.b32.xlu0 %v2607, 112
    %v2923 = vpop.permute.xlu0 %2922
    %2926 = vrot.lane.b32.xlu0 %v2604, 104
    %v2927 = vpop.permute.xlu0 %2926
    %2928 = vrot.lane.b32.xlu0 %v2607, 104
    %v2929 = vpop.permute.xlu0 %2928
    %v2932 = vcombine.low %v2604, %v2921
    %v2933 = vcombine.high %v2604, %v2921
    %v2935 = vunpack.c.l.s4 1983009808
    %v2936 = vunpack.c.0.s8 %v2935
    %v2937 = vlaneseq
    %v2938 = vshrl.u32 %v2937, 7
    %v2939 = vsub.s32 %v2936, %v2938
    %v2940 = vrot.slane %v2932, %v2939
    %v2942 = vunpack.c.l.s4 1983009808
    %v2943 = vunpack.c.0.s8 %v2942
    %v2944 = vlaneseq
    %v2945 = vshrl.u32 %v2944, 7
    %v2946 = vsub.s32 %v2943, %v2945
    %v2947 = vrot.slane %v2933, %v2946
    %v2948 = vcombine.low %v2915, %v2927
    %v2949 = vcombine.high %v2915, %v2927
    %v2951 = vunpack.c.l.s4 1983009808
    %v2952 = vunpack.c.0.s8 %v2951
    %v2953 = vlaneseq
    %v2954 = vshrl.u32 %v2953, 7
    %v2955 = vsub.s32 %v2952, %v2954
    %v2956 = vrot.slane %v2948, %v2955
    %v2958 = vunpack.c.l.s4 1983009808
    %v2959 = vunpack.c.0.s8 %v2958
    %v2960 = vlaneseq
    %v2961 = vshrl.u32 %v2960, 7
    %v2962 = vsub.s32 %v2959, %v2961
    %v2963 = vrot.slane %v2949, %v2962
    %v2964 = vcombine.low %v2940, %v2956
    %v2965 = vcombine.high %v2940, %v2956
    %v2967 = vunpack.c.l.s4 1934713408
    %v2968 = vunpack.c.0.s8 %v2967
    %v2969 = vlaneseq
    %v2970 = vshrl.u32 %v2969, 7
    %v2971 = vsub.s32 %v2968, %v2970
    %v2972 = vrot.slane %v2964, %v2971
    %v2974 = vunpack.c.l.s4 1934713408
    %v2975 = vunpack.c.0.s8 %v2974
    %v2976 = vlaneseq
    %v2977 = vshrl.u32 %v2976, 7
    %v2978 = vsub.s32 %v2975, %v2977
    %v2979 = vrot.slane %v2965, %v2978
    %v2980 = vcombine.low %v2947, %v2963
    %v2981 = vcombine.high %v2947, %v2963
    %v2983 = vunpack.c.l.s4 1934713408
    %v2984 = vunpack.c.0.s8 %v2983
    %v2985 = vlaneseq
    %v2986 = vshrl.u32 %v2985, 7
    %v2987 = vsub.s32 %v2984, %v2986
    %v2988 = vrot.slane %v2980, %v2987
    %v2990 = vunpack.c.l.s4 1934713408
    %v2991 = vunpack.c.0.s8 %v2990
    %v2992 = vlaneseq
    %v2993 = vshrl.u32 %v2992, 7
    %v2994 = vsub.s32 %v2991, %v2993
    %v2995 = vrot.slane %v2981, %v2994
    %v2996 = vcombine.high %v2972, 0.0
    %v2997 = vcombine.high %v2979, 0.0
    %v2998 = vcombine.high %v2988, 0.0
    %v2999 = vcombine.high %v2995, 0.0
    %v3000 = vcombine.low %v2607, %v2923
    %v3001 = vcombine.high %v2607, %v2923
    %v3003 = vunpack.c.l.s4 1983009808
    %v3004 = vunpack.c.0.s8 %v3003
    %v3005 = vlaneseq
    %v3006 = vshrl.u32 %v3005, 7
    %v3007 = vsub.s32 %v3004, %v3006
    %v3008 = vrot.slane %v3000, %v3007
    %v3010 = vunpack.c.l.s4 1983009808
    %v3011 = vunpack.c.0.s8 %v3010
    %v3012 = vlaneseq
    %v3013 = vshrl.u32 %v3012, 7
    %v3014 = vsub.s32 %v3011, %v3013
    %v3015 = vrot.slane %v3001, %v3014
    %v3016 = vcombine.low %v2917, %v2929
    %v3017 = vcombine.high %v2917, %v2929
    %v3019 = vunpack.c.l.s4 1983009808
    %v3020 = vunpack.c.0.s8 %v3019
    %v3021 = vlaneseq
    %v3022 = vshrl.u32 %v3021, 7
    %v3023 = vsub.s32 %v3020, %v3022
    %v3024 = vrot.slane %v3016, %v3023
    %v3026 = vunpack.c.l.s4 1983009808
    %v3027 = vunpack.c.0.s8 %v3026
    %v3028 = vlaneseq
    %v3029 = vshrl.u32 %v3028, 7
    %v3030 = vsub.s32 %v3027, %v3029
    %v3031 = vrot.slane %v3017, %v3030
    %v3032 = vcombine.low %v3008, %v3024
    %v3033 = vcombine.high %v3008, %v3024
    %v3035 = vunpack.c.l.s4 1934713408
    %v3036 = vunpack.c.0.s8 %v3035
    %v3037 = vlaneseq
    %v3038 = vshrl.u32 %v3037, 7
    %v3039 = vsub.s32 %v3036, %v3038
    %v3040 = vrot.slane %v3032, %v3039
    %v3042 = vunpack.c.l.s4 1934713408
    %v3043 = vunpack.c.0.s8 %v3042
    %v3044 = vlaneseq
    %v3045 = vshrl.u32 %v3044, 7
    %v3046 = vsub.s32 %v3043, %v3045
    %v3047 = vrot.slane %v3033, %v3046
    %v3048 = vcombine.low %v3015, %v3031
    %v3049 = vcombine.high %v3015, %v3031
    %v3051 = vunpack.c.l.s4 1934713408
    %v3052 = vunpack.c.0.s8 %v3051
    %v3053 = vlaneseq
    %v3054 = vshrl.u32 %v3053, 7
    %v3055 = vsub.s32 %v3052, %v3054
    %v3056 = vrot.slane %v3048, %v3055
    %v3058 = vunpack.c.l.s4 1934713408
    %v3059 = vunpack.c.0.s8 %v3058
    %v3060 = vlaneseq
    %v3061 = vshrl.u32 %v3060, 7
    %v3062 = vsub.s32 %v3059, %v3061
    %v3063 = vrot.slane %v3049, %v3062
    %v3064 = vcombine.high %v3040, 0.0
    %v3065 = vcombine.high %v3047, 0.0
    %v3066 = vcombine.high %v3056, 0.0
    %v3067 = vcombine.high %v3063, 0.0
    %v3068 = vcombine.low %v2972, %v2979
    %v3070 = vunpack.c.l.s4 1983009808
    %v3071 = vunpack.c.0.s8 %v3070
    %v3072 = vlaneseq
    %v3073 = vshrl.u32 %v3072, 7
    %v3074 = vsub.s32 %v3071, %v3073
    %v3075 = vrot.slane %v3068, %v3074
    %v3076 = vcombine.low %v2996, %v2997
    %v3078 = vunpack.c.l.s4 1983009808
    %v3079 = vunpack.c.0.s8 %v3078
    %v3080 = vlaneseq
    %v3081 = vshrl.u32 %v3080, 7
    %v3082 = vsub.s32 %v3079, %v3081
    %v3083 = vrot.slane %v3076, %v3082
    %v3084 = vcombine.low %v2988, %v2995
    %v3086 = vunpack.c.l.s4 1983009808
    %v3087 = vunpack.c.0.s8 %v3086
    %v3088 = vlaneseq
    %v3089 = vshrl.u32 %v3088, 7
    %v3090 = vsub.s32 %v3087, %v3089
    %v3091 = vrot.slane %v3084, %v3090
    %v3092 = vcombine.low %v2998, %v2999
    %v3094 = vunpack.c.l.s4 1983009808
    %v3095 = vunpack.c.0.s8 %v3094
    %v3096 = vlaneseq
    %v3097 = vshrl.u32 %v3096, 7
    %v3098 = vsub.s32 %v3095, %v3097
    %v3099 = vrot.slane %v3092, %v3098
    %v3100 = vcombine.low %v3075, %v3083
    %v3101 = vcombine.high %v3075, %v3083
    %v3103 = vunpack.c.l.s4 1934713408
    %v3104 = vunpack.c.0.s8 %v3103
    %v3105 = vlaneseq
    %v3106 = vshrl.u32 %v3105, 7
    %v3107 = vsub.s32 %v3104, %v3106
    %v3108 = vrot.slane %v3100, %v3107
    %v3110 = vunpack.c.l.s4 1934713408
    %v3111 = vunpack.c.0.s8 %v3110
    %v3112 = vlaneseq
    %v3113 = vshrl.u32 %v3112, 7
    %v3114 = vsub.s32 %v3111, %v3113
    %v3115 = vrot.slane %v3101, %v3114
    %v3116 = vcombine.low %v3091, %v3099
    %v3117 = vcombine.high %v3091, %v3099
    %v3119 = vunpack.c.l.s4 1934713408
    %v3120 = vunpack.c.0.s8 %v3119
    %v3121 = vlaneseq
    %v3122 = vshrl.u32 %v3121, 7
    %v3123 = vsub.s32 %v3120, %v3122
    %v3124 = vrot.slane %v3116, %v3123
    %v3126 = vunpack.c.l.s4 1934713408
    %v3127 = vunpack.c.0.s8 %v3126
    %v3128 = vlaneseq
    %v3129 = vshrl.u32 %v3128, 7
    %v3130 = vsub.s32 %v3127, %v3129
    %v3131 = vrot.slane %v3117, %v3130
    %v3132 = vcombine.low %v3108, %v3124
    %v3133 = vcombine.high %v3108, %v3124
    %v3134 = vcombine.low %v3115, %v3131
    %v3135 = vcombine.high %v3115, %v3131
    %v3136 = vcombine.low %v3040, %v3047
    %v3138 = vunpack.c.l.s4 1983009808
    %v3139 = vunpack.c.0.s8 %v3138
    %v3140 = vlaneseq
    %v3141 = vshrl.u32 %v3140, 7
    %v3142 = vsub.s32 %v3139, %v3141
    %v3143 = vrot.slane %v3136, %v3142
    %v3144 = vcombine.low %v3064, %v3065
    %v3146 = vunpack.c.l.s4 1983009808
    %v3147 = vunpack.c.0.s8 %v3146
    %v3148 = vlaneseq
    %v3149 = vshrl.u32 %v3148, 7
    %v3150 = vsub.s32 %v3147, %v3149
    %v3151 = vrot.slane %v3144, %v3150
    %v3152 = vcombine.low %v3056, %v3063
    %v3154 = vunpack.c.l.s4 1983009808
    %v3155 = vunpack.c.0.s8 %v3154
    %v3156 = vlaneseq
    %v3157 = vshrl.u32 %v3156, 7
    %v3158 = vsub.s32 %v3155, %v3157
    %v3159 = vrot.slane %v3152, %v3158
    %v3160 = vcombine.low %v3066, %v3067
    %v3162 = vunpack.c.l.s4 1983009808
    %v3163 = vunpack.c.0.s8 %v3162
    %v3164 = vlaneseq
    %v3165 = vshrl.u32 %v3164, 7
    %v3166 = vsub.s32 %v3163, %v3165
    %v3167 = vrot.slane %v3160, %v3166
    %v3168 = vcombine.low %v3143, %v3151
    %v3169 = vcombine.high %v3143, %v3151
    %v3171 = vunpack.c.l.s4 1934713408
    %v3172 = vunpack.c.0.s8 %v3171
    %v3173 = vlaneseq
    %v3174 = vshrl.u32 %v3173, 7
    %v3175 = vsub.s32 %v3172, %v3174
    %v3176 = vrot.slane %v3168, %v3175
    %v3178 = vunpack.c.l.s4 1934713408
    %v3179 = vunpack.c.0.s8 %v3178
    %v3180 = vlaneseq
    %v3181 = vshrl.u32 %v3180, 7
    %v3182 = vsub.s32 %v3179, %v3181
    %v3183 = vrot.slane %v3169, %v3182
    %v3184 = vcombine.low %v3159, %v3167
    %v3185 = vcombine.high %v3159, %v3167
    %v3187 = vunpack.c.l.s4 1934713408
    %v3188 = vunpack.c.0.s8 %v3187
    %v3189 = vlaneseq
    %v3190 = vshrl.u32 %v3189, 7
    %v3191 = vsub.s32 %v3188, %v3190
    %v3192 = vrot.slane %v3184, %v3191
    %v3194 = vunpack.c.l.s4 1934713408
    %v3195 = vunpack.c.0.s8 %v3194
    %v3196 = vlaneseq
    %v3197 = vshrl.u32 %v3196, 7
    %v3198 = vsub.s32 %v3195, %v3197
    %v3199 = vrot.slane %v3185, %v3198
    %v3200 = vcombine.low %v3176, %v3192
    %v3201 = vcombine.high %v3176, %v3192
    %v3202 = vcombine.low %v3183, %v3199
    %v3203 = vcombine.high %v3183, %v3199
    %v3204 = vpack.c.bf16 %v3132, %v3132
    %v3205 = vpack.c.bf16 %v3133, %v3133
    %v3206 = vpack.c.bf16 %v3134, %v3134
    %v3207 = vpack.c.bf16 %v3135, %v3135
    %v3208 = vpack.c.bf16 %v3200, %v3200
    %v3209 = vpack.c.bf16 %v3201, %v3201
    %v3210 = vpack.c.bf16 %v3202, %v3202
    %v3211 = vpack.c.bf16 %v3203, %v3203
    %3212 = vrot.lane.b32.xlu0 %v2604, 96
    %v3213 = vpop.permute.xlu0 %3212
    %3214 = vrot.lane.b32.xlu0 %v2607, 96
    %v3215 = vpop.permute.xlu0 %3214
    %3216 = vrot.lane.b32.xlu0 %v2915, 96
    %v3217 = vpop.permute.xlu0 %3216
    %3218 = vrot.lane.b32.xlu0 %v2917, 96
    %v3219 = vpop.permute.xlu0 %3218
    %3220 = vrot.lane.b32.xlu0 %v2921, 96
    %v3221 = vpop.permute.xlu0 %3220
    %3222 = vrot.lane.b32.xlu0 %v2923, 96
    %v3223 = vpop.permute.xlu0 %3222
    %3224 = vrot.lane.b32.xlu0 %v2927, 96
    %v3225 = vpop.permute.xlu0 %3224
    %3226 = vrot.lane.b32.xlu0 %v2929, 96
    %v3227 = vpop.permute.xlu0 %3226
    %v3236 = vcombine.low %v3213, %v3221
    %v3237 = vcombine.high %v3213, %v3221
    %v3239 = vunpack.c.l.s4 1983009808
    %v3240 = vunpack.c.0.s8 %v3239
    %v3241 = vlaneseq
    %v3242 = vshrl.u32 %v3241, 7
    %v3243 = vsub.s32 %v3240, %v3242
    %v3244 = vrot.slane %v3236, %v3243
    %v3246 = vunpack.c.l.s4 1983009808
    %v3247 = vunpack.c.0.s8 %v3246
    %v3248 = vlaneseq
    %v3249 = vshrl.u32 %v3248, 7
    %v3250 = vsub.s32 %v3247, %v3249
    %v3251 = vrot.slane %v3237, %v3250
    %v3252 = vcombine.low %v3217, %v3225
    %v3253 = vcombine.high %v3217, %v3225
    %v3255 = vunpack.c.l.s4 1983009808
    %v3256 = vunpack.c.0.s8 %v3255
    %v3257 = vlaneseq
    %v3258 = vshrl.u32 %v3257, 7
    %v3259 = vsub.s32 %v3256, %v3258
    %v3260 = vrot.slane %v3252, %v3259
    %v3262 = vunpack.c.l.s4 1983009808
    %v3263 = vunpack.c.0.s8 %v3262
    %v3264 = vlaneseq
    %v3265 = vshrl.u32 %v3264, 7
    %v3266 = vsub.s32 %v3263, %v3265
    %v3267 = vrot.slane %v3253, %v3266
    %v3268 = vcombine.low %v3244, %v3260
    %v3269 = vcombine.high %v3244, %v3260
    %v3271 = vunpack.c.l.s4 1934713408
    %v3272 = vunpack.c.0.s8 %v3271
    %v3273 = vlaneseq
    %v3274 = vshrl.u32 %v3273, 7
    %v3275 = vsub.s32 %v3272, %v3274
    %v3276 = vrot.slane %v3268, %v3275
    %v3278 = vunpack.c.l.s4 1934713408
    %v3279 = vunpack.c.0.s8 %v3278
    %v3280 = vlaneseq
    %v3281 = vshrl.u32 %v3280, 7
    %v3282 = vsub.s32 %v3279, %v3281
    %v3283 = vrot.slane %v3269, %v3282
    %v3284 = vcombine.low %v3251, %v3267
    %v3285 = vcombine.high %v3251, %v3267
    %v3287 = vunpack.c.l.s4 1934713408
    %v3288 = vunpack.c.0.s8 %v3287
    %v3289 = vlaneseq
    %v3290 = vshrl.u32 %v3289, 7
    %v3291 = vsub.s32 %v3288, %v3290
    %v3292 = vrot.slane %v3284, %v3291
    %v3294 = vunpack.c.l.s4 1934713408
    %v3295 = vunpack.c.0.s8 %v3294
    %v3296 = vlaneseq
    %v3297 = vshrl.u32 %v3296, 7
    %v3298 = vsub.s32 %v3295, %v3297
    %v3299 = vrot.slane %v3285, %v3298
    %v3300 = vcombine.high %v3276, 0.0
    %v3301 = vcombine.high %v3283, 0.0
    %v3302 = vcombine.high %v3292, 0.0
    %v3303 = vcombine.high %v3299, 0.0
    %v3304 = vcombine.low %v3215, %v3223
    %v3305 = vcombine.high %v3215, %v3223
    %v3307 = vunpack.c.l.s4 1983009808
    %v3308 = vunpack.c.0.s8 %v3307
    %v3309 = vlaneseq
    %v3310 = vshrl.u32 %v3309, 7
    %v3311 = vsub.s32 %v3308, %v3310
    %v3312 = vrot.slane %v3304, %v3311
    %v3314 = vunpack.c.l.s4 1983009808
    %v3315 = vunpack.c.0.s8 %v3314
    %v3316 = vlaneseq
    %v3317 = vshrl.u32 %v3316, 7
    %v3318 = vsub.s32 %v3315, %v3317
    %v3319 = vrot.slane %v3305, %v3318
    %v3320 = vcombine.low %v3219, %v3227
    %v3321 = vcombine.high %v3219, %v3227
    %v3323 = vunpack.c.l.s4 1983009808
    %v3324 = vunpack.c.0.s8 %v3323
    %v3325 = vlaneseq
    %v3326 = vshrl.u32 %v3325, 7
    %v3327 = vsub.s32 %v3324, %v3326
    %v3328 = vrot.slane %v3320, %v3327
    %v3330 = vunpack.c.l.s4 1983009808
    %v3331 = vunpack.c.0.s8 %v3330
    %v3332 = vlaneseq
    %v3333 = vshrl.u32 %v3332, 7
    %v3334 = vsub.s32 %v3331, %v3333
    %v3335 = vrot.slane %v3321, %v3334
    %v3336 = vcombine.low %v3312, %v3328
    %v3337 = vcombine.high %v3312, %v3328
    %v3339 = vunpack.c.l.s4 1934713408
    %v3340 = vunpack.c.0.s8 %v3339
    %v3341 = vlaneseq
    %v3342 = vshrl.u32 %v3341, 7
    %v3343 = vsub.s32 %v3340, %v3342
    %v3344 = vrot.slane %v3336, %v3343
    %v3346 = vunpack.c.l.s4 1934713408
    %v3347 = vunpack.c.0.s8 %v3346
    %v3348 = vlaneseq
    %v3349 = vshrl.u32 %v3348, 7
    %v3350 = vsub.s32 %v3347, %v3349
    %v3351 = vrot.slane %v3337, %v3350
    %v3352 = vcombine.low %v3319, %v3335
    %v3353 = vcombine.high %v3319, %v3335
    %v3355 = vunpack.c.l.s4 1934713408
    %v3356 = vunpack.c.0.s8 %v3355
    %v3357 = vlaneseq
    %v3358 = vshrl.u32 %v3357, 7
    %v3359 = vsub.s32 %v3356, %v3358
    %v3360 = vrot.slane %v3352, %v3359
    %v3362 = vunpack.c.l.s4 1934713408
    %v3363 = vunpack.c.0.s8 %v3362
    %v3364 = vlaneseq
    %v3365 = vshrl.u32 %v3364, 7
    %v3366 = vsub.s32 %v3363, %v3365
    %v3367 = vrot.slane %v3353, %v3366
    %v3368 = vcombine.high %v3344, 0.0
    %v3369 = vcombine.high %v3351, 0.0
    %v3370 = vcombine.high %v3360, 0.0
    %v3371 = vcombine.high %v3367, 0.0
    %v3372 = vcombine.low %v3276, %v3283
    %v3374 = vunpack.c.l.s4 1983009808
    %v3375 = vunpack.c.0.s8 %v3374
    %v3376 = vlaneseq
    %v3377 = vshrl.u32 %v3376, 7
    %v3378 = vsub.s32 %v3375, %v3377
    %v3379 = vrot.slane %v3372, %v3378
    %v3380 = vcombine.low %v3300, %v3301
    %v3382 = vunpack.c.l.s4 1983009808
    %v3383 = vunpack.c.0.s8 %v3382
    %v3384 = vlaneseq
    %v3385 = vshrl.u32 %v3384, 7
    %v3386 = vsub.s32 %v3383, %v3385
    %v3387 = vrot.slane %v3380, %v3386
    %v3388 = vcombine.low %v3292, %v3299
    %v3390 = vunpack.c.l.s4 1983009808
    %v3391 = vunpack.c.0.s8 %v3390
    %v3392 = vlaneseq
    %v3393 = vshrl.u32 %v3392, 7
    %v3394 = vsub.s32 %v3391, %v3393
    %v3395 = vrot.slane %v3388, %v3394
    %v3396 = vcombine.low %v3302, %v3303
    %v3398 = vunpack.c.l.s4 1983009808
    %v3399 = vunpack.c.0.s8 %v3398
    %v3400 = vlaneseq
    %v3401 = vshrl.u32 %v3400, 7
    %v3402 = vsub.s32 %v3399, %v3401
    %v3403 = vrot.slane %v3396, %v3402
    %v3404 = vcombine.low %v3379, %v3387
    %v3405 = vcombine.high %v3379, %v3387
    %v3407 = vunpack.c.l.s4 1934713408
    %v3408 = vunpack.c.0.s8 %v3407
    %v3409 = vlaneseq
    %v3410 = vshrl.u32 %v3409, 7
    %v3411 = vsub.s32 %v3408, %v3410
    %v3412 = vrot.slane %v3404, %v3411
    %v3414 = vunpack.c.l.s4 1934713408
    %v3415 = vunpack.c.0.s8 %v3414
    %v3416 = vlaneseq
    %v3417 = vshrl.u32 %v3416, 7
    %v3418 = vsub.s32 %v3415, %v3417
    %v3419 = vrot.slane %v3405, %v3418
    %v3420 = vcombine.low %v3395, %v3403
    %v3421 = vcombine.high %v3395, %v3403
    %v3423 = vunpack.c.l.s4 1934713408
    %v3424 = vunpack.c.0.s8 %v3423
    %v3425 = vlaneseq
    %v3426 = vshrl.u32 %v3425, 7
    %v3427 = vsub.s32 %v3424, %v3426
    %v3428 = vrot.slane %v3420, %v3427
    %v3430 = vunpack.c.l.s4 1934713408
    %v3431 = vunpack.c.0.s8 %v3430
    %v3432 = vlaneseq
    %v3433 = vshrl.u32 %v3432, 7
    %v3434 = vsub.s32 %v3431, %v3433
    %v3435 = vrot.slane %v3421, %v3434
    %v3436 = vcombine.low %v3412, %v3428
    %v3437 = vcombine.high %v3412, %v3428
    %v3438 = vcombine.low %v3419, %v3435
    %v3439 = vcombine.high %v3419, %v3435
    %v3440 = vcombine.low %v3344, %v3351
    %v3442 = vunpack.c.l.s4 1983009808
    %v3443 = vunpack.c.0.s8 %v3442
    %v3444 = vlaneseq
    %v3445 = vshrl.u32 %v3444, 7
    %v3446 = vsub.s32 %v3443, %v3445
    %v3447 = vrot.slane %v3440, %v3446
    %v3448 = vcombine.low %v3368, %v3369
    %v3450 = vunpack.c.l.s4 1983009808
    %v3451 = vunpack.c.0.s8 %v3450
    %v3452 = vlaneseq
    %v3453 = vshrl.u32 %v3452, 7
    %v3454 = vsub.s32 %v3451, %v3453
    %v3455 = vrot.slane %v3448, %v3454
    %v3456 = vcombine.low %v3360, %v3367
    %v3458 = vunpack.c.l.s4 1983009808
    %v3459 = vunpack.c.0.s8 %v3458
    %v3460 = vlaneseq
    %v3461 = vshrl.u32 %v3460, 7
    %v3462 = vsub.s32 %v3459, %v3461
    %v3463 = vrot.slane %v3456, %v3462
    %v3464 = vcombine.low %v3370, %v3371
    %v3466 = vunpack.c.l.s4 1983009808
    %v3467 = vunpack.c.0.s8 %v3466
    %v3468 = vlaneseq
    %v3469 = vshrl.u32 %v3468, 7
    %v3470 = vsub.s32 %v3467, %v3469
    %v3471 = vrot.slane %v3464, %v3470
    %v3472 = vcombine.low %v3447, %v3455
    %v3473 = vcombine.high %v3447, %v3455
    %v3475 = vunpack.c.l.s4 1934713408
    %v3476 = vunpack.c.0.s8 %v3475
    %v3477 = vlaneseq
    %v3478 = vshrl.u32 %v3477, 7
    %v3479 = vsub.s32 %v3476, %v3478
    %v3480 = vrot.slane %v3472, %v3479
    %v3482 = vunpack.c.l.s4 1934713408
    %v3483 = vunpack.c.0.s8 %v3482
    %v3484 = vlaneseq
    %v3485 = vshrl.u32 %v3484, 7
    %v3486 = vsub.s32 %v3483, %v3485
    %v3487 = vrot.slane %v3473, %v3486
    %v3488 = vcombine.low %v3463, %v3471
    %v3489 = vcombine.high %v3463, %v3471
    %v3491 = vunpack.c.l.s4 1934713408
    %v3492 = vunpack.c.0.s8 %v3491
    %v3493 = vlaneseq
    %v3494 = vshrl.u32 %v3493, 7
    %v3495 = vsub.s32 %v3492, %v3494
    %v3496 = vrot.slane %v3488, %v3495
    %v3498 = vunpack.c.l.s4 1934713408
    %v3499 = vunpack.c.0.s8 %v3498
    %v3500 = vlaneseq
    %v3501 = vshrl.u32 %v3500, 7
    %v3502 = vsub.s32 %v3499, %v3501
    %v3503 = vrot.slane %v3489, %v3502
    %v3504 = vcombine.low %v3480, %v3496
    %v3505 = vcombine.high %v3480, %v3496
    %v3506 = vcombine.low %v3487, %v3503
    %v3507 = vcombine.high %v3487, %v3503
    %v3508 = vpack.c.bf16 %v3436, %v3436
    %v3509 = vpack.c.bf16 %v3437, %v3437
    %v3510 = vpack.c.bf16 %v3438, %v3438
    %v3511 = vpack.c.bf16 %v3439, %v3439
    %v3512 = vpack.c.bf16 %v3504, %v3504
    %v3513 = vpack.c.bf16 %v3505, %v3505
    %v3514 = vpack.c.bf16 %v3506, %v3506
    %v3515 = vpack.c.bf16 %v3507, %v3507
    %v3517 = vsel %vm1222, %v2904, 0
    %v3520 = vsel %vm1222, %v3204, 0
    %3522 = vmatprep.subr.bf16.mxu0 0
    %3523 = vmatpush1.bf16.xpose.msra.mxu0 0
    %3524 = vmatprep.subr.bf16.mxu0 0
    %3525 = vmatpush1.bf16.xpose.msra.mxu0 0
    %3526 = vmatprep.subr.bf16.mxu0 0
    %3527 = vmatpush1.bf16.xpose.msra.mxu0 0
    %3528 = vmatprep.subr.bf16.mxu0 0
    %3529 = vmatpush1.bf16.xpose.msra.mxu0 0
    %3530 = vmatprep.subr.bf16.mxu0 0
    %3531 = vmatpush1.bf16.xpose.msra.mxu0 0
    %3532 = vmatprep.subr.bf16.mxu0 0
    %3533 = vmatpush1.bf16.xpose.msra.mxu0 0
    %3534 = vmatprep.subr.bf16.mxu0 0
    %3535 = vmatpush1.bf16.xpose.msra.mxu0 0
    %3536 = vmatprep.subr.bf16.mxu0 0
    %3537 = vmatpush1.bf16.xpose.msra.mxu0 %v3520
    %3538 = vmatprep.subr.bf16.mxu0 0
    %3539 = vmatpush2.bf16.xpose.msra.mxu0 0
    %3540 = vmatprep.subr.bf16.mxu0 0
    %3541 = vmatpush2.bf16.xpose.msra.mxu0 0
    %3542 = vmatprep.subr.bf16.mxu0 0
    %3543 = vmatpush2.bf16.xpose.msra.mxu0 0
    %3544 = vmatprep.subr.bf16.mxu0 0
    %3545 = vmatpush2.bf16.xpose.msra.mxu0 0
    %3546 = vmatprep.subr.bf16.mxu0 0
    %3547 = vmatpush2.bf16.xpose.msra.mxu0 0
    %3548 = vmatprep.subr.bf16.mxu0 0
    %3549 = vmatpush2.bf16.xpose.msra.mxu0 0
    %3550 = vmatprep.subr.bf16.mxu0 0
    %3551 = vmatpush2.bf16.xpose.msra.mxu0 0
    %3552 = vmatprep.subr.bf16.mxu0 0
    %3553 = vmatpush2.bf16.xpose.msra.mxu0 0
    %3554 = vmatprep.mubr.bf16.mxu0 0
    %3555 = vmatmul.mubr.bf16.gmra.mxu0 %v3517
    %v3556 = vpop.f32.mrf.mxu0
    %v3557 = vadd.f32 0.0, %v3556
    %v3558 = vpop.f32.mrf.mxu0
    %v3559 = vpop.f32.mrf.mxu0
    %v3560 = vpop.f32.mrf.mxu0
    %3561 = vdwg.mxu0
    %v3563 = vsel %vm1222, %v2905, 0
    %v3566 = vsel %vm1222, %v3205, 0
    %3568 = vmatprep.subr.bf16.mxu0 0
    %3569 = vmatpush1.bf16.xpose.msra.mxu0 0
    %3570 = vmatprep.subr.bf16.mxu0 0
    %3571 = vmatpush1.bf16.xpose.msra.mxu0 0
    %3572 = vmatprep.subr.bf16.mxu0 0
    %3573 = vmatpush1.bf16.xpose.msra.mxu0 0
    %3574 = vmatprep.subr.bf16.mxu0 0
    %3575 = vmatpush1.bf16.xpose.msra.mxu0 0
    %3576 = vmatprep.subr.bf16.mxu0 0
    %3577 = vmatpush1.bf16.xpose.msra.mxu0 0
    %3578 = vmatprep.subr.bf16.mxu0 0
    %3579 = vmatpush1.bf16.xpose.msra.mxu0 0
    %3580 = vmatprep.subr.bf16.mxu0 0
    %3581 = vmatpush1.bf16.xpose.msra.mxu0 0
    %3582 = vmatprep.subr.bf16.mxu0 0
    %3583 = vmatpush1.bf16.xpose.msra.mxu0 %v3566
    %3584 = vmatprep.subr.bf16.mxu0 0
    %3585 = vmatpush2.bf16.xpose.msra.mxu0 0
    %3586 = vmatprep.subr.bf16.mxu0 0
    %3587 = vmatpush2.bf16.xpose.msra.mxu0 0
    %3588 = vmatprep.subr.bf16.mxu0 0
    %3589 = vmatpush2.bf16.xpose.msra.mxu0 0
    %3590 = vmatprep.subr.bf16.mxu0 0
    %3591 = vmatpush2.bf16.xpose.msra.mxu0 0
    %3592 = vmatprep.subr.bf16.mxu0 0
    %3593 = vmatpush2.bf16.xpose.msra.mxu0 0
    %3594 = vmatprep.subr.bf16.mxu0 0
    %3595 = vmatpush2.bf16.xpose.msra.mxu0 0
    %3596 = vmatprep.subr.bf16.mxu0 0
    %3597 = vmatpush2.bf16.xpose.msra.mxu0 0
    %3598 = vmatprep.subr.bf16.mxu0 0
    %3599 = vmatpush2.bf16.xpose.msra.mxu0 0
    %3600 = vmatprep.mubr.bf16.mxu0 0
    %3601 = vmatmul.mubr.bf16.gmra.mxu0 %v3563
    %v3602 = vpop.f32.mrf.mxu0
    %v3603 = vadd.f32 0.0, %v3602
    %v3604 = vpop.f32.mrf.mxu0
    %v3605 = vpop.f32.mrf.mxu0
    %v3606 = vpop.f32.mrf.mxu0
    %3607 = vdwg.mxu0
    %v3609 = vsel %vm1222, %v2906, 0
    %v3612 = vsel %vm1222, %v3206, 0
    %3614 = vmatprep.subr.bf16.mxu0 0
    %3615 = vmatpush1.bf16.xpose.msra.mxu0 0
    %3616 = vmatprep.subr.bf16.mxu0 0
    %3617 = vmatpush1.bf16.xpose.msra.mxu0 0
    %3618 = vmatprep.subr.bf16.mxu0 0
    %3619 = vmatpush1.bf16.xpose.msra.mxu0 0
    %3620 = vmatprep.subr.bf16.mxu0 0
    %3621 = vmatpush1.bf16.xpose.msra.mxu0 0
    %3622 = vmatprep.subr.bf16.mxu0 0
    %3623 = vmatpush1.bf16.xpose.msra.mxu0 0
    %3624 = vmatprep.subr.bf16.mxu0 0
    %3625 = vmatpush1.bf16.xpose.msra.mxu0 0
    %3626 = vmatprep.subr.bf16.mxu0 0
    %3627 = vmatpush1.bf16.xpose.msra.mxu0 0
    %3628 = vmatprep.subr.bf16.mxu0 0
    %3629 = vmatpush1.bf16.xpose.msra.mxu0 %v3612
    %3630 = vmatprep.subr.bf16.mxu0 0
    %3631 = vmatpush2.bf16.xpose.msra.mxu0 0
    %3632 = vmatprep.subr.bf16.mxu0 0
    %3633 = vmatpush2.bf16.xpose.msra.mxu0 0
    %3634 = vmatprep.subr.bf16.mxu0 0
    %3635 = vmatpush2.bf16.xpose.msra.mxu0 0
    %3636 = vmatprep.subr.bf16.mxu0 0
    %3637 = vmatpush2.bf16.xpose.msra.mxu0 0
    %3638 = vmatprep.subr.bf16.mxu0 0
    %3639 = vmatpush2.bf16.xpose.msra.mxu0 0
    %3640 = vmatprep.subr.bf16.mxu0 0
    %3641 = vmatpush2.bf16.xpose.msra.mxu0 0
    %3642 = vmatprep.subr.bf16.mxu0 0
    %3643 = vmatpush2.bf16.xpose.msra.mxu0 0
    %3644 = vmatprep.subr.bf16.mxu0 0
    %3645 = vmatpush2.bf16.xpose.msra.mxu0 0
    %3646 = vmatprep.mubr.bf16.mxu0 0
    %3647 = vmatmul.mubr.bf16.gmra.mxu0 %v3609
    %v3648 = vpop.f32.mrf.mxu0
    %v3649 = vadd.f32 0.0, %v3648
    %v3650 = vpop.f32.mrf.mxu0
    %v3651 = vpop.f32.mrf.mxu0
    %v3652 = vpop.f32.mrf.mxu0
    %3653 = vdwg.mxu0
    %v3655 = vsel %vm1222, %v2907, 0
    %v3658 = vsel %vm1222, %v3207, 0
    %3660 = vmatprep.subr.bf16.mxu0 0
    %3661 = vmatpush1.bf16.xpose.msra.mxu0 0
    %3662 = vmatprep.subr.bf16.mxu0 0
    %3663 = vmatpush1.bf16.xpose.msra.mxu0 0
    %3664 = vmatprep.subr.bf16.mxu0 0
    %3665 = vmatpush1.bf16.xpose.msra.mxu0 0
    %3666 = vmatprep.subr.bf16.mxu0 0
    %3667 = vmatpush1.bf16.xpose.msra.mxu0 0
    %3668 = vmatprep.subr.bf16.mxu0 0
    %3669 = vmatpush1.bf16.xpose.msra.mxu0 0
    %3670 = vmatprep.subr.bf16.mxu0 0
    %3671 = vmatpush1.bf16.xpose.msra.mxu0 0
    %3672 = vmatprep.subr.bf16.mxu0 0
    %3673 = vmatpush1.bf16.xpose.msra.mxu0 0
    %3674 = vmatprep.subr.bf16.mxu0 0
    %3675 = vmatpush1.bf16.xpose.msra.mxu0 %v3658
    %3676 = vmatprep.subr.bf16.mxu0 0
    %3677 = vmatpush2.bf16.xpose.msra.mxu0 0
    %3678 = vmatprep.subr.bf16.mxu0 0
    %3679 = vmatpush2.bf16.xpose.msra.mxu0 0
    %3680 = vmatprep.subr.bf16.mxu0 0
    %3681 = vmatpush2.bf16.xpose.msra.mxu0 0
    %3682 = vmatprep.subr.bf16.mxu0 0
    %3683 = vmatpush2.bf16.xpose.msra.mxu0 0
    %3684 = vmatprep.subr.bf16.mxu0 0
    %3685 = vmatpush2.bf16.xpose.msra.mxu0 0
    %3686 = vmatprep.subr.bf16.mxu0 0
    %3687 = vmatpush2.bf16.xpose.msra.mxu0 0
    %3688 = vmatprep.subr.bf16.mxu0 0
    %3689 = vmatpush2.bf16.xpose.msra.mxu0 0
    %3690 = vmatprep.subr.bf16.mxu0 0
    %3691 = vmatpush2.bf16.xpose.msra.mxu0 0
    %3692 = vmatprep.mubr.bf16.mxu0 0
    %3693 = vmatmul.mubr.bf16.gmra.mxu0 %v3655
    %v3694 = vpop.f32.mrf.mxu0
    %v3695 = vadd.f32 0.0, %v3694
    %v3696 = vpop.f32.mrf.mxu0
    %v3697 = vpop.f32.mrf.mxu0
    %v3698 = vpop.f32.mrf.mxu0
    %3699 = vdwg.mxu0
    %v3701 = vsel %vm1222, %v2908, 0
    %v3704 = vsel %vm1222, %v3208, 0
    %3706 = vmatprep.subr.bf16.mxu0 0
    %3707 = vmatpush1.bf16.xpose.msra.mxu0 0
    %3708 = vmatprep.subr.bf16.mxu0 0
    %3709 = vmatpush1.bf16.xpose.msra.mxu0 0
    %3710 = vmatprep.subr.bf16.mxu0 0
    %3711 = vmatpush1.bf16.xpose.msra.mxu0 0
    %3712 = vmatprep.subr.bf16.mxu0 0
    %3713 = vmatpush1.bf16.xpose.msra.mxu0 0
    %3714 = vmatprep.subr.bf16.mxu0 0
    %3715 = vmatpush1.bf16.xpose.msra.mxu0 0
    %3716 = vmatprep.subr.bf16.mxu0 0
    %3717 = vmatpush1.bf16.xpose.msra.mxu0 0
    %3718 = vmatprep.subr.bf16.mxu0 0
    %3719 = vmatpush1.bf16.xpose.msra.mxu0 0
    %3720 = vmatprep.subr.bf16.mxu0 0
    %3721 = vmatpush1.bf16.xpose.msra.mxu0 %v3704
    %3722 = vmatprep.subr.bf16.mxu0 0
    %3723 = vmatpush2.bf16.xpose.msra.mxu0 0
    %3724 = vmatprep.subr.bf16.mxu0 0
    %3725 = vmatpush2.bf16.xpose.msra.mxu0 0
    %3726 = vmatprep.subr.bf16.mxu0 0
    %3727 = vmatpush2.bf16.xpose.msra.mxu0 0
    %3728 = vmatprep.subr.bf16.mxu0 0
    %3729 = vmatpush2.bf16.xpose.msra.mxu0 0
    %3730 = vmatprep.subr.bf16.mxu0 0
    %3731 = vmatpush2.bf16.xpose.msra.mxu0 0
    %3732 = vmatprep.subr.bf16.mxu0 0
    %3733 = vmatpush2.bf16.xpose.msra.mxu0 0
    %3734 = vmatprep.subr.bf16.mxu0 0
    %3735 = vmatpush2.bf16.xpose.msra.mxu0 0
    %3736 = vmatprep.subr.bf16.mxu0 0
    %3737 = vmatpush2.bf16.xpose.msra.mxu0 0
    %3738 = vmatprep.mubr.bf16.mxu0 0
    %3739 = vmatmul.mubr.bf16.gmra.mxu0 %v3701
    %v3740 = vpop.f32.mrf.mxu0
    %v3741 = vadd.f32 0.0, %v3740
    %v3742 = vpop.f32.mrf.mxu0
    %v3743 = vpop.f32.mrf.mxu0
    %v3744 = vpop.f32.mrf.mxu0
    %3745 = vdwg.mxu0
    %v3747 = vsel %vm1222, %v2909, 0
    %v3750 = vsel %vm1222, %v3209, 0
    %3752 = vmatprep.subr.bf16.mxu0 0
    %3753 = vmatpush1.bf16.xpose.msra.mxu0 0
    %3754 = vmatprep.subr.bf16.mxu0 0
    %3755 = vmatpush1.bf16.xpose.msra.mxu0 0
    %3756 = vmatprep.subr.bf16.mxu0 0
    %3757 = vmatpush1.bf16.xpose.msra.mxu0 0
    %3758 = vmatprep.subr.bf16.mxu0 0
    %3759 = vmatpush1.bf16.xpose.msra.mxu0 0
    %3760 = vmatprep.subr.bf16.mxu0 0
    %3761 = vmatpush1.bf16.xpose.msra.mxu0 0
    %3762 = vmatprep.subr.bf16.mxu0 0
    %3763 = vmatpush1.bf16.xpose.msra.mxu0 0
    %3764 = vmatprep.subr.bf16.mxu0 0
    %3765 = vmatpush1.bf16.xpose.msra.mxu0 0
    %3766 = vmatprep.subr.bf16.mxu0 0
    %3767 = vmatpush1.bf16.xpose.msra.mxu0 %v3750
    %3768 = vmatprep.subr.bf16.mxu0 0
    %3769 = vmatpush2.bf16.xpose.msra.mxu0 0
    %3770 = vmatprep.subr.bf16.mxu0 0
    %3771 = vmatpush2.bf16.xpose.msra.mxu0 0
    %3772 = vmatprep.subr.bf16.mxu0 0
    %3773 = vmatpush2.bf16.xpose.msra.mxu0 0
    %3774 = vmatprep.subr.bf16.mxu0 0
    %3775 = vmatpush2.bf16.xpose.msra.mxu0 0
    %3776 = vmatprep.subr.bf16.mxu0 0
    %3777 = vmatpush2.bf16.xpose.msra.mxu0 0
    %3778 = vmatprep.subr.bf16.mxu0 0
    %3779 = vmatpush2.bf16.xpose.msra.mxu0 0
    %3780 = vmatprep.subr.bf16.mxu0 0
    %3781 = vmatpush2.bf16.xpose.msra.mxu0 0
    %3782 = vmatprep.subr.bf16.mxu0 0
    %3783 = vmatpush2.bf16.xpose.msra.mxu0 0
    %3784 = vmatprep.mubr.bf16.mxu0 0
    %3785 = vmatmul.mubr.bf16.gmra.mxu0 %v3747
    %v3786 = vpop.f32.mrf.mxu0
    %v3787 = vadd.f32 0.0, %v3786
    %v3788 = vpop.f32.mrf.mxu0
    %v3789 = vpop.f32.mrf.mxu0
    %v3790 = vpop.f32.mrf.mxu0
    %3791 = vdwg.mxu0
    %v3793 = vsel %vm1222, %v2910, 0
    %v3796 = vsel %vm1222, %v3210, 0
    %3798 = vmatprep.subr.bf16.mxu0 0
    %3799 = vmatpush1.bf16.xpose.msra.mxu0 0
    %3800 = vmatprep.subr.bf16.mxu0 0
    %3801 = vmatpush1.bf16.xpose.msra.mxu0 0
    %3802 = vmatprep.subr.bf16.mxu0 0
    %3803 = vmatpush1.bf16.xpose.msra.mxu0 0
    %3804 = vmatprep.subr.bf16.mxu0 0
    %3805 = vmatpush1.bf16.xpose.msra.mxu0 0
    %3806 = vmatprep.subr.bf16.mxu0 0
    %3807 = vmatpush1.bf16.xpose.msra.mxu0 0
    %3808 = vmatprep.subr.bf16.mxu0 0
    %3809 = vmatpush1.bf16.xpose.msra.mxu0 0
    %3810 = vmatprep.subr.bf16.mxu0 0
    %3811 = vmatpush1.bf16.xpose.msra.mxu0 0
    %3812 = vmatprep.subr.bf16.mxu0 0
    %3813 = vmatpush1.bf16.xpose.msra.mxu0 %v3796
    %3814 = vmatprep.subr.bf16.mxu0 0
    %3815 = vmatpush2.bf16.xpose.msra.mxu0 0
    %3816 = vmatprep.subr.bf16.mxu0 0
    %3817 = vmatpush2.bf16.xpose.msra.mxu0 0
    %3818 = vmatprep.subr.bf16.mxu0 0
    %3819 = vmatpush2.bf16.xpose.msra.mxu0 0
    %3820 = vmatprep.subr.bf16.mxu0 0
    %3821 = vmatpush2.bf16.xpose.msra.mxu0 0
    %3822 = vmatprep.subr.bf16.mxu0 0
    %3823 = vmatpush2.bf16.xpose.msra.mxu0 0
    %3824 = vmatprep.subr.bf16.mxu0 0
    %3825 = vmatpush2.bf16.xpose.msra.mxu0 0
    %3826 = vmatprep.subr.bf16.mxu0 0
    %3827 = vmatpush2.bf16.xpose.msra.mxu0 0
    %3828 = vmatprep.subr.bf16.mxu0 0
    %3829 = vmatpush2.bf16.xpose.msra.mxu0 0
    %3830 = vmatprep.mubr.bf16.mxu0 0
    %3831 = vmatmul.mubr.bf16.gmra.mxu0 %v3793
    %v3832 = vpop.f32.mrf.mxu0
    %v3833 = vadd.f32 0.0, %v3832
    %v3834 = vpop.f32.mrf.mxu0
    %v3835 = vpop.f32.mrf.mxu0
    %v3836 = vpop.f32.mrf.mxu0
    %3837 = vdwg.mxu0
    %v3839 = vsel %vm1222, %v2911, 0
    %v3842 = vsel %vm1222, %v3211, 0
    %3844 = vmatprep.subr.bf16.mxu0 0
    %3845 = vmatpush1.bf16.xpose.msra.mxu0 0
    %3846 = vmatprep.subr.bf16.mxu0 0
    %3847 = vmatpush1.bf16.xpose.msra.mxu0 0
    %3848 = vmatprep.subr.bf16.mxu0 0
    %3849 = vmatpush1.bf16.xpose.msra.mxu0 0
    %3850 = vmatprep.subr.bf16.mxu0 0
    %3851 = vmatpush1.bf16.xpose.msra.mxu0 0
    %3852 = vmatprep.subr.bf16.mxu0 0
    %3853 = vmatpush1.bf16.xpose.msra.mxu0 0
    %3854 = vmatprep.subr.bf16.mxu0 0
    %3855 = vmatpush1.bf16.xpose.msra.mxu0 0
    %3856 = vmatprep.subr.bf16.mxu0 0
    %3857 = vmatpush1.bf16.xpose.msra.mxu0 0
    %3858 = vmatprep.subr.bf16.mxu0 0
    %3859 = vmatpush1.bf16.xpose.msra.mxu0 %v3842
    %3860 = vmatprep.subr.bf16.mxu0 0
    %3861 = vmatpush2.bf16.xpose.msra.mxu0 0
    %3862 = vmatprep.subr.bf16.mxu0 0
    %3863 = vmatpush2.bf16.xpose.msra.mxu0 0
    %3864 = vmatprep.subr.bf16.mxu0 0
    %3865 = vmatpush2.bf16.xpose.msra.mxu0 0
    %3866 = vmatprep.subr.bf16.mxu0 0
    %3867 = vmatpush2.bf16.xpose.msra.mxu0 0
    %3868 = vmatprep.subr.bf16.mxu0 0
    %3869 = vmatpush2.bf16.xpose.msra.mxu0 0
    %3870 = vmatprep.subr.bf16.mxu0 0
    %3871 = vmatpush2.bf16.xpose.msra.mxu0 0
    %3872 = vmatprep.subr.bf16.mxu0 0
    %3873 = vmatpush2.bf16.xpose.msra.mxu0 0
    %3874 = vmatprep.subr.bf16.mxu0 0
    %3875 = vmatpush2.bf16.xpose.msra.mxu0 0
    %3876 = vmatprep.mubr.bf16.mxu0 0
    %3877 = vmatmul.mubr.bf16.gmra.mxu0 %v3839
    %v3878 = vpop.f32.mrf.mxu0
    %v3879 = vadd.f32 0.0, %v3878
    %v3880 = vpop.f32.mrf.mxu0
    %v3881 = vpop.f32.mrf.mxu0
    %v3882 = vpop.f32.mrf.mxu0
    %3883 = vdwg.mxu0
    %v3886 = vlaneseq
    %v3887 = vshrl.u32 %v3886, 7
    %v3888 = vsub.s32 0, %v3887
    %v3889 = vrot.slane %v232, %v3888
    %v3890 = vlaneseq
    %v3891 = vshrl.u32 %v3890, 7
    %v3892 = vsub.s32 0, %v3891
    %v3893 = vrot.slane %v233, %v3892
    %v3896 = vadd.f32 %v3557, %v3889
    %v3897 = vadd.f32 %v3603, %v3889
    %v3898 = vadd.f32 %v3649, %v3889
    %v3899 = vadd.f32 %v3695, %v3889
    %v3900 = vadd.f32 %v3741, %v3893
    %v3901 = vadd.f32 %v3787, %v3893
    %v3902 = vadd.f32 %v3833, %v3893
    %v3903 = vadd.f32 %v3879, %v3893
    %v3904 = vsel %vm1222, %v3896, -inf
    %3905 = vmax.xlane.f32.xlu0 %v3904
    %v3906 = vpop.xlane.xlu0 %3905
    %v3907 = vsel %vm1222, %v3897, -inf
    %3908 = vmax.xlane.f32.xlu0 %v3907
    %v3909 = vpop.xlane.xlu0 %3908
    %v3910 = vsel %vm1222, %v3898, -inf
    %3911 = vmax.xlane.f32.xlu0 %v3910
    %v3912 = vpop.xlane.xlu0 %3911
    %v3913 = vsel %vm1222, %v3899, -inf
    %3914 = vmax.xlane.f32.xlu0 %v3913
    %v3915 = vpop.xlane.xlu0 %3914
    %v3916 = vsel %vm1222, %v3900, -inf
    %3917 = vmax.xlane.f32.xlu0 %v3916
    %v3918 = vpop.xlane.xlu0 %3917
    %v3919 = vsel %vm1222, %v3901, -inf
    %3920 = vmax.xlane.f32.xlu0 %v3919
    %v3921 = vpop.xlane.xlu0 %3920
    %v3922 = vsel %vm1222, %v3902, -inf
    %3923 = vmax.xlane.f32.xlu0 %v3922
    %v3924 = vpop.xlane.xlu0 %3923
    %v3925 = vsel %vm1222, %v3903, -inf
    %3926 = vmax.xlane.f32.xlu0 %v3925
    %v3927 = vpop.xlane.xlu0 %3926
    %v3928 = vsub.f32 %v3896, %v3906
    %v3929 = vsub.f32 %v3897, %v3909
    %v3930 = vsub.f32 %v3898, %v3912
    %v3931 = vsub.f32 %v3899, %v3915
    %v3932 = vsub.f32 %v3900, %v3918
    %v3933 = vsub.f32 %v3901, %v3921
    %v3934 = vsub.f32 %v3902, %v3924
    %v3935 = vsub.f32 %v3903, %v3927
    %v3936 = vmul.f32 %v3928, 1.442695
    %v3937 = vpow.pop %v3936
    %v3938 = vmul.f32 %v3929, 1.442695
    %v3939 = vpow.pop %v3938
    %v3940 = vmul.f32 %v3930, 1.442695
    %v3941 = vpow.pop %v3940
    %v3942 = vmul.f32 %v3931, 1.442695
    %v3943 = vpow.pop %v3942
    %v3944 = vmul.f32 %v3932, 1.442695
    %v3945 = vpow.pop %v3944
    %v3946 = vmul.f32 %v3933, 1.442695
    %v3947 = vpow.pop %v3946
    %v3948 = vmul.f32 %v3934, 1.442695
    %v3949 = vpow.pop %v3948
    %v3950 = vmul.f32 %v3935, 1.442695
    %v3951 = vpow.pop %v3950
    %v3952 = vsel %vm1222, %v3937, 0.0
    %3953 = vadd.xlane.f32.xlu0 %v3952
    %v3954 = vpop.xlane.xlu0 %3953
    %v3955 = vsel %vm1222, %v3939, 0.0
    %3956 = vadd.xlane.f32.xlu0 %v3955
    %v3957 = vpop.xlane.xlu0 %3956
    %v3958 = vsel %vm1222, %v3941, 0.0
    %3959 = vadd.xlane.f32.xlu0 %v3958
    %v3960 = vpop.xlane.xlu0 %3959
    %v3961 = vsel %vm1222, %v3943, 0.0
    %3962 = vadd.xlane.f32.xlu0 %v3961
    %v3963 = vpop.xlane.xlu0 %3962
    %v3964 = vsel %vm1222, %v3945, 0.0
    %3965 = vadd.xlane.f32.xlu0 %v3964
    %v3966 = vpop.xlane.xlu0 %3965
    %v3967 = vsel %vm1222, %v3947, 0.0
    %3968 = vadd.xlane.f32.xlu0 %v3967
    %v3969 = vpop.xlane.xlu0 %3968
    %v3970 = vsel %vm1222, %v3949, 0.0
    %3971 = vadd.xlane.f32.xlu0 %v3970
    %v3972 = vpop.xlane.xlu0 %3971
    %v3973 = vsel %vm1222, %v3951, 0.0
    %3974 = vadd.xlane.f32.xlu0 %v3973
    %v3975 = vpop.xlane.xlu0 %3974
    %v3976 = vrcp.pop %v3954
    %v3977 = vrcp.pop %v3957
    %v3978 = vrcp.pop %v3960
    %v3979 = vrcp.pop %v3963
    %v3980 = vrcp.pop %v3966
    %v3981 = vrcp.pop %v3969
    %v3982 = vrcp.pop %v3972
    %v3983 = vrcp.pop %v3975
    %v3984 = vmul.f32 %v3937, %v3976
    %v3985 = vmul.f32 %v3939, %v3977
    %v3986 = vmul.f32 %v3941, %v3978
    %v3987 = vmul.f32 %v3943, %v3979
    %v3988 = vmul.f32 %v3945, %v3980
    %v3989 = vmul.f32 %v3947, %v3981
    %v3990 = vmul.f32 %v3949, %v3982
    %v3991 = vmul.f32 %v3951, %v3983
    %3992 = vst.msk [vmem:[#allocation16] sm:$0xff] %vm1222, %v3984
    %3993 = vst.msk [vmem:[#allocation16 + $0x8] sm:$0xff] %vm1222, %v3985
    %3994 = vst.msk [vmem:[#allocation16 + $0x10] sm:$0xff] %vm1222, %v3986
    %3995 = vst.msk [vmem:[#allocation16 + $0x18] sm:$0xff] %vm1222, %v3987
    %3996 = vst.msk [vmem:[#allocation16 + $0x20] sm:$0xff] %vm1222, %v3988
    %3997 = vst.msk [vmem:[#allocation16 + $0x28] sm:$0xff] %vm1222, %v3989
    %3998 = vst.msk [vmem:[#allocation16 + $0x30] sm:$0xff] %vm1222, %v3990
    %3999 = vst.msk [vmem:[#allocation16 + $0x38] sm:$0xff] %vm1222, %v3991
    %v4000 = vpack.c.bf16 %v3984, %v3984
    %v4001 = vpack.c.bf16 %v3985, %v3985
    %v4002 = vpack.c.bf16 %v3986, %v3986
    %v4003 = vpack.c.bf16 %v3987, %v3987
    %v4004 = vpack.c.bf16 %v3988, %v3988
    %v4005 = vpack.c.bf16 %v3989, %v3989
    %v4006 = vpack.c.bf16 %v3990, %v3990
    %v4007 = vpack.c.bf16 %v3991, %v3991
    %v4009 = vsel %vm1222, %v4000, 0
    %v4012 = vsel %vm1706, %v3508, 0
    %4014 = vmatprep.subr.bf16.mxu0 0
    %4015 = vmatpush1.bf16.msra.mxu0 0
    %4016 = vmatprep.subr.bf16.mxu0 0
    %4017 = vmatpush1.bf16.msra.mxu0 0
    %4018 = vmatprep.subr.bf16.mxu0 0
    %4019 = vmatpush1.bf16.msra.mxu0 0
    %4020 = vmatprep.subr.bf16.mxu0 0
    %4021 = vmatpush1.bf16.msra.mxu0 0
    %4022 = vmatprep.subr.bf16.mxu0 0
    %4023 = vmatpush1.bf16.msra.mxu0 0
    %4024 = vmatprep.subr.bf16.mxu0 0
    %4025 = vmatpush1.bf16.msra.mxu0 0
    %4026 = vmatprep.subr.bf16.mxu0 0
    %4027 = vmatpush1.bf16.msra.mxu0 0
    %4028 = vmatprep.subr.bf16.mxu0 0
    %4029 = vmatpush1.bf16.msra.mxu0 %v4012
    %4030 = vmatprep.subr.bf16.mxu0 0
    %4031 = vmatpush2.bf16.msra.mxu0 0
    %4032 = vmatprep.subr.bf16.mxu0 0
    %4033 = vmatpush2.bf16.msra.mxu0 0
    %4034 = vmatprep.subr.bf16.mxu0 0
    %4035 = vmatpush2.bf16.msra.mxu0 0
    %4036 = vmatprep.subr.bf16.mxu0 0
    %4037 = vmatpush2.bf16.msra.mxu0 0
    %4038 = vmatprep.subr.bf16.mxu0 0
    %4039 = vmatpush2.bf16.msra.mxu0 0
    %4040 = vmatprep.subr.bf16.mxu0 0
    %4041 = vmatpush2.bf16.msra.mxu0 0
    %4042 = vmatprep.subr.bf16.mxu0 0
    %4043 = vmatpush2.bf16.msra.mxu0 0
    %4044 = vmatprep.subr.bf16.mxu0 0
    %4045 = vmatpush2.bf16.msra.mxu0 0
    %4046 = vmatprep.mubr.bf16.mxu0 0
    %4047 = vmatmul.mubr.bf16.gmra.mxu0 %v4009
    %v4048 = vpop.f32.mrf.mxu0
    %v4049 = vadd.f32 0.0, %v4048
    %v4050 = vpop.f32.mrf.mxu0
    %v4051 = vpop.f32.mrf.mxu0
    %v4052 = vpop.f32.mrf.mxu0
    %4053 = vdwg.mxu0
    %v4055 = vsel %vm1222, %v4001, 0
    %v4058 = vsel %vm1706, %v3509, 0
    %4060 = vmatprep.subr.bf16.mxu0 0
    %4061 = vmatpush1.bf16.msra.mxu0 0
    %4062 = vmatprep.subr.bf16.mxu0 0
    %4063 = vmatpush1.bf16.msra.mxu0 0
    %4064 = vmatprep.subr.bf16.mxu0 0
    %4065 = vmatpush1.bf16.msra.mxu0 0
    %4066 = vmatprep.subr.bf16.mxu0 0
    %4067 = vmatpush1.bf16.msra.mxu0 0
    %4068 = vmatprep.subr.bf16.mxu0 0
    %4069 = vmatpush1.bf16.msra.mxu0 0
    %4070 = vmatprep.subr.bf16.mxu0 0
    %4071 = vmatpush1.bf16.msra.mxu0 0
    %4072 = vmatprep.subr.bf16.mxu0 0
    %4073 = vmatpush1.bf16.msra.mxu0 0
    %4074 = vmatprep.subr.bf16.mxu0 0
    %4075 = vmatpush1.bf16.msra.mxu0 %v4058
    %4076 = vmatprep.subr.bf16.mxu0 0
    %4077 = vmatpush2.bf16.msra.mxu0 0
    %4078 = vmatprep.subr.bf16.mxu0 0
    %4079 = vmatpush2.bf16.msra.mxu0 0
    %4080 = vmatprep.subr.bf16.mxu0 0
    %4081 = vmatpush2.bf16.msra.mxu0 0
    %4082 = vmatprep.subr.bf16.mxu0 0
    %4083 = vmatpush2.bf16.msra.mxu0 0
    %4084 = vmatprep.subr.bf16.mxu0 0
    %4085 = vmatpush2.bf16.msra.mxu0 0
    %4086 = vmatprep.subr.bf16.mxu0 0
    %4087 = vmatpush2.bf16.msra.mxu0 0
    %4088 = vmatprep.subr.bf16.mxu0 0
    %4089 = vmatpush2.bf16.msra.mxu0 0
    %4090 = vmatprep.subr.bf16.mxu0 0
    %4091 = vmatpush2.bf16.msra.mxu0 0
    %4092 = vmatprep.mubr.bf16.mxu0 0
    %4093 = vmatmul.mubr.bf16.gmra.mxu0 %v4055
    %v4094 = vpop.f32.mrf.mxu0
    %v4095 = vadd.f32 0.0, %v4094
    %v4096 = vpop.f32.mrf.mxu0
    %v4097 = vpop.f32.mrf.mxu0
    %v4098 = vpop.f32.mrf.mxu0
    %4099 = vdwg.mxu0
    %v4101 = vsel %vm1222, %v4002, 0
    %v4104 = vsel %vm1706, %v3510, 0
    %4106 = vmatprep.subr.bf16.mxu0 0
    %4107 = vmatpush1.bf16.msra.mxu0 0
    %4108 = vmatprep.subr.bf16.mxu0 0
    %4109 = vmatpush1.bf16.msra.mxu0 0
    %4110 = vmatprep.subr.bf16.mxu0 0
    %4111 = vmatpush1.bf16.msra.mxu0 0
    %4112 = vmatprep.subr.bf16.mxu0 0
    %4113 = vmatpush1.bf16.msra.mxu0 0
    %4114 = vmatprep.subr.bf16.mxu0 0
    %4115 = vmatpush1.bf16.msra.mxu0 0
    %4116 = vmatprep.subr.bf16.mxu0 0
    %4117 = vmatpush1.bf16.msra.mxu0 0
    %4118 = vmatprep.subr.bf16.mxu0 0
    %4119 = vmatpush1.bf16.msra.mxu0 0
    %4120 = vmatprep.subr.bf16.mxu0 0
    %4121 = vmatpush1.bf16.msra.mxu0 %v4104
    %4122 = vmatprep.subr.bf16.mxu0 0
    %4123 = vmatpush2.bf16.msra.mxu0 0
    %4124 = vmatprep.subr.bf16.mxu0 0
    %4125 = vmatpush2.bf16.msra.mxu0 0
    %4126 = vmatprep.subr.bf16.mxu0 0
    %4127 = vmatpush2.bf16.msra.mxu0 0
    %4128 = vmatprep.subr.bf16.mxu0 0
    %4129 = vmatpush2.bf16.msra.mxu0 0
    %4130 = vmatprep.subr.bf16.mxu0 0
    %4131 = vmatpush2.bf16.msra.mxu0 0
    %4132 = vmatprep.subr.bf16.mxu0 0
    %4133 = vmatpush2.bf16.msra.mxu0 0
    %4134 = vmatprep.subr.bf16.mxu0 0
    %4135 = vmatpush2.bf16.msra.mxu0 0
    %4136 = vmatprep.subr.bf16.mxu0 0
    %4137 = vmatpush2.bf16.msra.mxu0 0
    %4138 = vmatprep.mubr.bf16.mxu0 0
    %4139 = vmatmul.mubr.bf16.gmra.mxu0 %v4101
    %v4140 = vpop.f32.mrf.mxu0
    %v4141 = vadd.f32 0.0, %v4140
    %v4142 = vpop.f32.mrf.mxu0
    %v4143 = vpop.f32.mrf.mxu0
    %v4144 = vpop.f32.mrf.mxu0
    %4145 = vdwg.mxu0
    %v4147 = vsel %vm1222, %v4003, 0
    %v4150 = vsel %vm1706, %v3511, 0
    %4152 = vmatprep.subr.bf16.mxu0 0
    %4153 = vmatpush1.bf16.msra.mxu0 0
    %4154 = vmatprep.subr.bf16.mxu0 0
    %4155 = vmatpush1.bf16.msra.mxu0 0
    %4156 = vmatprep.subr.bf16.mxu0 0
    %4157 = vmatpush1.bf16.msra.mxu0 0
    %4158 = vmatprep.subr.bf16.mxu0 0
    %4159 = vmatpush1.bf16.msra.mxu0 0
    %4160 = vmatprep.subr.bf16.mxu0 0
    %4161 = vmatpush1.bf16.msra.mxu0 0
    %4162 = vmatprep.subr.bf16.mxu0 0
    %4163 = vmatpush1.bf16.msra.mxu0 0
    %4164 = vmatprep.subr.bf16.mxu0 0
    %4165 = vmatpush1.bf16.msra.mxu0 0
    %4166 = vmatprep.subr.bf16.mxu0 0
    %4167 = vmatpush1.bf16.msra.mxu0 %v4150
    %4168 = vmatprep.subr.bf16.mxu0 0
    %4169 = vmatpush2.bf16.msra.mxu0 0
    %4170 = vmatprep.subr.bf16.mxu0 0
    %4171 = vmatpush2.bf16.msra.mxu0 0
    %4172 = vmatprep.subr.bf16.mxu0 0
    %4173 = vmatpush2.bf16.msra.mxu0 0
    %4174 = vmatprep.subr.bf16.mxu0 0
    %4175 = vmatpush2.bf16.msra.mxu0 0
    %4176 = vmatprep.subr.bf16.mxu0 0
    %4177 = vmatpush2.bf16.msra.mxu0 0
    %4178 = vmatprep.subr.bf16.mxu0 0
    %4179 = vmatpush2.bf16.msra.mxu0 0
    %4180 = vmatprep.subr.bf16.mxu0 0
    %4181 = vmatpush2.bf16.msra.mxu0 0
    %4182 = vmatprep.subr.bf16.mxu0 0
    %4183 = vmatpush2.bf16.msra.mxu0 0
    %4184 = vmatprep.mubr.bf16.mxu0 0
    %4185 = vmatmul.mubr.bf16.gmra.mxu0 %v4147
    %v4186 = vpop.f32.mrf.mxu0
    %v4187 = vadd.f32 0.0, %v4186
    %v4188 = vpop.f32.mrf.mxu0
    %v4189 = vpop.f32.mrf.mxu0
    %v4190 = vpop.f32.mrf.mxu0
    %4191 = vdwg.mxu0
    %v4193 = vsel %vm1222, %v4004, 0
    %v4196 = vsel %vm1706, %v3512, 0
    %4198 = vmatprep.subr.bf16.mxu0 0
    %4199 = vmatpush1.bf16.msra.mxu0 0
    %4200 = vmatprep.subr.bf16.mxu0 0
    %4201 = vmatpush1.bf16.msra.mxu0 0
    %4202 = vmatprep.subr.bf16.mxu0 0
    %4203 = vmatpush1.bf16.msra.mxu0 0
    %4204 = vmatprep.subr.bf16.mxu0 0
    %4205 = vmatpush1.bf16.msra.mxu0 0
    %4206 = vmatprep.subr.bf16.mxu0 0
    %4207 = vmatpush1.bf16.msra.mxu0 0
    %4208 = vmatprep.subr.bf16.mxu0 0
    %4209 = vmatpush1.bf16.msra.mxu0 0
    %4210 = vmatprep.subr.bf16.mxu0 0
    %4211 = vmatpush1.bf16.msra.mxu0 0
    %4212 = vmatprep.subr.bf16.mxu0 0
    %4213 = vmatpush1.bf16.msra.mxu0 %v4196
    %4214 = vmatprep.subr.bf16.mxu0 0
    %4215 = vmatpush2.bf16.msra.mxu0 0
    %4216 = vmatprep.subr.bf16.mxu0 0
    %4217 = vmatpush2.bf16.msra.mxu0 0
    %4218 = vmatprep.subr.bf16.mxu0 0
    %4219 = vmatpush2.bf16.msra.mxu0 0
    %4220 = vmatprep.subr.bf16.mxu0 0
    %4221 = vmatpush2.bf16.msra.mxu0 0
    %4222 = vmatprep.subr.bf16.mxu0 0
    %4223 = vmatpush2.bf16.msra.mxu0 0
    %4224 = vmatprep.subr.bf16.mxu0 0
    %4225 = vmatpush2.bf16.msra.mxu0 0
    %4226 = vmatprep.subr.bf16.mxu0 0
    %4227 = vmatpush2.bf16.msra.mxu0 0
    %4228 = vmatprep.subr.bf16.mxu0 0
    %4229 = vmatpush2.bf16.msra.mxu0 0
    %4230 = vmatprep.mubr.bf16.mxu0 0
    %4231 = vmatmul.mubr.bf16.gmra.mxu0 %v4193
    %v4232 = vpop.f32.mrf.mxu0
    %v4233 = vadd.f32 0.0, %v4232
    %v4234 = vpop.f32.mrf.mxu0
    %v4235 = vpop.f32.mrf.mxu0
    %v4236 = vpop.f32.mrf.mxu0
    %4237 = vdwg.mxu0
    %v4239 = vsel %vm1222, %v4005, 0
    %v4242 = vsel %vm1706, %v3513, 0
    %4244 = vmatprep.subr.bf16.mxu0 0
    %4245 = vmatpush1.bf16.msra.mxu0 0
    %4246 = vmatprep.subr.bf16.mxu0 0
    %4247 = vmatpush1.bf16.msra.mxu0 0
    %4248 = vmatprep.subr.bf16.mxu0 0
    %4249 = vmatpush1.bf16.msra.mxu0 0
    %4250 = vmatprep.subr.bf16.mxu0 0
    %4251 = vmatpush1.bf16.msra.mxu0 0
    %4252 = vmatprep.subr.bf16.mxu0 0
    %4253 = vmatpush1.bf16.msra.mxu0 0
    %4254 = vmatprep.subr.bf16.mxu0 0
    %4255 = vmatpush1.bf16.msra.mxu0 0
    %4256 = vmatprep.subr.bf16.mxu0 0
    %4257 = vmatpush1.bf16.msra.mxu0 0
    %4258 = vmatprep.subr.bf16.mxu0 0
    %4259 = vmatpush1.bf16.msra.mxu0 %v4242
    %4260 = vmatprep.subr.bf16.mxu0 0
    %4261 = vmatpush2.bf16.msra.mxu0 0
    %4262 = vmatprep.subr.bf16.mxu0 0
    %4263 = vmatpush2.bf16.msra.mxu0 0
    %4264 = vmatprep.subr.bf16.mxu0 0
    %4265 = vmatpush2.bf16.msra.mxu0 0
    %4266 = vmatprep.subr.bf16.mxu0 0
    %4267 = vmatpush2.bf16.msra.mxu0 0
    %4268 = vmatprep.subr.bf16.mxu0 0
    %4269 = vmatpush2.bf16.msra.mxu0 0
    %4270 = vmatprep.subr.bf16.mxu0 0
    %4271 = vmatpush2.bf16.msra.mxu0 0
    %4272 = vmatprep.subr.bf16.mxu0 0
    %4273 = vmatpush2.bf16.msra.mxu0 0
    %4274 = vmatprep.subr.bf16.mxu0 0
    %4275 = vmatpush2.bf16.msra.mxu0 0
    %4276 = vmatprep.mubr.bf16.mxu0 0
    %4277 = vmatmul.mubr.bf16.gmra.mxu0 %v4239
    %v4278 = vpop.f32.mrf.mxu0
    %v4279 = vadd.f32 0.0, %v4278
    %v4280 = vpop.f32.mrf.mxu0
    %v4281 = vpop.f32.mrf.mxu0
    %v4282 = vpop.f32.mrf.mxu0
    %4283 = vdwg.mxu0
    %v4285 = vsel %vm1222, %v4006, 0
    %v4288 = vsel %vm1706, %v3514, 0
    %4290 = vmatprep.subr.bf16.mxu0 0
    %4291 = vmatpush1.bf16.msra.mxu0 0
    %4292 = vmatprep.subr.bf16.mxu0 0
    %4293 = vmatpush1.bf16.msra.mxu0 0
    %4294 = vmatprep.subr.bf16.mxu0 0
    %4295 = vmatpush1.bf16.msra.mxu0 0
    %4296 = vmatprep.subr.bf16.mxu0 0
    %4297 = vmatpush1.bf16.msra.mxu0 0
    %4298 = vmatprep.subr.bf16.mxu0 0
    %4299 = vmatpush1.bf16.msra.mxu0 0
    %4300 = vmatprep.subr.bf16.mxu0 0
    %4301 = vmatpush1.bf16.msra.mxu0 0
    %4302 = vmatprep.subr.bf16.mxu0 0
    %4303 = vmatpush1.bf16.msra.mxu0 0
    %4304 = vmatprep.subr.bf16.mxu0 0
    %4305 = vmatpush1.bf16.msra.mxu0 %v4288
    %4306 = vmatprep.subr.bf16.mxu0 0
    %4307 = vmatpush2.bf16.msra.mxu0 0
    %4308 = vmatprep.subr.bf16.mxu0 0
    %4309 = vmatpush2.bf16.msra.mxu0 0
    %4310 = vmatprep.subr.bf16.mxu0 0
    %4311 = vmatpush2.bf16.msra.mxu0 0
    %4312 = vmatprep.subr.bf16.mxu0 0
    %4313 = vmatpush2.bf16.msra.mxu0 0
    %4314 = vmatprep.subr.bf16.mxu0 0
    %4315 = vmatpush2.bf16.msra.mxu0 0
    %4316 = vmatprep.subr.bf16.mxu0 0
    %4317 = vmatpush2.bf16.msra.mxu0 0
    %4318 = vmatprep.subr.bf16.mxu0 0
    %4319 = vmatpush2.bf16.msra.mxu0 0
    %4320 = vmatprep.subr.bf16.mxu0 0
    %4321 = vmatpush2.bf16.msra.mxu0 0
    %4322 = vmatprep.mubr.bf16.mxu0 0
    %4323 = vmatmul.mubr.bf16.gmra.mxu0 %v4285
    %v4324 = vpop.f32.mrf.mxu0
    %v4325 = vadd.f32 0.0, %v4324
    %v4326 = vpop.f32.mrf.mxu0
    %v4327 = vpop.f32.mrf.mxu0
    %v4328 = vpop.f32.mrf.mxu0
    %4329 = vdwg.mxu0
    %v4331 = vsel %vm1222, %v4007, 0
    %v4334 = vsel %vm1706, %v3515, 0
    %4336 = vmatprep.subr.bf16.mxu0 0
    %4337 = vmatpush1.bf16.msra.mxu0 0
    %4338 = vmatprep.subr.bf16.mxu0 0
    %4339 = vmatpush1.bf16.msra.mxu0 0
    %4340 = vmatprep.subr.bf16.mxu0 0
    %4341 = vmatpush1.bf16.msra.mxu0 0
    %4342 = vmatprep.subr.bf16.mxu0 0
    %4343 = vmatpush1.bf16.msra.mxu0 0
    %4344 = vmatprep.subr.bf16.mxu0 0
    %4345 = vmatpush1.bf16.msra.mxu0 0
    %4346 = vmatprep.subr.bf16.mxu0 0
    %4347 = vmatpush1.bf16.msra.mxu0 0
    %4348 = vmatprep.subr.bf16.mxu0 0
    %4349 = vmatpush1.bf16.msra.mxu0 0
    %4350 = vmatprep.subr.bf16.mxu0 0
    %4351 = vmatpush1.bf16.msra.mxu0 %v4334
    %4352 = vmatprep.subr.bf16.mxu0 0
    %4353 = vmatpush2.bf16.msra.mxu0 0
    %4354 = vmatprep.subr.bf16.mxu0 0
    %4355 = vmatpush2.bf16.msra.mxu0 0
    %4356 = vmatprep.subr.bf16.mxu0 0
    %4357 = vmatpush2.bf16.msra.mxu0 0
    %4358 = vmatprep.subr.bf16.mxu0 0
    %4359 = vmatpush2.bf16.msra.mxu0 0
    %4360 = vmatprep.subr.bf16.mxu0 0
    %4361 = vmatpush2.bf16.msra.mxu0 0
    %4362 = vmatprep.subr.bf16.mxu0 0
    %4363 = vmatpush2.bf16.msra.mxu0 0
    %4364 = vmatprep.subr.bf16.mxu0 0
    %4365 = vmatpush2.bf16.msra.mxu0 0
    %4366 = vmatprep.subr.bf16.mxu0 0
    %4367 = vmatpush2.bf16.msra.mxu0 0
    %4368 = vmatprep.mubr.bf16.mxu0 0
    %4369 = vmatmul.mubr.bf16.gmra.mxu0 %v4331
    %v4370 = vpop.f32.mrf.mxu0
    %v4371 = vadd.f32 0.0, %v4370
    %v4372 = vpop.f32.mrf.mxu0
    %v4373 = vpop.f32.mrf.mxu0
    %v4374 = vpop.f32.mrf.mxu0
    %4375 = vdwg.mxu0
    %v4376 = vcombine.low %v4049, %v4141
    %v4377 = vcombine.high %v4049, %v4141
    %v4379 = vunpack.c.l.s4 1983009808
    %v4380 = vunpack.c.0.s8 %v4379
    %v4381 = vlaneseq
    %v4382 = vshrl.u32 %v4381, 7
    %v4383 = vsub.s32 %v4380, %v4382
    %v4384 = vrot.slane %v4376, %v4383
    %v4386 = vunpack.c.l.s4 1983009808
    %v4387 = vunpack.c.0.s8 %v4386
    %v4388 = vlaneseq
    %v4389 = vshrl.u32 %v4388, 7
    %v4390 = vsub.s32 %v4387, %v4389
    %v4391 = vrot.slane %v4377, %v4390
    %v4392 = vcombine.low %v4095, %v4187
    %v4393 = vcombine.high %v4095, %v4187
    %v4395 = vunpack.c.l.s4 1983009808
    %v4396 = vunpack.c.0.s8 %v4395
    %v4397 = vlaneseq
    %v4398 = vshrl.u32 %v4397, 7
    %v4399 = vsub.s32 %v4396, %v4398
    %v4400 = vrot.slane %v4392, %v4399
    %v4402 = vunpack.c.l.s4 1983009808
    %v4403 = vunpack.c.0.s8 %v4402
    %v4404 = vlaneseq
    %v4405 = vshrl.u32 %v4404, 7
    %v4406 = vsub.s32 %v4403, %v4405
    %v4407 = vrot.slane %v4393, %v4406
    %v4408 = vcombine.low %v4384, %v4400
    %v4409 = vcombine.high %v4384, %v4400
    %v4411 = vunpack.c.l.s4 1934713408
    %v4412 = vunpack.c.0.s8 %v4411
    %v4413 = vlaneseq
    %v4414 = vshrl.u32 %v4413, 7
    %v4415 = vsub.s32 %v4412, %v4414
    %v4416 = vrot.slane %v4408, %v4415
    %v4418 = vunpack.c.l.s4 1934713408
    %v4419 = vunpack.c.0.s8 %v4418
    %v4420 = vlaneseq
    %v4421 = vshrl.u32 %v4420, 7
    %v4422 = vsub.s32 %v4419, %v4421
    %v4423 = vrot.slane %v4409, %v4422
    %v4424 = vcombine.low %v4391, %v4407
    %v4425 = vcombine.high %v4391, %v4407
    %v4427 = vunpack.c.l.s4 1934713408
    %v4428 = vunpack.c.0.s8 %v4427
    %v4429 = vlaneseq
    %v4430 = vshrl.u32 %v4429, 7
    %v4431 = vsub.s32 %v4428, %v4430
    %v4432 = vrot.slane %v4424, %v4431
    %v4434 = vunpack.c.l.s4 1934713408
    %v4435 = vunpack.c.0.s8 %v4434
    %v4436 = vlaneseq
    %v4437 = vshrl.u32 %v4436, 7
    %v4438 = vsub.s32 %v4435, %v4437
    %v4439 = vrot.slane %v4425, %v4438
    %v4440 = vcombine.high %v4416, 0.0
    %v4441 = vcombine.high %v4423, 0.0
    %v4442 = vcombine.high %v4432, 0.0
    %v4443 = vcombine.high %v4439, 0.0
    %v4444 = vcombine.low %v4233, %v4325
    %v4445 = vcombine.high %v4233, %v4325
    %v4447 = vunpack.c.l.s4 1983009808
    %v4448 = vunpack.c.0.s8 %v4447
    %v4449 = vlaneseq
    %v4450 = vshrl.u32 %v4449, 7
    %v4451 = vsub.s32 %v4448, %v4450
    %v4452 = vrot.slane %v4444, %v4451
    %v4454 = vunpack.c.l.s4 1983009808
    %v4455 = vunpack.c.0.s8 %v4454
    %v4456 = vlaneseq
    %v4457 = vshrl.u32 %v4456, 7
    %v4458 = vsub.s32 %v4455, %v4457
    %v4459 = vrot.slane %v4445, %v4458
    %v4460 = vcombine.low %v4279, %v4371
    %v4461 = vcombine.high %v4279, %v4371
    %v4463 = vunpack.c.l.s4 1983009808
    %v4464 = vunpack.c.0.s8 %v4463
    %v4465 = vlaneseq
    %v4466 = vshrl.u32 %v4465, 7
    %v4467 = vsub.s32 %v4464, %v4466
    %v4468 = vrot.slane %v4460, %v4467
    %v4470 = vunpack.c.l.s4 1983009808
    %v4471 = vunpack.c.0.s8 %v4470
    %v4472 = vlaneseq
    %v4473 = vshrl.u32 %v4472, 7
    %v4474 = vsub.s32 %v4471, %v4473
    %v4475 = vrot.slane %v4461, %v4474
    %v4476 = vcombine.low %v4452, %v4468
    %v4477 = vcombine.high %v4452, %v4468
    %v4479 = vunpack.c.l.s4 1934713408
    %v4480 = vunpack.c.0.s8 %v4479
    %v4481 = vlaneseq
    %v4482 = vshrl.u32 %v4481, 7
    %v4483 = vsub.s32 %v4480, %v4482
    %v4484 = vrot.slane %v4476, %v4483
    %v4486 = vunpack.c.l.s4 1934713408
    %v4487 = vunpack.c.0.s8 %v4486
    %v4488 = vlaneseq
    %v4489 = vshrl.u32 %v4488, 7
    %v4490 = vsub.s32 %v4487, %v4489
    %v4491 = vrot.slane %v4477, %v4490
    %v4492 = vcombine.low %v4459, %v4475
    %v4493 = vcombine.high %v4459, %v4475
    %v4495 = vunpack.c.l.s4 1934713408
    %v4496 = vunpack.c.0.s8 %v4495
    %v4497 = vlaneseq
    %v4498 = vshrl.u32 %v4497, 7
    %v4499 = vsub.s32 %v4496, %v4498
    %v4500 = vrot.slane %v4492, %v4499
    %v4502 = vunpack.c.l.s4 1934713408
    %v4503 = vunpack.c.0.s8 %v4502
    %v4504 = vlaneseq
    %v4505 = vshrl.u32 %v4504, 7
    %v4506 = vsub.s32 %v4503, %v4505
    %v4507 = vrot.slane %v4493, %v4506
    %v4508 = vcombine.high %v4484, 0.0
    %v4509 = vcombine.high %v4491, 0.0
    %v4510 = vcombine.high %v4500, 0.0
    %v4511 = vcombine.high %v4507, 0.0
    %v4512 = vcombine.low %v4416, %v4423
    %v4514 = vunpack.c.l.s4 1983009808
    %v4515 = vunpack.c.0.s8 %v4514
    %v4516 = vlaneseq
    %v4517 = vshrl.u32 %v4516, 7
    %v4518 = vsub.s32 %v4515, %v4517
    %v4519 = vrot.slane %v4512, %v4518
    %v4520 = vcombine.low %v4440, %v4441
    %v4522 = vunpack.c.l.s4 1983009808
    %v4523 = vunpack.c.0.s8 %v4522
    %v4524 = vlaneseq
    %v4525 = vshrl.u32 %v4524, 7
    %v4526 = vsub.s32 %v4523, %v4525
    %v4527 = vrot.slane %v4520, %v4526
    %v4528 = vcombine.low %v4432, %v4439
    %v4530 = vunpack.c.l.s4 1983009808
    %v4531 = vunpack.c.0.s8 %v4530
    %v4532 = vlaneseq
    %v4533 = vshrl.u32 %v4532, 7
    %v4534 = vsub.s32 %v4531, %v4533
    %v4535 = vrot.slane %v4528, %v4534
    %v4536 = vcombine.low %v4442, %v4443
    %v4538 = vunpack.c.l.s4 1983009808
    %v4539 = vunpack.c.0.s8 %v4538
    %v4540 = vlaneseq
    %v4541 = vshrl.u32 %v4540, 7
    %v4542 = vsub.s32 %v4539, %v4541
    %v4543 = vrot.slane %v4536, %v4542
    %v4544 = vcombine.low %v4519, %v4527
    %v4545 = vcombine.high %v4519, %v4527
    %v4547 = vunpack.c.l.s4 1934713408
    %v4548 = vunpack.c.0.s8 %v4547
    %v4549 = vlaneseq
    %v4550 = vshrl.u32 %v4549, 7
    %v4551 = vsub.s32 %v4548, %v4550
    %v4552 = vrot.slane %v4544, %v4551
    %v4554 = vunpack.c.l.s4 1934713408
    %v4555 = vunpack.c.0.s8 %v4554
    %v4556 = vlaneseq
    %v4557 = vshrl.u32 %v4556, 7
    %v4558 = vsub.s32 %v4555, %v4557
    %v4559 = vrot.slane %v4545, %v4558
    %v4560 = vcombine.low %v4535, %v4543
    %v4561 = vcombine.high %v4535, %v4543
    %v4563 = vunpack.c.l.s4 1934713408
    %v4564 = vunpack.c.0.s8 %v4563
    %v4565 = vlaneseq
    %v4566 = vshrl.u32 %v4565, 7
    %v4567 = vsub.s32 %v4564, %v4566
    %v4568 = vrot.slane %v4560, %v4567
    %v4570 = vunpack.c.l.s4 1934713408
    %v4571 = vunpack.c.0.s8 %v4570
    %v4572 = vlaneseq
    %v4573 = vshrl.u32 %v4572, 7
    %v4574 = vsub.s32 %v4571, %v4573
    %v4575 = vrot.slane %v4561, %v4574
    %v4576 = vcombine.low %v4552, %v4568
    %v4577 = vcombine.high %v4552, %v4568
    %v4578 = vcombine.low %v4559, %v4575
    %v4579 = vcombine.high %v4559, %v4575
    %v4580 = vcombine.low %v4484, %v4491
    %v4582 = vunpack.c.l.s4 1983009808
    %v4583 = vunpack.c.0.s8 %v4582
    %v4584 = vlaneseq
    %v4585 = vshrl.u32 %v4584, 7
    %v4586 = vsub.s32 %v4583, %v4585
    %v4587 = vrot.slane %v4580, %v4586
    %v4588 = vcombine.low %v4508, %v4509
    %v4590 = vunpack.c.l.s4 1983009808
    %v4591 = vunpack.c.0.s8 %v4590
    %v4592 = vlaneseq
    %v4593 = vshrl.u32 %v4592, 7
    %v4594 = vsub.s32 %v4591, %v4593
    %v4595 = vrot.slane %v4588, %v4594
    %v4596 = vcombine.low %v4500, %v4507
    %v4598 = vunpack.c.l.s4 1983009808
    %v4599 = vunpack.c.0.s8 %v4598
    %v4600 = vlaneseq
    %v4601 = vshrl.u32 %v4600, 7
    %v4602 = vsub.s32 %v4599, %v4601
    %v4603 = vrot.slane %v4596, %v4602
    %v4604 = vcombine.low %v4510, %v4511
    %v4606 = vunpack.c.l.s4 1983009808
    %v4607 = vunpack.c.0.s8 %v4606
    %v4608 = vlaneseq
    %v4609 = vshrl.u32 %v4608, 7
    %v4610 = vsub.s32 %v4607, %v4609
    %v4611 = vrot.slane %v4604, %v4610
    %v4612 = vcombine.low %v4587, %v4595
    %v4613 = vcombine.high %v4587, %v4595
    %v4615 = vunpack.c.l.s4 1934713408
    %v4616 = vunpack.c.0.s8 %v4615
    %v4617 = vlaneseq
    %v4618 = vshrl.u32 %v4617, 7
    %v4619 = vsub.s32 %v4616, %v4618
    %v4620 = vrot.slane %v4612, %v4619
    %v4622 = vunpack.c.l.s4 1934713408
    %v4623 = vunpack.c.0.s8 %v4622
    %v4624 = vlaneseq
    %v4625 = vshrl.u32 %v4624, 7
    %v4626 = vsub.s32 %v4623, %v4625
    %v4627 = vrot.slane %v4613, %v4626
    %v4628 = vcombine.low %v4603, %v4611
    %v4629 = vcombine.high %v4603, %v4611
    %v4631 = vunpack.c.l.s4 1934713408
    %v4632 = vunpack.c.0.s8 %v4631
    %v4633 = vlaneseq
    %v4634 = vshrl.u32 %v4633, 7
    %v4635 = vsub.s32 %v4632, %v4634
    %v4636 = vrot.slane %v4628, %v4635
    %v4638 = vunpack.c.l.s4 1934713408
    %v4639 = vunpack.c.0.s8 %v4638
    %v4640 = vlaneseq
    %v4641 = vshrl.u32 %v4640, 7
    %v4642 = vsub.s32 %v4639, %v4641
    %v4643 = vrot.slane %v4629, %v4642
    %v4644 = vcombine.low %v4620, %v4636
    %v4645 = vcombine.high %v4620, %v4636
    %v4646 = vcombine.low %v4627, %v4643
    %v4647 = vcombine.high %v4627, %v4643
    %4650 = vrot.lane.b32.xlu0 %v4577, 8
    %v4651 = vpop.permute.xlu0 %4650
    %4652 = vrot.lane.b32.xlu0 %v4645, 8
    %v4653 = vpop.permute.xlu0 %4652
    %4658 = vrot.lane.b32.xlu0 %v4578, 16
    %v4659 = vpop.permute.xlu0 %4658
    %4660 = vrot.lane.b32.xlu0 %v4646, 16
    %v4661 = vpop.permute.xlu0 %4660
    %4666 = vrot.lane.b32.xlu0 %v4579, 24
    %v4667 = vpop.permute.xlu0 %4666
    %4668 = vrot.lane.b32.xlu0 %v4647, 24
    %v4669 = vpop.permute.xlu0 %4668
    %v4672 = vsel %vm1222, %v4576, %v4651
    %v4673 = vsel %vm1222, %v4644, %v4653
    %v4674 = vsel %vm2370, %v4672, %v4659
    %v4675 = vsel %vm2370, %v4673, %v4661
    %v4676 = vsel %vm2373, %v4674, %v4667
    %v4677 = vsel %vm2373, %v4675, %v4669
    %v4678 = vpack.c.bf16 %v4677, %v4676
    %v4680 = vlaneseq
    %v4681 = vshrl.u32 %v4680, 7
    %v4682 = vsub.s32 0, %v4681
    %v4683 = vrot.slane %v197, %v4682
    %v4689 = vunpack.c.l.b16 %v193
    %v4690 = vunpack.c.l.b16 %v194
    %v4691 = vunpack.c.l.b16 %v195
    %v4692 = vunpack.c.l.b16 %v196
    %v4693 = vpack.c.b16 %v4690, %v4689
    %v4694 = vpack.c.b16 %v4692, %v4691
    %v4698 = vsel %vm253, %v4678, 0
    %4700 = vmatprep.subr.bf16.mxu0 0
    %4701 = vmatpush1.bf16.msra.mxu0 0
    %4702 = vmatprep.subr.bf16.mxu0 0
    %4703 = vmatpush1.bf16.msra.mxu0 0
    %4704 = vmatprep.subr.bf16.mxu0 0
    %4705 = vmatpush1.bf16.msra.mxu0 0
    %4706 = vmatprep.subr.bf16.mxu0 0
    %4707 = vmatpush1.bf16.msra.mxu0 0
    %4708 = vmatprep.subr.bf16.mxu0 0
    %4709 = vmatpush1.bf16.msra.mxu0 0
    %4710 = vmatprep.subr.bf16.mxu0 0
    %4711 = vmatpush1.bf16.msra.mxu0 0
    %4712 = vmatprep.subr.bf16.mxu0 0
    %4713 = vmatpush1.bf16.msra.mxu0 %v4694
    %4714 = vmatprep.subr.bf16.mxu0 0
    %4715 = vmatpush1.bf16.msra.mxu0 %v4693
    %4716 = vmatprep.subr.bf16.mxu0 0
    %4717 = vmatpush2.bf16.msra.mxu0 0
    %4718 = vmatprep.subr.bf16.mxu0 0
    %4719 = vmatpush2.bf16.msra.mxu0 0
    %4720 = vmatprep.subr.bf16.mxu0 0
    %4721 = vmatpush2.bf16.msra.mxu0 0
    %4722 = vmatprep.subr.bf16.mxu0 0
    %4723 = vmatpush2.bf16.msra.mxu0 0
    %4724 = vmatprep.subr.bf16.mxu0 0
    %4725 = vmatpush2.bf16.msra.mxu0 0
    %4726 = vmatprep.subr.bf16.mxu0 0
    %4727 = vmatpush2.bf16.msra.mxu0 0
    %4728 = vmatprep.subr.bf16.mxu0 0
    %4729 = vmatpush2.bf16.msra.mxu0 0
    %4730 = vmatprep.subr.bf16.mxu0 0
    %4731 = vmatpush2.bf16.msra.mxu0 0
    %4732 = vmatprep.mubr.bf16.mxu0 0
    %4733 = vmatmul.mubr.bf16.gmra.mxu0 %v4698
    %v4734 = vpop.f32.mrf.mxu0
    %v4735 = vadd.f32 %v4683, %v4734
    %v4736 = vpop.f32.mrf.mxu0
    %v4737 = vpop.f32.mrf.mxu0
    %v4738 = vadd.f32 %v4683, %v4737
    %v4739 = vpop.f32.mrf.mxu0
    %4740 = vdwg.mxu0
    %v4741 = vadd.f32 %v4735, %v2482
    %v4742 = vadd.f32 %v4738, %v2483
    %v4743 = vsel %vm253, %v4741, 0.0
    %4744 = vadd.xlane.f32.xlu0 %v4743
    %v4745 = vpop.xlane.xlu0 %4744
    %v4746 = vsel %vm253, %v4742, 0.0
    %4747 = vadd.xlane.f32.xlu0 %v4746
    %v4748 = vpop.xlane.xlu0 %4747
    %v4749 = vmul.f32 %v4745, %v2447
    %v4750 = vmul.f32 %v4748, %v2447
    %v4751 = vsub.f32 %v4741, %v4749
    %v4752 = vsub.f32 %v4742, %v4750
    %v4753 = vmul.f32 %v4751, %v4751
    %v4754 = vmul.f32 %v4752, %v4752
    %v4755 = vsel %vm253, %v4753, 0.0
    %4756 = vadd.xlane.f32.xlu0 %v4755
    %v4757 = vpop.xlane.xlu0 %4756
    %v4758 = vsel %vm253, %v4754, 0.0
    %4759 = vadd.xlane.f32.xlu0 %v4758
    %v4760 = vpop.xlane.xlu0 %4759
    %v4761 = vmul.f32 %v4757, %v2447
    %v4762 = vmul.f32 %v4760, %v2447
    %v4763 = vadd.f32 %v4761, 1e-05
    %v4764 = vadd.f32 %v4762, 1e-05
    %v4765 = vrsqrt.pop %v4763
    %v4766 = vrsqrt.pop %v4764
    %v4767 = vmul.f32 %v4751, %v4765
    %v4768 = vmul.f32 %v4752, %v4766
    %v4770 = vlaneseq
    %v4771 = vshrl.u32 %v4770, 7
    %v4772 = vsub.s32 0, %v4771
    %v4773 = vrot.slane %v214, %v4772
    %v4775 = vmul.f32 %v4767, %v4773
    %v4776 = vmul.f32 %v4768, %v4773
    %v4778 = vlaneseq
    %v4779 = vshrl.u32 %v4778, 7
    %v4780 = vsub.s32 0, %v4779
    %v4781 = vrot.slane %v215, %v4780
    %v4783 = vadd.f32 %v4775, %v4781
    %v4784 = vadd.f32 %v4776, %v4781
    %v4785 = vpack.c.bf16 %v4784, %v4783
    %v4787 = vlaneseq
    %v4788 = vshrl.u32 %v4787, 7
    %v4789 = vsub.s32 0, %v4788
    %v4790 = vrot.slane %v202, %v4789
    %v4796 = vunpack.c.l.b16 %v198
    %v4797 = vunpack.c.l.b16 %v199
    %v4798 = vunpack.c.l.b16 %v200
    %v4799 = vunpack.c.l.b16 %v201
    %v4800 = vpack.c.b16 %v4797, %v4796
    %v4801 = vpack.c.b16 %v4799, %v4798
    %v4805 = vsel %vm253, %v4785, 0
    %4807 = vmatprep.subr.bf16.mxu0 0
    %4808 = vmatpush1.bf16.msra.mxu0 0
    %4809 = vmatprep.subr.bf16.mxu0 0
    %4810 = vmatpush1.bf16.msra.mxu0 0
    %4811 = vmatprep.subr.bf16.mxu0 0
    %4812 = vmatpush1.bf16.msra.mxu0 0
    %4813 = vmatprep.subr.bf16.mxu0 0
    %4814 = vmatpush1.bf16.msra.mxu0 0
    %4815 = vmatprep.subr.bf16.mxu0 0
    %4816 = vmatpush1.bf16.msra.mxu0 0
    %4817 = vmatprep.subr.bf16.mxu0 0
    %4818 = vmatpush1.bf16.msra.mxu0 0
    %4819 = vmatprep.subr.bf16.mxu0 0
    %4820 = vmatpush1.bf16.msra.mxu0 %v4801
    %4821 = vmatprep.subr.bf16.mxu0 0
    %4822 = vmatpush1.bf16.msra.mxu0 %v4800
    %4823 = vmatprep.subr.bf16.mxu0 0
    %4824 = vmatpush2.bf16.msra.mxu0 0
    %4825 = vmatprep.subr.bf16.mxu0 0
    %4826 = vmatpush2.bf16.msra.mxu0 0
    %4827 = vmatprep.subr.bf16.mxu0 0
    %4828 = vmatpush2.bf16.msra.mxu0 0
    %4829 = vmatprep.subr.bf16.mxu0 0
    %4830 = vmatpush2.bf16.msra.mxu0 0
    %4831 = vmatprep.subr.bf16.mxu0 0
    %4832 = vmatpush2.bf16.msra.mxu0 0
    %4833 = vmatprep.subr.bf16.mxu0 0
    %4834 = vmatpush2.bf16.msra.mxu0 0
    %4835 = vmatprep.subr.bf16.mxu0 0
    %4836 = vmatpush2.bf16.msra.mxu0 0
    %4837 = vmatprep.subr.bf16.mxu0 0
    %4838 = vmatpush2.bf16.msra.mxu0 0
    %4839 = vmatprep.mubr.bf16.mxu0 0
    %4840 = vmatmul.mubr.bf16.gmra.mxu0 %v4805
    %v4841 = vpop.f32.mrf.mxu0
    %v4842 = vadd.f32 %v4790, %v4841
    %v4843 = vpop.f32.mrf.mxu0
    %v4844 = vpop.f32.mrf.mxu0
    %v4845 = vadd.f32 %v4790, %v4844
    %v4846 = vpop.f32.mrf.mxu0
    %4847 = vdwg.mxu0
    %v4848 = vmul.f32 %v4842, 0.5
    %v4849 = vmul.f32 %v4845, 0.5
    %v4850 = vmul.f32 %v4842, 0.70710677
    %v4851 = vmul.f32 %v4845, 0.70710677
    %v4852 = verf.f32.pop %v4850
    %v4853 = verf.f32.pop %v4851
    %v4854 = vadd.f32 %v4852, 1.0
    %v4855 = vadd.f32 %v4853, 1.0
    %v4856 = vmul.f32 %v4848, %v4854
    %v4857 = vmul.f32 %v4849, %v4855
    %v4858 = vpack.c.bf16 %v4857, %v4856
    %v4860 = vlaneseq
    %v4861 = vshrl.u32 %v4860, 7
    %v4862 = vsub.s32 0, %v4861
    %v4863 = vrot.slane %v211, %v4862
    %v4873 = vunpack.c.l.b16 %v203
    %v4874 = vunpack.c.l.b16 %v204
    %v4875 = vunpack.c.l.b16 %v205
    %v4876 = vunpack.c.l.b16 %v206
    %v4877 = vunpack.c.l.b16 %v207
    %v4878 = vunpack.c.l.b16 %v208
    %v4879 = vunpack.c.l.b16 %v209
    %v4880 = vunpack.c.l.b16 %v210
    %v4881 = vpack.c.b16 %v4874, %v4873
    %v4882 = vpack.c.b16 %v4876, %v4875
    %v4883 = vpack.c.b16 %v4878, %v4877
    %v4884 = vpack.c.b16 %v4880, %v4879
    %vm4889 = vcmask 523264
    %v4891 = vsel %vm4889, %v4858, 0
    %4893 = vmatprep.subr.bf16.mxu0 0
    %4894 = vmatpush1.bf16.msra.mxu0 0
    %4895 = vmatprep.subr.bf16.mxu0 0
    %4896 = vmatpush1.bf16.msra.mxu0 0
    %4897 = vmatprep.subr.bf16.mxu0 0
    %4898 = vmatpush1.bf16.msra.mxu0 0
    %4899 = vmatprep.subr.bf16.mxu0 0
    %4900 = vmatpush1.bf16.msra.mxu0 0
    %4901 = vmatprep.subr.bf16.mxu0 0
    %4902 = vmatpush1.bf16.msra.mxu0 %v4884
    %4903 = vmatprep.subr.bf16.mxu0 0
    %4904 = vmatpush1.bf16.msra.mxu0 %v4883
    %4905 = vmatprep.subr.bf16.mxu0 0
    %4906 = vmatpush1.bf16.msra.mxu0 %v4882
    %4907 = vmatprep.subr.bf16.mxu0 0
    %4908 = vmatpush1.bf16.msra.mxu0 %v4881
    %4909 = vmatprep.subr.bf16.mxu0 0
    %4910 = vmatpush2.bf16.msra.mxu0 0
    %4911 = vmatprep.subr.bf16.mxu0 0
    %4912 = vmatpush2.bf16.msra.mxu0 0
    %4913 = vmatprep.subr.bf16.mxu0 0
    %4914 = vmatpush2.bf16.msra.mxu0 0
    %4915 = vmatprep.subr.bf16.mxu0 0
    %4916 = vmatpush2.bf16.msra.mxu0 0
    %4917 = vmatprep.subr.bf16.mxu0 0
    %4918 = vmatpush2.bf16.msra.mxu0 0
    %4919 = vmatprep.subr.bf16.mxu0 0
    %4920 = vmatpush2.bf16.msra.mxu0 0
    %4921 = vmatprep.subr.bf16.mxu0 0
    %4922 = vmatpush2.bf16.msra.mxu0 0
    %4923 = vmatprep.subr.bf16.mxu0 0
    %4924 = vmatpush2.bf16.msra.mxu0 0
    %4925 = vmatprep.mubr.bf16.mxu0 0
    %4926 = vmatmul.mubr.bf16.gmra.mxu0 %v4891
    %v4927 = vpop.f32.mrf.mxu0
    %v4928 = vadd.f32 %v4863, %v4927
    %v4929 = vpop.f32.mrf.mxu0
    %v4930 = vpop.f32.mrf.mxu0
    %v4931 = vadd.f32 %v4863, %v4930
    %v4932 = vpop.f32.mrf.mxu0
    %4933 = vdwg.mxu0
    %v4934 = vadd.f32 %v4928, %v4783
    %v4935 = vadd.f32 %v4931, %v4784
    %v4936 = vsel %vm253, %v4934, 0.0
    %4937 = vadd.xlane.f32.xlu0 %v4936
    %v4938 = vpop.xlane.xlu0 %4937
    %v4939 = vsel %vm253, %v4935, 0.0
    %4940 = vadd.xlane.f32.xlu0 %v4939
    %v4941 = vpop.xlane.xlu0 %4940
    %v4942 = vmul.f32 %v4938, %v2447
    %v4943 = vmul.f32 %v4941, %v2447
    %v4944 = vsub.f32 %v4934, %v4942
    %v4945 = vsub.f32 %v4935, %v4943
    %v4946 = vmul.f32 %v4944, %v4944
    %v4947 = vmul.f32 %v4945, %v4945
    %v4948 = vsel %vm253, %v4946, 0.0
    %4949 = vadd.xlane.f32.xlu0 %v4948
    %v4950 = vpop.xlane.xlu0 %4949
    %v4951 = vsel %vm253, %v4947, 0.0
    %4952 = vadd.xlane.f32.xlu0 %v4951
    %v4953 = vpop.xlane.xlu0 %4952
    %v4954 = vmul.f32 %v4950, %v2447
    %v4955 = vmul.f32 %v4953, %v2447
    %v4956 = vadd.f32 %v4954, 1e-05
    %v4957 = vadd.f32 %v4955, 1e-05
    %v4958 = vrsqrt.pop %v4956
    %v4959 = vrsqrt.pop %v4957
    %v4960 = vmul.f32 %v4944, %v4958
    %v4961 = vmul.f32 %v4945, %v4959
    %v4963 = vlaneseq
    %v4964 = vshrl.u32 %v4963, 7
    %v4965 = vsub.s32 0, %v4964
    %v4966 = vrot.slane %v216, %v4965
    %v4968 = vmul.f32 %v4960, %v4966
    %v4969 = vmul.f32 %v4961, %v4966
    %v4971 = vlaneseq
    %v4972 = vshrl.u32 %v4971, 7
    %v4973 = vsub.s32 0, %v4972
    %v4974 = vrot.slane %v217, %v4973
    %v4976 = vadd.f32 %v4968, %v4974
    %v4977 = vadd.f32 %v4969, %v4974
    %4978 = vst.msk [vmem:[#allocation13] sm:$0xff] %vm253, %v4976
    %4979 = vst.msk [vmem:[#allocation13 + $0x8] sm:$0xff] %vm253, %v4977
    // Predicated region
    $region122: #{tpu_custom_call.1} parent=1 // pred_check
      _
    $region123: #{tpu_custom_call.1} parent=1 // pred_check_branch
      %4981 = sbr.rel (0) target = $region125
    $region124: #{tpu_custom_call.1} parent=1 // pred_region
      %s4983 = ssub.s32 256, 256
      %4984 = vsyncadd [#allocation4], %s4983
      %s4985 = sshll.u32 [#allocation13], 4
      %s4986 = int_to_ptr.vmem [resolvable:$true] %s4985
      %4991 = dma.vmem_to_hbm [thread:$0]  %s4986, 256, %s24, [#allocation4], 128, 128, 8
    $region125: #{tpu_custom_call.1} parent=1 // pred_fallthru
      _
    // Predicated region
    $region126: #{tpu_custom_call.1} parent=1 // pred_check
      _
    $region127: #{tpu_custom_call.1} parent=1 // pred_check_branch
      %4993 = sbr.rel (0) target = $region129
    $region128: #{tpu_custom_call.1} parent=1 // pred_region
      %s4995 = ssub.s32 1024, 1024
      %4996 = vsyncadd [#allocation15], %s4995
      %s4997 = sshll.u32 [#allocation14], 4
      %s4998 = int_to_ptr.vmem [resolvable:$true] %s4997
      %5003 = dma.vmem_to_hbm [thread:$0]  %s4998, 1024, %s25, [#allocation15], 128, 128, 8
    $region129: #{tpu_custom_call.1} parent=1 // pred_fallthru
      _
    // Predicated region
    $region130: #{tpu_custom_call.1} parent=1 // pred_check
      _
    $region131: #{tpu_custom_call.1} parent=1 // pred_check_branch
      %5005 = sbr.rel (0) target = $region133
    $region132: #{tpu_custom_call.1} parent=1 // pred_region
      %s5007 = ssub.s32 1024, 1024
      %5008 = vsyncadd [#allocation15], %s5007
      %s5009 = sshll.u32 [#allocation16], 4
      %s5010 = int_to_ptr.vmem [resolvable:$true] %s5009
      %5015 = dma.vmem_to_hbm [thread:$0]  %s5010, 1024, %s26, [#allocation15], 128, 128, 8
    $region133: #{tpu_custom_call.1} parent=1 // pred_fallthru
      _
    // Predicated region
    $region134: #{tpu_custom_call.1} parent=1 // pred_check
      _
    $region135: #{tpu_custom_call.1} parent=1 // pred_check_branch
      %5017 = sbr.rel (0) target = $region137
    $region136: #{tpu_custom_call.1} parent=1 // pred_region
      %5018 = dma.done [#allocation4], 256
    $region137: #{tpu_custom_call.1} parent=1 // pred_fallthru
      _
    // Predicated region
    $region138: #{tpu_custom_call.1} parent=1 // pred_check
      _
    $region139: #{tpu_custom_call.1} parent=1 // pred_check_branch
      %5020 = sbr.rel (0) target = $region141
    $region140: #{tpu_custom_call.1} parent=1 // pred_region
      %5021 = dma.done [#allocation15], 1024
    $region141: #{tpu_custom_call.1} parent=1 // pred_fallthru
      _
    // Predicated region
    $region142: #{tpu_custom_call.1} parent=1 // pred_check
      _
    $region143: #{tpu_custom_call.1} parent=1 // pred_check_branch
      %5023 = sbr.rel (0) target = $region145
    $region144: #{tpu_custom_call.1} parent=1 // pred_region
      %5024 = dma.done [#allocation15], 1024
    $region145: #{tpu_custom_call.1} parent=1 // pred_fallthru
      _
    %5025 = vsyncpa [#allocation3], 1
    %5026 = vsyncpa [#allocation6], 1
    %5027 = vsyncpa [#allocation9], 1
    %5028 = vsyncpa [#allocation12], 1
    %5029 = vsyncpa [#allocation4], 1
    %5030 = vsyncpa [#allocation15], 1

</llo_original>
